<compile_context>
chip_gen: v7x
topology: tpu7x:2x2x1
jax: 0.10.0
libtpu: 0.0.40
codegen_flags: <defaults>
</compile_context>

<pallas_src>
import numpy as np
import jax
import jax.numpy as jnp
from jax import lax
from jax.experimental import pallas as pl
from jax.experimental.pallas import tpu as pltpu

INPUT = 4
HIDDEN = 64        # logical hidden size (PyTorch)
FC_HIDDEN = 32
HP = 128           # lane-padded hidden size
GP = 4 * HP        # lane-padded gate width (512)


def _gates_to_hc(gates, c):
    """gates:(B,GP) c:(B,HP) -> new (h, c). PyTorch gate order i,f,g,o."""
    i = jax.nn.sigmoid(gates[:, 0 * HP:1 * HP])
    f = jax.nn.sigmoid(gates[:, 1 * HP:2 * HP])
    g = jnp.tanh(gates[:, 2 * HP:3 * HP])
    o = jax.nn.sigmoid(gates[:, 3 * HP:4 * HP])
    c_new = f * c + i * g
    h_new = o * jnp.tanh(c_new)
    return h_new, c_new


def risk_kernel(x_ref,                 # (T, B_pad, 4)
                wih1_ref,              # (4,  GP)
                b1_ref,                # (1,  GP)
                whh1_ref,              # (HP, GP)
                w2_ref,                # (2*HP, GP)  fused [W_ih2; W_hh2]
                b2_ref,                # (1,  GP)
                wfc1_ref,              # (HP, HP)   (64->128 rows, 32->128 cols, zero pad)
                bfc1_ref,              # (1,  HP)
                wfc2_ref,              # (1,  HP)
                bfc2_ref,              # (1,  1)
                out_ref,               # (B_pad, 128)   lane-dense output slab
                xproj_ref):            # VMEM scratch (T, B_pad, GP)
    T, B, _ = x_ref.shape

    # ---- Hoisted layer-1 input projection + bias: one big MXU matmul. ----
    x_flat = x_ref[...].reshape(T * B, INPUT)
    xproj = jnp.dot(x_flat, wih1_ref[...],
                    preferred_element_type=jnp.float32) + b1_ref[...]
    xproj_ref[...] = xproj.reshape(T, B, GP)

    whh1 = whh1_ref[...]
    w2 = w2_ref[...]
    b2 = jnp.broadcast_to(b2_ref[...], (B, GP))   # broadcast once, not per step

    def step(t, carry):
        h1, c1, h2, c2 = carry
        # Layer 1: only the recurrent matmul is on the serial critical path.
        g1 = xproj_ref[t] + jnp.dot(h1, whh1, preferred_element_type=jnp.float32)
        h1, c1 = _gates_to_hc(g1, c1)
        # Layer 2: single fused matmul, K = 2*HP = 256.
        hcat = jnp.concatenate([h1, h2], axis=1)            # (B, 2*HP)
        g2 = jnp.dot(hcat, w2, preferred_element_type=jnp.float32) + b2
        h2, c2 = _gates_to_hc(g2, c2)
        return (h1, c1, h2, c2)

    zeros = jnp.zeros((B, HP), jnp.float32)
    _, _, h2, _ = lax.fori_loop(0, T, step, (zeros, zeros, zeros, zeros),
                                unroll=True)

    # ---- FC head on the last layer-2 hidden state (all 128-lane aligned). ----
    y = jnp.maximum(
        jnp.dot(h2, wfc1_ref[...], preferred_element_type=jnp.float32)
        + bfc1_ref[...], 0.0)                                # (B, HP)
    logit = jnp.sum(y * wfc2_ref[...], axis=-1, keepdims=True) + bfc2_ref[...]
    out_ref[...] = jnp.broadcast_to(jax.nn.sigmoid(logit),
                                    (B, 128)).astype(out_ref.dtype)


def prepare_params(p):
    """One-time weight prep: transpose, gate/lane padding, layer-2 fusion."""
    def pad_gate_cols(w_t):
        # (in, 4*HIDDEN) -> (in, 4*HP): each 64-wide gate block placed at k*HP.
        in_dim = w_t.shape[0]
        out = jnp.zeros((in_dim, 4, HP), jnp.float32)
        out = out.at[:, :, :HIDDEN].set(w_t.reshape(in_dim, 4, HIDDEN))
        return out.reshape(in_dim, 4 * HP)

    def pad_rows(w, rows):
        return jnp.zeros((rows, w.shape[1]), jnp.float32).at[:w.shape[0]].set(w)

    wih1 = pad_gate_cols(p["w_ih1"].T)                               # (4, GP)
    whh1 = pad_rows(pad_gate_cols(p["w_hh1"].T), HP)                 # (HP, GP)
    b1 = pad_gate_cols((p["b_ih1"] + p["b_hh1"])[None, :])           # (1, GP)

    wih2 = pad_rows(pad_gate_cols(p["w_ih2"].T), HP)                 # (HP, GP)
    whh2 = pad_rows(pad_gate_cols(p["w_hh2"].T), HP)                 # (HP, GP)
    w2 = jnp.concatenate([wih2, whh2], axis=0)                       # (2*HP, GP)
    b2 = pad_gate_cols((p["b_ih2"] + p["b_hh2"])[None, :])           # (1, GP)

    wfc1 = jnp.zeros((HP, HP), jnp.float32).at[:HIDDEN, :FC_HIDDEN].set(
        p["w_fc1"].T)                                                # (HP, HP)
    bfc1 = jnp.zeros((1, HP), jnp.float32).at[0, :FC_HIDDEN].set(p["b_fc1"])
    wfc2 = jnp.zeros((1, HP), jnp.float32).at[0, :FC_HIDDEN].set(p["w_fc2"][0])
    bfc2 = p["b_fc2"].reshape(1, 1).astype(jnp.float32)
    return dict(wih1=wih1, whh1=whh1, b1=b1, w2=w2, b2=b2,
                wfc1=wfc1, bfc1=bfc1, wfc2=wfc2, bfc2=bfc2)


def risk_assessment_forward(x, prepped):
    """x: (B, T, 4) float32 -> (B, 1) float32."""
    B, T, _ = x.shape
    B_pad = max(8, ((B + 7) // 8) * 8)                 # full sublane tile
    x_f = x.astype(jnp.float32)
    if B_pad != B:
        x_f = jnp.pad(x_f, ((0, B_pad - B), (0, 0), (0, 0)))
    x_tm = jnp.transpose(x_f, (1, 0, 2))               # time-major (T, B_pad, 4)

    args = (x_tm, prepped["wih1"], prepped["b1"], prepped["whh1"],
            prepped["w2"], prepped["b2"],
            prepped["wfc1"], prepped["bfc1"], prepped["wfc2"], prepped["bfc2"])

    flops = (2 * T * B_pad * INPUT * GP            # hoisted input projection
             + 2 * T * B_pad * (HP + 2 * HP) * GP  # recurrent + fused layer-2
             + 2 * B_pad * HP * HP + 2 * B_pad * HP)
    transcendentals = T * B_pad * 10 * HP + B_pad
    bytes_accessed = sum(int(np.prod(a.shape)) * 4 for a in args) + B_pad * 128 * 4

    vmem = pl.BlockSpec(memory_space=pltpu.MemorySpace.VMEM)
    out = pl.pallas_call(
        risk_kernel,
        out_shape=jax.ShapeDtypeStruct((B_pad, 128), jnp.float32),
        in_specs=[vmem] * len(args),
        out_specs=vmem,
        scratch_shapes=[pltpu.VMEM((T, B_pad, GP), jnp.float32)],
        cost_estimate=pl.CostEstimate(flops=flops,
                                      transcendentals=transcendentals,
                                      bytes_accessed=bytes_accessed),
    )(*args)
    return out[:B, :1]


def init_params(key):
    """Deterministic params matching PyTorch shapes (uniform +-1/sqrt(fan))."""
    keys = jax.random.split(key, 12)
    u = lambda kk, shape, bound: jax.random.uniform(
        kk, shape, jnp.float32, -bound, bound)
    k_lstm = 1.0 / float(np.sqrt(HIDDEN))
    k_fc1 = 1.0 / float(np.sqrt(HIDDEN))
    k_fc2 = 1.0 / float(np.sqrt(FC_HIDDEN))
    return {
        "w_ih1": u(keys[0], (4 * HIDDEN, INPUT), k_lstm),
        "w_hh1": u(keys[1], (4 * HIDDEN, HIDDEN), k_lstm),
        "b_ih1": u(keys[2], (4 * HIDDEN,), k_lstm),
        "b_hh1": u(keys[3], (4 * HIDDEN,), k_lstm),
        "w_ih2": u(keys[4], (4 * HIDDEN, HIDDEN), k_lstm),
        "w_hh2": u(keys[5], (4 * HIDDEN, HIDDEN), k_lstm),
        "b_ih2": u(keys[6], (4 * HIDDEN,), k_lstm),
        "b_hh2": u(keys[7], (4 * HIDDEN,), k_lstm),
        "w_fc1": u(keys[8], (FC_HIDDEN, HIDDEN), k_fc1),
        "b_fc1": u(keys[9], (FC_HIDDEN,), k_fc1),
        "w_fc2": u(keys[10], (1, FC_HIDDEN), k_fc2),
        "b_fc2": u(keys[11], (1,), k_fc2),
    }


def _ref_cell(x_t, h, c, w_ih_t, w_hh_t, b):
    gates = x_t @ w_ih_t + h @ w_hh_t + b
    i = jax.nn.sigmoid(gates[:, 0 * HIDDEN:1 * HIDDEN])
    f = jax.nn.sigmoid(gates[:, 1 * HIDDEN:2 * HIDDEN])
    g = jnp.tanh(gates[:, 2 * HIDDEN:3 * HIDDEN])
    o = jax.nn.sigmoid(gates[:, 3 * HIDDEN:4 * HIDDEN])
    c_new = f * c + i * g
    return o * jnp.tanh(c_new), c_new


def _reference_forward(x, p):
    """Pure-JAX reference of the same math (unpadded, for correctness check)."""
    B, T, _ = x.shape
    h1 = c1 = h2 = c2 = jnp.zeros((B, HIDDEN), jnp.float32)
    b1 = (p["b_ih1"] + p["b_hh1"])[None, :]
    b2 = (p["b_ih2"] + p["b_hh2"])[None, :]
    for t in range(T):
        h1, c1 = _ref_cell(x[:, t, :], h1, c1, p["w_ih1"].T, p["w_hh1"].T, b1)
        h2, c2 = _ref_cell(h1, h2, c2, p["w_ih2"].T, p["w_hh2"].T, b2)
    y = jnp.maximum(h2 @ p["w_fc1"].T + p["b_fc1"][None, :], 0.0)
    return jax.nn.sigmoid(y @ p["w_fc2"].T + p["b_fc2"][None, :])


if __name__ == "__main__":
    key = jax.random.PRNGKey(0)
    kx, kp = jax.random.split(key)

    B, T = 2, 8
    x = jax.random.normal(kx, (B, T, INPUT), dtype=jnp.float32)
    params = init_params(kp)
    prepped = prepare_params(params)          # one-time weight prep

    fwd = jax.jit(risk_assessment_forward)
    out = jax.block_until_ready(fwd(x, prepped))

    ref = _reference_forward(x, params)
    np.testing.assert_allclose(np.asarray(out), np.asarray(ref),
                               atol=1e-3, rtol=1e-3)
    assert out.shape == (B, 1)
    print("KERNEL_OK")
</pallas_src>

<mosaic_0001>
module attributes {stable_mosaic.version = 11 : i64} {
  func.func @risk_kernel(%arg0: memref<8x8x4xf32, #tpu.memory_space<vmem>>, %arg1: memref<4x512xf32, #tpu.memory_space<vmem>>, %arg2: memref<1x512xf32, #tpu.memory_space<vmem>>, %arg3: memref<128x512xf32, #tpu.memory_space<vmem>>, %arg4: memref<256x512xf32, #tpu.memory_space<vmem>>, %arg5: memref<1x512xf32, #tpu.memory_space<vmem>>, %arg6: memref<128x128xf32, #tpu.memory_space<vmem>>, %arg7: memref<1x128xf32, #tpu.memory_space<vmem>>, %arg8: memref<1x128xf32, #tpu.memory_space<vmem>>, %arg9: memref<1x1xf32, #tpu.memory_space<vmem>>, %arg10: memref<8x128xf32, #tpu.memory_space<vmem>>, %arg11: memref<8x8x512xf32, #tpu.memory_space<vmem>>) attributes {dimension_semantics = [], scalar_prefetch = 0 : i64, scratch_operands = 1 : i64, tpu.core_type = #tpu.core_type<tc>} {
    %c0 = arith.constant 0 : index
    %c0_0 = arith.constant 0 : index
    %c0_1 = arith.constant 0 : index
    %0 = vector.load %arg0[%c0, %c0_0, %c0_1] : memref<8x8x4xf32, #tpu.memory_space<vmem>>, vector<8x8x4xf32>
    %1 = vector.shape_cast %0 : vector<8x8x4xf32> to vector<64x4xf32>
    %c0_2 = arith.constant 0 : index
    %c0_3 = arith.constant 0 : index
    %2 = vector.load %arg1[%c0_2, %c0_3] : memref<4x512xf32, #tpu.memory_space<vmem>>, vector<4x512xf32>
    %cst = arith.constant dense<0.000000e+00> : vector<64x512xf32>
    %3 = tpu.matmul %1, %2, %cst {dimension_numbers = #tpu.dot_dimension_numbers<[1], [0], [0], [1], [0, 0, 1, 1], [], []>} : vector<64x4xf32>, vector<4x512xf32>, vector<64x512xf32> -> vector<64x512xf32>
    %c0_4 = arith.constant 0 : index
    %c0_5 = arith.constant 0 : index
    %4 = vector.load %arg2[%c0_4, %c0_5] : memref<1x512xf32, #tpu.memory_space<vmem>>, vector<1x512xf32>
    %5 = vector.broadcast %4 : vector<1x512xf32> to vector<64x512xf32>
    %6 = arith.addf %3, %5 : vector<64x512xf32>
    %7 = vector.shape_cast %6 : vector<64x512xf32> to vector<8x8x512xf32>
    %c0_6 = arith.constant 0 : index
    %c0_7 = arith.constant 0 : index
    %c0_8 = arith.constant 0 : index
    %8 = vector.load %arg11[%c0_6, %c0_7, %c0_8] : memref<8x8x512xf32, #tpu.memory_space<vmem>>, vector<8x8x512xf32>
    tpu.vector_store %arg11[%c0_6, %c0_7, %c0_8], %7 {strides = array<i32>} : memref<8x8x512xf32, #tpu.memory_space<vmem>>, vector<8x8x512xf32>,
    %c0_9 = arith.constant 0 : index
    %c0_10 = arith.constant 0 : index
    %9 = vector.load %arg3[%c0_9, %c0_10] : memref<128x512xf32, #tpu.memory_space<vmem>>, vector<128x512xf32>
    %c0_11 = arith.constant 0 : index
    %c0_12 = arith.constant 0 : index
    %10 = vector.load %arg4[%c0_11, %c0_12] : memref<256x512xf32, #tpu.memory_space<vmem>>, vector<256x512xf32>
    %c0_13 = arith.constant 0 : index
    %c0_14 = arith.constant 0 : index
    %11 = vector.load %arg5[%c0_13, %c0_14] : memref<1x512xf32, #tpu.memory_space<vmem>>, vector<1x512xf32>
    %12 = vector.shape_cast %11 : vector<1x512xf32> to vector<1x512xf32>
    %13 = vector.broadcast %12 : vector<1x512xf32> to vector<8x512xf32>
    %cst_15 = arith.constant 0.000000e+00 : f32
    %14 = vector.broadcast %cst_15 : f32 to vector<8x128xf32>
    %c0_i32 = arith.constant 0 : i32
    %15 = arith.index_cast %c0_i32 : i32 to index
    %c0_16 = arith.constant 0 : index
    %c0_17 = arith.constant 0 : index
    %16 = vector.load %arg11[%15, %c0_16, %c0_17] : memref<8x8x512xf32, #tpu.memory_space<vmem>>, vector<1x8x512xf32>
    %17 = vector.shape_cast %16 : vector<1x8x512xf32> to vector<8x512xf32>
    %cst_18 = arith.constant dense<0.000000e+00> : vector<8x512xf32>
    %18 = tpu.matmul %14, %9, %cst_18 {dimension_numbers = #tpu.dot_dimension_numbers<[1], [0], [0], [1], [0, 0, 1, 1], [], []>} : vector<8x128xf32>, vector<128x512xf32>, vector<8x512xf32> -> vector<8x512xf32>
    %19 = arith.addf %17, %18 : vector<8x512xf32>
    %20 = vector.extract_strided_slice %19 {offsets = [0, 0], sizes = [8, 128], strides = [1, 1]} : vector<8x512xf32> to vector<8x128xf32>
    %21 = arith.negf %20 : vector<8x128xf32>
    %22 = math.exp %21 : vector<8x128xf32>
    %cst_19 = arith.constant 1.000000e+00 : f32
    %23 = vector.broadcast %cst_19 : f32 to vector<8x128xf32>
    %24 = arith.addf %23, %22 : vector<8x128xf32>
    %25 = arith.divf %23, %24 : vector<8x128xf32>
    %26 = vector.extract_strided_slice %19 {offsets = [0, 128], sizes = [8, 128], strides = [1, 1]} : vector<8x512xf32> to vector<8x128xf32>
    %27 = arith.negf %26 : vector<8x128xf32>
    %28 = math.exp %27 : vector<8x128xf32>
    %cst_20 = arith.constant 1.000000e+00 : f32
    %29 = vector.broadcast %cst_20 : f32 to vector<8x128xf32>
    %30 = arith.addf %29, %28 : vector<8x128xf32>
    %31 = arith.divf %29, %30 : vector<8x128xf32>
    %32 = vector.extract_strided_slice %19 {offsets = [0, 256], sizes = [8, 128], strides = [1, 1]} : vector<8x512xf32> to vector<8x128xf32>
    %33 = math.tanh %32 : vector<8x128xf32>
    %34 = vector.extract_strided_slice %19 {offsets = [0, 384], sizes = [8, 128], strides = [1, 1]} : vector<8x512xf32> to vector<8x128xf32>
    %35 = arith.negf %34 : vector<8x128xf32>
    %36 = math.exp %35 : vector<8x128xf32>
    %cst_21 = arith.constant 1.000000e+00 : f32
    %37 = vector.broadcast %cst_21 : f32 to vector<8x128xf32>
    %38 = arith.addf %37, %36 : vector<8x128xf32>
    %39 = arith.divf %37, %38 : vector<8x128xf32>
    %40 = arith.mulf %31, %14 : vector<8x128xf32>
    %41 = arith.mulf %25, %33 : vector<8x128xf32>
    %42 = arith.addf %40, %41 : vector<8x128xf32>
    %43 = math.tanh %42 : vector<8x128xf32>
    %44 = arith.mulf %39, %43 : vector<8x128xf32>
    %45 = tpu.concatenate %44, %14 in 1 : vector<8x128xf32>, vector<8x128xf32> -> vector<8x256xf32>
    %cst_22 = arith.constant dense<0.000000e+00> : vector<8x512xf32>
    %46 = tpu.matmul %45, %10, %cst_22 {dimension_numbers = #tpu.dot_dimension_numbers<[1], [0], [0], [1], [0, 0, 1, 1], [], []>} : vector<8x256xf32>, vector<256x512xf32>, vector<8x512xf32> -> vector<8x512xf32>
    %47 = arith.addf %46, %13 : vector<8x512xf32>
    %48 = vector.extract_strided_slice %47 {offsets = [0, 0], sizes = [8, 128], strides = [1, 1]} : vector<8x512xf32> to vector<8x128xf32>
    %49 = arith.negf %48 : vector<8x128xf32>
    %50 = math.exp %49 : vector<8x128xf32>
    %cst_23 = arith.constant 1.000000e+00 : f32
    %51 = vector.broadcast %cst_23 : f32 to vector<8x128xf32>
    %52 = arith.addf %51, %50 : vector<8x128xf32>
    %53 = arith.divf %51, %52 : vector<8x128xf32>
    %54 = vector.extract_strided_slice %47 {offsets = [0, 128], sizes = [8, 128], strides = [1, 1]} : vector<8x512xf32> to vector<8x128xf32>
    %55 = arith.negf %54 : vector<8x128xf32>
    %56 = math.exp %55 : vector<8x128xf32>
    %cst_24 = arith.constant 1.000000e+00 : f32
    %57 = vector.broadcast %cst_24 : f32 to vector<8x128xf32>
    %58 = arith.addf %57, %56 : vector<8x128xf32>
    %59 = arith.divf %57, %58 : vector<8x128xf32>
    %60 = vector.extract_strided_slice %47 {offsets = [0, 256], sizes = [8, 128], strides = [1, 1]} : vector<8x512xf32> to vector<8x128xf32>
    %61 = math.tanh %60 : vector<8x128xf32>
    %62 = vector.extract_strided_slice %47 {offsets = [0, 384], sizes = [8, 128], strides = [1, 1]} : vector<8x512xf32> to vector<8x128xf32>
    %63 = arith.negf %62 : vector<8x128xf32>
    %64 = math.exp %63 : vector<8x128xf32>
    %cst_25 = arith.constant 1.000000e+00 : f32
    %65 = vector.broadcast %cst_25 : f32 to vector<8x128xf32>
    %66 = arith.addf %65, %64 : vector<8x128xf32>
    %67 = arith.divf %65, %66 : vector<8x128xf32>
    %68 = arith.mulf %59, %14 : vector<8x128xf32>
    %69 = arith.mulf %53, %61 : vector<8x128xf32>
    %70 = arith.addf %68, %69 : vector<8x128xf32>
    %71 = math.tanh %70 : vector<8x128xf32>
    %72 = arith.mulf %67, %71 : vector<8x128xf32>
    %c1_i32 = arith.constant 1 : i32
    %73 = arith.index_cast %c1_i32 : i32 to index
    %c0_26 = arith.constant 0 : index
    %c0_27 = arith.constant 0 : index
    %74 = vector.load %arg11[%73, %c0_26, %c0_27] : memref<8x8x512xf32, #tpu.memory_space<vmem>>, vector<1x8x512xf32>
    %75 = vector.shape_cast %74 : vector<1x8x512xf32> to vector<8x512xf32>
    %cst_28 = arith.constant dense<0.000000e+00> : vector<8x512xf32>
    %76 = tpu.matmul %44, %9, %cst_28 {dimension_numbers = #tpu.dot_dimension_numbers<[1], [0], [0], [1], [0, 0, 1, 1], [], []>} : vector<8x128xf32>, vector<128x512xf32>, vector<8x512xf32> -> vector<8x512xf32>
    %77 = arith.addf %75, %76 : vector<8x512xf32>
    %78 = vector.extract_strided_slice %77 {offsets = [0, 0], sizes = [8, 128], strides = [1, 1]} : vector<8x512xf32> to vector<8x128xf32>
    %79 = arith.negf %78 : vector<8x128xf32>
    %80 = math.exp %79 : vector<8x128xf32>
    %cst_29 = arith.constant 1.000000e+00 : f32
    %81 = vector.broadcast %cst_29 : f32 to vector<8x128xf32>
    %82 = arith.addf %81, %80 : vector<8x128xf32>
    %83 = arith.divf %81, %82 : vector<8x128xf32>
    %84 = vector.extract_strided_slice %77 {offsets = [0, 128], sizes = [8, 128], strides = [1, 1]} : vector<8x512xf32> to vector<8x128xf32>
    %85 = arith.negf %84 : vector<8x128xf32>
    %86 = math.exp %85 : vector<8x128xf32>
    %cst_30 = arith.constant 1.000000e+00 : f32
    %87 = vector.broadcast %cst_30 : f32 to vector<8x128xf32>
    %88 = arith.addf %87, %86 : vector<8x128xf32>
    %89 = arith.divf %87, %88 : vector<8x128xf32>
    %90 = vector.extract_strided_slice %77 {offsets = [0, 256], sizes = [8, 128], strides = [1, 1]} : vector<8x512xf32> to vector<8x128xf32>
    %91 = math.tanh %90 : vector<8x128xf32>
    %92 = vector.extract_strided_slice %77 {offsets = [0, 384], sizes = [8, 128], strides = [1, 1]} : vector<8x512xf32> to vector<8x128xf32>
    %93 = arith.negf %92 : vector<8x128xf32>
    %94 = math.exp %93 : vector<8x128xf32>
    %cst_31 = arith.constant 1.000000e+00 : f32
    %95 = vector.broadcast %cst_31 : f32 to vector<8x128xf32>
    %96 = arith.addf %95, %94 : vector<8x128xf32>
    %97 = arith.divf %95, %96 : vector<8x128xf32>
    %98 = arith.mulf %89, %42 : vector<8x128xf32>
    %99 = arith.mulf %83, %91 : vector<8x128xf32>
    %100 = arith.addf %98, %99 : vector<8x128xf32>
    %101 = math.tanh %100 : vector<8x128xf32>
    %102 = arith.mulf %97, %101 : vector<8x128xf32>
    %103 = tpu.concatenate %102, %72 in 1 : vector<8x128xf32>, vector<8x128xf32> -> vector<8x256xf32>
    %cst_32 = arith.constant dense<0.000000e+00> : vector<8x512xf32>
    %104 = tpu.matmul %103, %10, %cst_32 {dimension_numbers = #tpu.dot_dimension_numbers<[1], [0], [0], [1], [0, 0, 1, 1], [], []>} : vector<8x256xf32>, vector<256x512xf32>, vector<8x512xf32> -> vector<8x512xf32>
    %105 = arith.addf %104, %13 : vector<8x512xf32>
    %106 = vector.extract_strided_slice %105 {offsets = [0, 0], sizes = [8, 128], strides = [1, 1]} : vector<8x512xf32> to vector<8x128xf32>
    %107 = arith.negf %106 : vector<8x128xf32>
    %108 = math.exp %107 : vector<8x128xf32>
    %cst_33 = arith.constant 1.000000e+00 : f32
    %109 = vector.broadcast %cst_33 : f32 to vector<8x128xf32>
    %110 = arith.addf %109, %108 : vector<8x128xf32>
    %111 = arith.divf %109, %110 : vector<8x128xf32>
    %112 = vector.extract_strided_slice %105 {offsets = [0, 128], sizes = [8, 128], strides = [1, 1]} : vector<8x512xf32> to vector<8x128xf32>
    %113 = arith.negf %112 : vector<8x128xf32>
    %114 = math.exp %113 : vector<8x128xf32>
    %cst_34 = arith.constant 1.000000e+00 : f32
    %115 = vector.broadcast %cst_34 : f32 to vector<8x128xf32>
    %116 = arith.addf %115, %114 : vector<8x128xf32>
    %117 = arith.divf %115, %116 : vector<8x128xf32>
    %118 = vector.extract_strided_slice %105 {offsets = [0, 256], sizes = [8, 128], strides = [1, 1]} : vector<8x512xf32> to vector<8x128xf32>
    %119 = math.tanh %118 : vector<8x128xf32>
    %120 = vector.extract_strided_slice %105 {offsets = [0, 384], sizes = [8, 128], strides = [1, 1]} : vector<8x512xf32> to vector<8x128xf32>
    %121 = arith.negf %120 : vector<8x128xf32>
    %122 = math.exp %121 : vector<8x128xf32>
    %cst_35 = arith.constant 1.000000e+00 : f32
    %123 = vector.broadcast %cst_35 : f32 to vector<8x128xf32>
    %124 = arith.addf %123, %122 : vector<8x128xf32>
    %125 = arith.divf %123, %124 : vector<8x128xf32>
    %126 = arith.mulf %117, %70 : vector<8x128xf32>
    %127 = arith.mulf %111, %119 : vector<8x128xf32>
    %128 = arith.addf %126, %127 : vector<8x128xf32>
    %129 = math.tanh %128 : vector<8x128xf32>
    %130 = arith.mulf %125, %129 : vector<8x128xf32>
    %c2_i32 = arith.constant 2 : i32
    %131 = arith.index_cast %c2_i32 : i32 to index
    %c0_36 = arith.constant 0 : index
    %c0_37 = arith.constant 0 : index
    %132 = vector.load %arg11[%131, %c0_36, %c0_37] : memref<8x8x512xf32, #tpu.memory_space<vmem>>, vector<1x8x512xf32>
    %133 = vector.shape_cast %132 : vector<1x8x512xf32> to vector<8x512xf32>
    %cst_38 = arith.constant dense<0.000000e+00> : vector<8x512xf32>
    %134 = tpu.matmul %102, %9, %cst_38 {dimension_numbers = #tpu.dot_dimension_numbers<[1], [0], [0], [1], [0, 0, 1, 1], [], []>} : vector<8x128xf32>, vector<128x512xf32>, vector<8x512xf32> -> vector<8x512xf32>
    %135 = arith.addf %133, %134 : vector<8x512xf32>
    %136 = vector.extract_strided_slice %135 {offsets = [0, 0], sizes = [8, 128], strides = [1, 1]} : vector<8x512xf32> to vector<8x128xf32>
    %137 = arith.negf %136 : vector<8x128xf32>
    %138 = math.exp %137 : vector<8x128xf32>
    %cst_39 = arith.constant 1.000000e+00 : f32
    %139 = vector.broadcast %cst_39 : f32 to vector<8x128xf32>
    %140 = arith.addf %139, %138 : vector<8x128xf32>
    %141 = arith.divf %139, %140 : vector<8x128xf32>
    %142 = vector.extract_strided_slice %135 {offsets = [0, 128], sizes = [8, 128], strides = [1, 1]} : vector<8x512xf32> to vector<8x128xf32>
    %143 = arith.negf %142 : vector<8x128xf32>
    %144 = math.exp %143 : vector<8x128xf32>
    %cst_40 = arith.constant 1.000000e+00 : f32
    %145 = vector.broadcast %cst_40 : f32 to vector<8x128xf32>
    %146 = arith.addf %145, %144 : vector<8x128xf32>
    %147 = arith.divf %145, %146 : vector<8x128xf32>
    %148 = vector.extract_strided_slice %135 {offsets = [0, 256], sizes = [8, 128], strides = [1, 1]} : vector<8x512xf32> to vector<8x128xf32>
    %149 = math.tanh %148 : vector<8x128xf32>
    %150 = vector.extract_strided_slice %135 {offsets = [0, 384], sizes = [8, 128], strides = [1, 1]} : vector<8x512xf32> to vector<8x128xf32>
    %151 = arith.negf %150 : vector<8x128xf32>
    %152 = math.exp %151 : vector<8x128xf32>
    %cst_41 = arith.constant 1.000000e+00 : f32
    %153 = vector.broadcast %cst_41 : f32 to vector<8x128xf32>
    %154 = arith.addf %153, %152 : vector<8x128xf32>
    %155 = arith.divf %153, %154 : vector<8x128xf32>
    %156 = arith.mulf %147, %100 : vector<8x128xf32>
    %157 = arith.mulf %141, %149 : vector<8x128xf32>
    %158 = arith.addf %156, %157 : vector<8x128xf32>
    %159 = math.tanh %158 : vector<8x128xf32>
    %160 = arith.mulf %155, %159 : vector<8x128xf32>
    %161 = tpu.concatenate %160, %130 in 1 : vector<8x128xf32>, vector<8x128xf32> -> vector<8x256xf32>
    %cst_42 = arith.constant dense<0.000000e+00> : vector<8x512xf32>
    %162 = tpu.matmul %161, %10, %cst_42 {dimension_numbers = #tpu.dot_dimension_numbers<[1], [0], [0], [1], [0, 0, 1, 1], [], []>} : vector<8x256xf32>, vector<256x512xf32>, vector<8x512xf32> -> vector<8x512xf32>
    %163 = arith.addf %162, %13 : vector<8x512xf32>
    %164 = vector.extract_strided_slice %163 {offsets = [0, 0], sizes = [8, 128], strides = [1, 1]} : vector<8x512xf32> to vector<8x128xf32>
    %165 = arith.negf %164 : vector<8x128xf32>
    %166 = math.exp %165 : vector<8x128xf32>
    %cst_43 = arith.constant 1.000000e+00 : f32
    %167 = vector.broadcast %cst_43 : f32 to vector<8x128xf32>
    %168 = arith.addf %167, %166 : vector<8x128xf32>
    %169 = arith.divf %167, %168 : vector<8x128xf32>
    %170 = vector.extract_strided_slice %163 {offsets = [0, 128], sizes = [8, 128], strides = [1, 1]} : vector<8x512xf32> to vector<8x128xf32>
    %171 = arith.negf %170 : vector<8x128xf32>
    %172 = math.exp %171 : vector<8x128xf32>
    %cst_44 = arith.constant 1.000000e+00 : f32
    %173 = vector.broadcast %cst_44 : f32 to vector<8x128xf32>
    %174 = arith.addf %173, %172 : vector<8x128xf32>
    %175 = arith.divf %173, %174 : vector<8x128xf32>
    %176 = vector.extract_strided_slice %163 {offsets = [0, 256], sizes = [8, 128], strides = [1, 1]} : vector<8x512xf32> to vector<8x128xf32>
    %177 = math.tanh %176 : vector<8x128xf32>
    %178 = vector.extract_strided_slice %163 {offsets = [0, 384], sizes = [8, 128], strides = [1, 1]} : vector<8x512xf32> to vector<8x128xf32>
    %179 = arith.negf %178 : vector<8x128xf32>
    %180 = math.exp %179 : vector<8x128xf32>
    %cst_45 = arith.constant 1.000000e+00 : f32
    %181 = vector.broadcast %cst_45 : f32 to vector<8x128xf32>
    %182 = arith.addf %181, %180 : vector<8x128xf32>
    %183 = arith.divf %181, %182 : vector<8x128xf32>
    %184 = arith.mulf %175, %128 : vector<8x128xf32>
    %185 = arith.mulf %169, %177 : vector<8x128xf32>
    %186 = arith.addf %184, %185 : vector<8x128xf32>
    %187 = math.tanh %186 : vector<8x128xf32>
    %188 = arith.mulf %183, %187 : vector<8x128xf32>
    %c3_i32 = arith.constant 3 : i32
    %189 = arith.index_cast %c3_i32 : i32 to index
    %c0_46 = arith.constant 0 : index
    %c0_47 = arith.constant 0 : index
    %190 = vector.load %arg11[%189, %c0_46, %c0_47] : memref<8x8x512xf32, #tpu.memory_space<vmem>>, vector<1x8x512xf32>
    %191 = vector.shape_cast %190 : vector<1x8x512xf32> to vector<8x512xf32>
    %cst_48 = arith.constant dense<0.000000e+00> : vector<8x512xf32>
    %192 = tpu.matmul %160, %9, %cst_48 {dimension_numbers = #tpu.dot_dimension_numbers<[1], [0], [0], [1], [0, 0, 1, 1], [], []>} : vector<8x128xf32>, vector<128x512xf32>, vector<8x512xf32> -> vector<8x512xf32>
    %193 = arith.addf %191, %192 : vector<8x512xf32>
    %194 = vector.extract_strided_slice %193 {offsets = [0, 0], sizes = [8, 128], strides = [1, 1]} : vector<8x512xf32> to vector<8x128xf32>
    %195 = arith.negf %194 : vector<8x128xf32>
    %196 = math.exp %195 : vector<8x128xf32>
    %cst_49 = arith.constant 1.000000e+00 : f32
    %197 = vector.broadcast %cst_49 : f32 to vector<8x128xf32>
    %198 = arith.addf %197, %196 : vector<8x128xf32>
    %199 = arith.divf %197, %198 : vector<8x128xf32>
    %200 = vector.extract_strided_slice %193 {offsets = [0, 128], sizes = [8, 128], strides = [1, 1]} : vector<8x512xf32> to vector<8x128xf32>
    %201 = arith.negf %200 : vector<8x128xf32>
    %202 = math.exp %201 : vector<8x128xf32>
    %cst_50 = arith.constant 1.000000e+00 : f32
    %203 = vector.broadcast %cst_50 : f32 to vector<8x128xf32>
    %204 = arith.addf %203, %202 : vector<8x128xf32>
    %205 = arith.divf %203, %204 : vector<8x128xf32>
    %206 = vector.extract_strided_slice %193 {offsets = [0, 256], sizes = [8, 128], strides = [1, 1]} : vector<8x512xf32> to vector<8x128xf32>
    %207 = math.tanh %206 : vector<8x128xf32>
    %208 = vector.extract_strided_slice %193 {offsets = [0, 384], sizes = [8, 128], strides = [1, 1]} : vector<8x512xf32> to vector<8x128xf32>
    %209 = arith.negf %208 : vector<8x128xf32>
    %210 = math.exp %209 : vector<8x128xf32>
    %cst_51 = arith.constant 1.000000e+00 : f32
    %211 = vector.broadcast %cst_51 : f32 to vector<8x128xf32>
    %212 = arith.addf %211, %210 : vector<8x128xf32>
    %213 = arith.divf %211, %212 : vector<8x128xf32>
    %214 = arith.mulf %205, %158 : vector<8x128xf32>
    %215 = arith.mulf %199, %207 : vector<8x128xf32>
    %216 = arith.addf %214, %215 : vector<8x128xf32>
    %217 = math.tanh %216 : vector<8x128xf32>
    %218 = arith.mulf %213, %217 : vector<8x128xf32>
    %219 = tpu.concatenate %218, %188 in 1 : vector<8x128xf32>, vector<8x128xf32> -> vector<8x256xf32>
    %cst_52 = arith.constant dense<0.000000e+00> : vector<8x512xf32>
    %220 = tpu.matmul %219, %10, %cst_52 {dimension_numbers = #tpu.dot_dimension_numbers<[1], [0], [0], [1], [0, 0, 1, 1], [], []>} : vector<8x256xf32>, vector<256x512xf32>, vector<8x512xf32> -> vector<8x512xf32>
    %221 = arith.addf %220, %13 : vector<8x512xf32>
    %222 = vector.extract_strided_slice %221 {offsets = [0, 0], sizes = [8, 128], strides = [1, 1]} : vector<8x512xf32> to vector<8x128xf32>
    %223 = arith.negf %222 : vector<8x128xf32>
    %224 = math.exp %223 : vector<8x128xf32>
    %cst_53 = arith.constant 1.000000e+00 : f32
    %225 = vector.broadcast %cst_53 : f32 to vector<8x128xf32>
    %226 = arith.addf %225, %224 : vector<8x128xf32>
    %227 = arith.divf %225, %226 : vector<8x128xf32>
    %228 = vector.extract_strided_slice %221 {offsets = [0, 128], sizes = [8, 128], strides = [1, 1]} : vector<8x512xf32> to vector<8x128xf32>
    %229 = arith.negf %228 : vector<8x128xf32>
    %230 = math.exp %229 : vector<8x128xf32>
    %cst_54 = arith.constant 1.000000e+00 : f32
    %231 = vector.broadcast %cst_54 : f32 to vector<8x128xf32>
    %232 = arith.addf %231, %230 : vector<8x128xf32>
    %233 = arith.divf %231, %232 : vector<8x128xf32>
    %234 = vector.extract_strided_slice %221 {offsets = [0, 256], sizes = [8, 128], strides = [1, 1]} : vector<8x512xf32> to vector<8x128xf32>
    %235 = math.tanh %234 : vector<8x128xf32>
    %236 = vector.extract_strided_slice %221 {offsets = [0, 384], sizes = [8, 128], strides = [1, 1]} : vector<8x512xf32> to vector<8x128xf32>
    %237 = arith.negf %236 : vector<8x128xf32>
    %238 = math.exp %237 : vector<8x128xf32>
    %cst_55 = arith.constant 1.000000e+00 : f32
    %239 = vector.broadcast %cst_55 : f32 to vector<8x128xf32>
    %240 = arith.addf %239, %238 : vector<8x128xf32>
    %241 = arith.divf %239, %240 : vector<8x128xf32>
    %242 = arith.mulf %233, %186 : vector<8x128xf32>
    %243 = arith.mulf %227, %235 : vector<8x128xf32>
    %244 = arith.addf %242, %243 : vector<8x128xf32>
    %245 = math.tanh %244 : vector<8x128xf32>
    %246 = arith.mulf %241, %245 : vector<8x128xf32>
    %c4_i32 = arith.constant 4 : i32
    %247 = arith.index_cast %c4_i32 : i32 to index
    %c0_56 = arith.constant 0 : index
    %c0_57 = arith.constant 0 : index
    %248 = vector.load %arg11[%247, %c0_56, %c0_57] : memref<8x8x512xf32, #tpu.memory_space<vmem>>, vector<1x8x512xf32>
    %249 = vector.shape_cast %248 : vector<1x8x512xf32> to vector<8x512xf32>
    %cst_58 = arith.constant dense<0.000000e+00> : vector<8x512xf32>
    %250 = tpu.matmul %218, %9, %cst_58 {dimension_numbers = #tpu.dot_dimension_numbers<[1], [0], [0], [1], [0, 0, 1, 1], [], []>} : vector<8x128xf32>, vector<128x512xf32>, vector<8x512xf32> -> vector<8x512xf32>
    %251 = arith.addf %249, %250 : vector<8x512xf32>
    %252 = vector.extract_strided_slice %251 {offsets = [0, 0], sizes = [8, 128], strides = [1, 1]} : vector<8x512xf32> to vector<8x128xf32>
    %253 = arith.negf %252 : vector<8x128xf32>
    %254 = math.exp %253 : vector<8x128xf32>
    %cst_59 = arith.constant 1.000000e+00 : f32
    %255 = vector.broadcast %cst_59 : f32 to vector<8x128xf32>
    %256 = arith.addf %255, %254 : vector<8x128xf32>
    %257 = arith.divf %255, %256 : vector<8x128xf32>
    %258 = vector.extract_strided_slice %251 {offsets = [0, 128], sizes = [8, 128], strides = [1, 1]} : vector<8x512xf32> to vector<8x128xf32>
    %259 = arith.negf %258 : vector<8x128xf32>
    %260 = math.exp %259 : vector<8x128xf32>
    %cst_60 = arith.constant 1.000000e+00 : f32
    %261 = vector.broadcast %cst_60 : f32 to vector<8x128xf32>
    %262 = arith.addf %261, %260 : vector<8x128xf32>
    %263 = arith.divf %261, %262 : vector<8x128xf32>
    %264 = vector.extract_strided_slice %251 {offsets = [0, 256], sizes = [8, 128], strides = [1, 1]} : vector<8x512xf32> to vector<8x128xf32>
    %265 = math.tanh %264 : vector<8x128xf32>
    %266 = vector.extract_strided_slice %251 {offsets = [0, 384], sizes = [8, 128], strides = [1, 1]} : vector<8x512xf32> to vector<8x128xf32>
    %267 = arith.negf %266 : vector<8x128xf32>
    %268 = math.exp %267 : vector<8x128xf32>
    %cst_61 = arith.constant 1.000000e+00 : f32
    %269 = vector.broadcast %cst_61 : f32 to vector<8x128xf32>
    %270 = arith.addf %269, %268 : vector<8x128xf32>
    %271 = arith.divf %269, %270 : vector<8x128xf32>
    %272 = arith.mulf %263, %216 : vector<8x128xf32>
    %273 = arith.mulf %257, %265 : vector<8x128xf32>
    %274 = arith.addf %272, %273 : vector<8x128xf32>
    %275 = math.tanh %274 : vector<8x128xf32>
    %276 = arith.mulf %271, %275 : vector<8x128xf32>
    %277 = tpu.concatenate %276, %246 in 1 : vector<8x128xf32>, vector<8x128xf32> -> vector<8x256xf32>
    %cst_62 = arith.constant dense<0.000000e+00> : vector<8x512xf32>
    %278 = tpu.matmul %277, %10, %cst_62 {dimension_numbers = #tpu.dot_dimension_numbers<[1], [0], [0], [1], [0, 0, 1, 1], [], []>} : vector<8x256xf32>, vector<256x512xf32>, vector<8x512xf32> -> vector<8x512xf32>
    %279 = arith.addf %278, %13 : vector<8x512xf32>
    %280 = vector.extract_strided_slice %279 {offsets = [0, 0], sizes = [8, 128], strides = [1, 1]} : vector<8x512xf32> to vector<8x128xf32>
    %281 = arith.negf %280 : vector<8x128xf32>
    %282 = math.exp %281 : vector<8x128xf32>
    %cst_63 = arith.constant 1.000000e+00 : f32
    %283 = vector.broadcast %cst_63 : f32 to vector<8x128xf32>
    %284 = arith.addf %283, %282 : vector<8x128xf32>
    %285 = arith.divf %283, %284 : vector<8x128xf32>
    %286 = vector.extract_strided_slice %279 {offsets = [0, 128], sizes = [8, 128], strides = [1, 1]} : vector<8x512xf32> to vector<8x128xf32>
    %287 = arith.negf %286 : vector<8x128xf32>
    %288 = math.exp %287 : vector<8x128xf32>
    %cst_64 = arith.constant 1.000000e+00 : f32
    %289 = vector.broadcast %cst_64 : f32 to vector<8x128xf32>
    %290 = arith.addf %289, %288 : vector<8x128xf32>
    %291 = arith.divf %289, %290 : vector<8x128xf32>
    %292 = vector.extract_strided_slice %279 {offsets = [0, 256], sizes = [8, 128], strides = [1, 1]} : vector<8x512xf32> to vector<8x128xf32>
    %293 = math.tanh %292 : vector<8x128xf32>
    %294 = vector.extract_strided_slice %279 {offsets = [0, 384], sizes = [8, 128], strides = [1, 1]} : vector<8x512xf32> to vector<8x128xf32>
    %295 = arith.negf %294 : vector<8x128xf32>
    %296 = math.exp %295 : vector<8x128xf32>
    %cst_65 = arith.constant 1.000000e+00 : f32
    %297 = vector.broadcast %cst_65 : f32 to vector<8x128xf32>
    %298 = arith.addf %297, %296 : vector<8x128xf32>
    %299 = arith.divf %297, %298 : vector<8x128xf32>
    %300 = arith.mulf %291, %244 : vector<8x128xf32>
    %301 = arith.mulf %285, %293 : vector<8x128xf32>
    %302 = arith.addf %300, %301 : vector<8x128xf32>
    %303 = math.tanh %302 : vector<8x128xf32>
    %304 = arith.mulf %299, %303 : vector<8x128xf32>
    %c5_i32 = arith.constant 5 : i32
    %305 = arith.index_cast %c5_i32 : i32 to index
    %c0_66 = arith.constant 0 : index
    %c0_67 = arith.constant 0 : index
    %306 = vector.load %arg11[%305, %c0_66, %c0_67] : memref<8x8x512xf32, #tpu.memory_space<vmem>>, vector<1x8x512xf32>
    %307 = vector.shape_cast %306 : vector<1x8x512xf32> to vector<8x512xf32>
    %cst_68 = arith.constant dense<0.000000e+00> : vector<8x512xf32>
    %308 = tpu.matmul %276, %9, %cst_68 {dimension_numbers = #tpu.dot_dimension_numbers<[1], [0], [0], [1], [0, 0, 1, 1], [], []>} : vector<8x128xf32>, vector<128x512xf32>, vector<8x512xf32> -> vector<8x512xf32>
    %309 = arith.addf %307, %308 : vector<8x512xf32>
    %310 = vector.extract_strided_slice %309 {offsets = [0, 0], sizes = [8, 128], strides = [1, 1]} : vector<8x512xf32> to vector<8x128xf32>
    %311 = arith.negf %310 : vector<8x128xf32>
    %312 = math.exp %311 : vector<8x128xf32>
    %cst_69 = arith.constant 1.000000e+00 : f32
    %313 = vector.broadcast %cst_69 : f32 to vector<8x128xf32>
    %314 = arith.addf %313, %312 : vector<8x128xf32>
    %315 = arith.divf %313, %314 : vector<8x128xf32>
    %316 = vector.extract_strided_slice %309 {offsets = [0, 128], sizes = [8, 128], strides = [1, 1]} : vector<8x512xf32> to vector<8x128xf32>
    %317 = arith.negf %316 : vector<8x128xf32>
    %318 = math.exp %317 : vector<8x128xf32>
    %cst_70 = arith.constant 1.000000e+00 : f32
    %319 = vector.broadcast %cst_70 : f32 to vector<8x128xf32>
    %320 = arith.addf %319, %318 : vector<8x128xf32>
    %321 = arith.divf %319, %320 : vector<8x128xf32>
    %322 = vector.extract_strided_slice %309 {offsets = [0, 256], sizes = [8, 128], strides = [1, 1]} : vector<8x512xf32> to vector<8x128xf32>
    %323 = math.tanh %322 : vector<8x128xf32>
    %324 = vector.extract_strided_slice %309 {offsets = [0, 384], sizes = [8, 128], strides = [1, 1]} : vector<8x512xf32> to vector<8x128xf32>
    %325 = arith.negf %324 : vector<8x128xf32>
    %326 = math.exp %325 : vector<8x128xf32>
    %cst_71 = arith.constant 1.000000e+00 : f32
    %327 = vector.broadcast %cst_71 : f32 to vector<8x128xf32>
    %328 = arith.addf %327, %326 : vector<8x128xf32>
    %329 = arith.divf %327, %328 : vector<8x128xf32>
    %330 = arith.mulf %321, %274 : vector<8x128xf32>
    %331 = arith.mulf %315, %323 : vector<8x128xf32>
    %332 = arith.addf %330, %331 : vector<8x128xf32>
    %333 = math.tanh %332 : vector<8x128xf32>
    %334 = arith.mulf %329, %333 : vector<8x128xf32>
    %335 = tpu.concatenate %334, %304 in 1 : vector<8x128xf32>, vector<8x128xf32> -> vector<8x256xf32>
    %cst_72 = arith.constant dense<0.000000e+00> : vector<8x512xf32>
    %336 = tpu.matmul %335, %10, %cst_72 {dimension_numbers = #tpu.dot_dimension_numbers<[1], [0], [0], [1], [0, 0, 1, 1], [], []>} : vector<8x256xf32>, vector<256x512xf32>, vector<8x512xf32> -> vector<8x512xf32>
    %337 = arith.addf %336, %13 : vector<8x512xf32>
    %338 = vector.extract_strided_slice %337 {offsets = [0, 0], sizes = [8, 128], strides = [1, 1]} : vector<8x512xf32> to vector<8x128xf32>
    %339 = arith.negf %338 : vector<8x128xf32>
    %340 = math.exp %339 : vector<8x128xf32>
    %cst_73 = arith.constant 1.000000e+00 : f32
    %341 = vector.broadcast %cst_73 : f32 to vector<8x128xf32>
    %342 = arith.addf %341, %340 : vector<8x128xf32>
    %343 = arith.divf %341, %342 : vector<8x128xf32>
    %344 = vector.extract_strided_slice %337 {offsets = [0, 128], sizes = [8, 128], strides = [1, 1]} : vector<8x512xf32> to vector<8x128xf32>
    %345 = arith.negf %344 : vector<8x128xf32>
    %346 = math.exp %345 : vector<8x128xf32>
    %cst_74 = arith.constant 1.000000e+00 : f32
    %347 = vector.broadcast %cst_74 : f32 to vector<8x128xf32>
    %348 = arith.addf %347, %346 : vector<8x128xf32>
    %349 = arith.divf %347, %348 : vector<8x128xf32>
    %350 = vector.extract_strided_slice %337 {offsets = [0, 256], sizes = [8, 128], strides = [1, 1]} : vector<8x512xf32> to vector<8x128xf32>
    %351 = math.tanh %350 : vector<8x128xf32>
    %352 = vector.extract_strided_slice %337 {offsets = [0, 384], sizes = [8, 128], strides = [1, 1]} : vector<8x512xf32> to vector<8x128xf32>
    %353 = arith.negf %352 : vector<8x128xf32>
    %354 = math.exp %353 : vector<8x128xf32>
    %cst_75 = arith.constant 1.000000e+00 : f32
    %355 = vector.broadcast %cst_75 : f32 to vector<8x128xf32>
    %356 = arith.addf %355, %354 : vector<8x128xf32>
    %357 = arith.divf %355, %356 : vector<8x128xf32>
    %358 = arith.mulf %349, %302 : vector<8x128xf32>
    %359 = arith.mulf %343, %351 : vector<8x128xf32>
    %360 = arith.addf %358, %359 : vector<8x128xf32>
    %361 = math.tanh %360 : vector<8x128xf32>
    %362 = arith.mulf %357, %361 : vector<8x128xf32>
    %c6_i32 = arith.constant 6 : i32
    %363 = arith.index_cast %c6_i32 : i32 to index
    %c0_76 = arith.constant 0 : index
    %c0_77 = arith.constant 0 : index
    %364 = vector.load %arg11[%363, %c0_76, %c0_77] : memref<8x8x512xf32, #tpu.memory_space<vmem>>, vector<1x8x512xf32>
    %365 = vector.shape_cast %364 : vector<1x8x512xf32> to vector<8x512xf32>
    %cst_78 = arith.constant dense<0.000000e+00> : vector<8x512xf32>
    %366 = tpu.matmul %334, %9, %cst_78 {dimension_numbers = #tpu.dot_dimension_numbers<[1], [0], [0], [1], [0, 0, 1, 1], [], []>} : vector<8x128xf32>, vector<128x512xf32>, vector<8x512xf32> -> vector<8x512xf32>
    %367 = arith.addf %365, %366 : vector<8x512xf32>
    %368 = vector.extract_strided_slice %367 {offsets = [0, 0], sizes = [8, 128], strides = [1, 1]} : vector<8x512xf32> to vector<8x128xf32>
    %369 = arith.negf %368 : vector<8x128xf32>
    %370 = math.exp %369 : vector<8x128xf32>
    %cst_79 = arith.constant 1.000000e+00 : f32
    %371 = vector.broadcast %cst_79 : f32 to vector<8x128xf32>
    %372 = arith.addf %371, %370 : vector<8x128xf32>
    %373 = arith.divf %371, %372 : vector<8x128xf32>
    %374 = vector.extract_strided_slice %367 {offsets = [0, 128], sizes = [8, 128], strides = [1, 1]} : vector<8x512xf32> to vector<8x128xf32>
    %375 = arith.negf %374 : vector<8x128xf32>
    %376 = math.exp %375 : vector<8x128xf32>
    %cst_80 = arith.constant 1.000000e+00 : f32
    %377 = vector.broadcast %cst_80 : f32 to vector<8x128xf32>
    %378 = arith.addf %377, %376 : vector<8x128xf32>
    %379 = arith.divf %377, %378 : vector<8x128xf32>
    %380 = vector.extract_strided_slice %367 {offsets = [0, 256], sizes = [8, 128], strides = [1, 1]} : vector<8x512xf32> to vector<8x128xf32>
    %381 = math.tanh %380 : vector<8x128xf32>
    %382 = vector.extract_strided_slice %367 {offsets = [0, 384], sizes = [8, 128], strides = [1, 1]} : vector<8x512xf32> to vector<8x128xf32>
    %383 = arith.negf %382 : vector<8x128xf32>
    %384 = math.exp %383 : vector<8x128xf32>
    %cst_81 = arith.constant 1.000000e+00 : f32
    %385 = vector.broadcast %cst_81 : f32 to vector<8x128xf32>
    %386 = arith.addf %385, %384 : vector<8x128xf32>
    %387 = arith.divf %385, %386 : vector<8x128xf32>
    %388 = arith.mulf %379, %332 : vector<8x128xf32>
    %389 = arith.mulf %373, %381 : vector<8x128xf32>
    %390 = arith.addf %388, %389 : vector<8x128xf32>
    %391 = math.tanh %390 : vector<8x128xf32>
    %392 = arith.mulf %387, %391 : vector<8x128xf32>
    %393 = tpu.concatenate %392, %362 in 1 : vector<8x128xf32>, vector<8x128xf32> -> vector<8x256xf32>
    %cst_82 = arith.constant dense<0.000000e+00> : vector<8x512xf32>
    %394 = tpu.matmul %393, %10, %cst_82 {dimension_numbers = #tpu.dot_dimension_numbers<[1], [0], [0], [1], [0, 0, 1, 1], [], []>} : vector<8x256xf32>, vector<256x512xf32>, vector<8x512xf32> -> vector<8x512xf32>
    %395 = arith.addf %394, %13 : vector<8x512xf32>
    %396 = vector.extract_strided_slice %395 {offsets = [0, 0], sizes = [8, 128], strides = [1, 1]} : vector<8x512xf32> to vector<8x128xf32>
    %397 = arith.negf %396 : vector<8x128xf32>
    %398 = math.exp %397 : vector<8x128xf32>
    %cst_83 = arith.constant 1.000000e+00 : f32
    %399 = vector.broadcast %cst_83 : f32 to vector<8x128xf32>
    %400 = arith.addf %399, %398 : vector<8x128xf32>
    %401 = arith.divf %399, %400 : vector<8x128xf32>
    %402 = vector.extract_strided_slice %395 {offsets = [0, 128], sizes = [8, 128], strides = [1, 1]} : vector<8x512xf32> to vector<8x128xf32>
    %403 = arith.negf %402 : vector<8x128xf32>
    %404 = math.exp %403 : vector<8x128xf32>
    %cst_84 = arith.constant 1.000000e+00 : f32
    %405 = vector.broadcast %cst_84 : f32 to vector<8x128xf32>
    %406 = arith.addf %405, %404 : vector<8x128xf32>
    %407 = arith.divf %405, %406 : vector<8x128xf32>
    %408 = vector.extract_strided_slice %395 {offsets = [0, 256], sizes = [8, 128], strides = [1, 1]} : vector<8x512xf32> to vector<8x128xf32>
    %409 = math.tanh %408 : vector<8x128xf32>
    %410 = vector.extract_strided_slice %395 {offsets = [0, 384], sizes = [8, 128], strides = [1, 1]} : vector<8x512xf32> to vector<8x128xf32>
    %411 = arith.negf %410 : vector<8x128xf32>
    %412 = math.exp %411 : vector<8x128xf32>
    %cst_85 = arith.constant 1.000000e+00 : f32
    %413 = vector.broadcast %cst_85 : f32 to vector<8x128xf32>
    %414 = arith.addf %413, %412 : vector<8x128xf32>
    %415 = arith.divf %413, %414 : vector<8x128xf32>
    %416 = arith.mulf %407, %360 : vector<8x128xf32>
    %417 = arith.mulf %401, %409 : vector<8x128xf32>
    %418 = arith.addf %416, %417 : vector<8x128xf32>
    %419 = math.tanh %418 : vector<8x128xf32>
    %420 = arith.mulf %415, %419 : vector<8x128xf32>
    %c7_i32 = arith.constant 7 : i32
    %421 = arith.index_cast %c7_i32 : i32 to index
    %c0_86 = arith.constant 0 : index
    %c0_87 = arith.constant 0 : index
    %422 = vector.load %arg11[%421, %c0_86, %c0_87] : memref<8x8x512xf32, #tpu.memory_space<vmem>>, vector<1x8x512xf32>
    %423 = vector.shape_cast %422 : vector<1x8x512xf32> to vector<8x512xf32>
    %cst_88 = arith.constant dense<0.000000e+00> : vector<8x512xf32>
    %424 = tpu.matmul %392, %9, %cst_88 {dimension_numbers = #tpu.dot_dimension_numbers<[1], [0], [0], [1], [0, 0, 1, 1], [], []>} : vector<8x128xf32>, vector<128x512xf32>, vector<8x512xf32> -> vector<8x512xf32>
    %425 = arith.addf %423, %424 : vector<8x512xf32>
    %426 = vector.extract_strided_slice %425 {offsets = [0, 0], sizes = [8, 128], strides = [1, 1]} : vector<8x512xf32> to vector<8x128xf32>
    %427 = arith.negf %426 : vector<8x128xf32>
    %428 = math.exp %427 : vector<8x128xf32>
    %cst_89 = arith.constant 1.000000e+00 : f32
    %429 = vector.broadcast %cst_89 : f32 to vector<8x128xf32>
    %430 = arith.addf %429, %428 : vector<8x128xf32>
    %431 = arith.divf %429, %430 : vector<8x128xf32>
    %432 = vector.extract_strided_slice %425 {offsets = [0, 128], sizes = [8, 128], strides = [1, 1]} : vector<8x512xf32> to vector<8x128xf32>
    %433 = arith.negf %432 : vector<8x128xf32>
    %434 = math.exp %433 : vector<8x128xf32>
    %cst_90 = arith.constant 1.000000e+00 : f32
    %435 = vector.broadcast %cst_90 : f32 to vector<8x128xf32>
    %436 = arith.addf %435, %434 : vector<8x128xf32>
    %437 = arith.divf %435, %436 : vector<8x128xf32>
    %438 = vector.extract_strided_slice %425 {offsets = [0, 256], sizes = [8, 128], strides = [1, 1]} : vector<8x512xf32> to vector<8x128xf32>
    %439 = math.tanh %438 : vector<8x128xf32>
    %440 = vector.extract_strided_slice %425 {offsets = [0, 384], sizes = [8, 128], strides = [1, 1]} : vector<8x512xf32> to vector<8x128xf32>
    %441 = arith.negf %440 : vector<8x128xf32>
    %442 = math.exp %441 : vector<8x128xf32>
    %cst_91 = arith.constant 1.000000e+00 : f32
    %443 = vector.broadcast %cst_91 : f32 to vector<8x128xf32>
    %444 = arith.addf %443, %442 : vector<8x128xf32>
    %445 = arith.divf %443, %444 : vector<8x128xf32>
    %446 = arith.mulf %437, %390 : vector<8x128xf32>
    %447 = arith.mulf %431, %439 : vector<8x128xf32>
    %448 = arith.addf %446, %447 : vector<8x128xf32>
    %449 = math.tanh %448 : vector<8x128xf32>
    %450 = arith.mulf %445, %449 : vector<8x128xf32>
    %451 = tpu.concatenate %450, %420 in 1 : vector<8x128xf32>, vector<8x128xf32> -> vector<8x256xf32>
    %cst_92 = arith.constant dense<0.000000e+00> : vector<8x512xf32>
    %452 = tpu.matmul %451, %10, %cst_92 {dimension_numbers = #tpu.dot_dimension_numbers<[1], [0], [0], [1], [0, 0, 1, 1], [], []>} : vector<8x256xf32>, vector<256x512xf32>, vector<8x512xf32> -> vector<8x512xf32>
    %453 = arith.addf %452, %13 : vector<8x512xf32>
    %454 = vector.extract_strided_slice %453 {offsets = [0, 0], sizes = [8, 128], strides = [1, 1]} : vector<8x512xf32> to vector<8x128xf32>
    %455 = arith.negf %454 : vector<8x128xf32>
    %456 = math.exp %455 : vector<8x128xf32>
    %cst_93 = arith.constant 1.000000e+00 : f32
    %457 = vector.broadcast %cst_93 : f32 to vector<8x128xf32>
    %458 = arith.addf %457, %456 : vector<8x128xf32>
    %459 = arith.divf %457, %458 : vector<8x128xf32>
    %460 = vector.extract_strided_slice %453 {offsets = [0, 128], sizes = [8, 128], strides = [1, 1]} : vector<8x512xf32> to vector<8x128xf32>
    %461 = arith.negf %460 : vector<8x128xf32>
    %462 = math.exp %461 : vector<8x128xf32>
    %cst_94 = arith.constant 1.000000e+00 : f32
    %463 = vector.broadcast %cst_94 : f32 to vector<8x128xf32>
    %464 = arith.addf %463, %462 : vector<8x128xf32>
    %465 = arith.divf %463, %464 : vector<8x128xf32>
    %466 = vector.extract_strided_slice %453 {offsets = [0, 256], sizes = [8, 128], strides = [1, 1]} : vector<8x512xf32> to vector<8x128xf32>
    %467 = math.tanh %466 : vector<8x128xf32>
    %468 = vector.extract_strided_slice %453 {offsets = [0, 384], sizes = [8, 128], strides = [1, 1]} : vector<8x512xf32> to vector<8x128xf32>
    %469 = arith.negf %468 : vector<8x128xf32>
    %470 = math.exp %469 : vector<8x128xf32>
    %cst_95 = arith.constant 1.000000e+00 : f32
    %471 = vector.broadcast %cst_95 : f32 to vector<8x128xf32>
    %472 = arith.addf %471, %470 : vector<8x128xf32>
    %473 = arith.divf %471, %472 : vector<8x128xf32>
    %474 = arith.mulf %465, %418 : vector<8x128xf32>
    %475 = arith.mulf %459, %467 : vector<8x128xf32>
    %476 = arith.addf %474, %475 : vector<8x128xf32>
    %477 = math.tanh %476 : vector<8x128xf32>
    %478 = arith.mulf %473, %477 : vector<8x128xf32>
    %c8_i32 = arith.constant 8 : i32
    %c0_96 = arith.constant 0 : index
    %c0_97 = arith.constant 0 : index
    %479 = vector.load %arg6[%c0_96, %c0_97] : memref<128x128xf32, #tpu.memory_space<vmem>>, vector<128x128xf32>
    %cst_98 = arith.constant dense<0.000000e+00> : vector<8x128xf32>
    %480 = tpu.matmul %478, %479, %cst_98 {dimension_numbers = #tpu.dot_dimension_numbers<[1], [0], [0], [1], [0, 0, 1, 1], [], []>} : vector<8x128xf32>, vector<128x128xf32>, vector<8x128xf32> -> vector<8x128xf32>
    %c0_99 = arith.constant 0 : index
    %c0_100 = arith.constant 0 : index
    %481 = vector.load %arg7[%c0_99, %c0_100] : memref<1x128xf32, #tpu.memory_space<vmem>>, vector<1x128xf32>
    %482 = vector.broadcast %481 : vector<1x128xf32> to vector<8x128xf32>
    %483 = arith.addf %480, %482 : vector<8x128xf32>
    %cst_101 = arith.constant 0.000000e+00 : f32
    %484 = vector.broadcast %cst_101 : f32 to vector<8x128xf32>
    %485 = arith.maximumf %483, %484 : vector<8x128xf32>
    %c0_102 = arith.constant 0 : index
    %c0_103 = arith.constant 0 : index
    %486 = vector.load %arg8[%c0_102, %c0_103] : memref<1x128xf32, #tpu.memory_space<vmem>>, vector<1x128xf32>
    %487 = vector.broadcast %486 : vector<1x128xf32> to vector<8x128xf32>
    %488 = arith.mulf %485, %487 : vector<8x128xf32>
    %cst_104 = arith.constant dense<0.000000e+00> : vector<8xf32>
    %489 = vector.multi_reduction <add>, %488, %cst_104 [1] : vector<8x128xf32> to vector<8xf32>
    %490 = vector.shape_cast %489 : vector<8xf32> to vector<8x1xf32>
    %c0_105 = arith.constant 0 : index
    %c0_106 = arith.constant 0 : index
    %491 = vector.load %arg9[%c0_105, %c0_106] : memref<1x1xf32, #tpu.memory_space<vmem>>, vector<1x1xf32>
    %492 = vector.broadcast %491 : vector<1x1xf32> to vector<8x1xf32>
    %493 = arith.addf %490, %492 : vector<8x1xf32>
    %494 = arith.negf %493 : vector<8x1xf32>
    %495 = math.exp %494 : vector<8x1xf32>
    %cst_107 = arith.constant 1.000000e+00 : f32
    %496 = vector.broadcast %cst_107 : f32 to vector<8x1xf32>
    %497 = arith.addf %496, %495 : vector<8x1xf32>
    %498 = arith.divf %496, %497 : vector<8x1xf32>
    %499 = vector.shape_cast %498 : vector<8x1xf32> to vector<8x1xf32>
    %500 = vector.broadcast %499 : vector<8x1xf32> to vector<8x128xf32>
    %c0_108 = arith.constant 0 : index
    %c0_109 = arith.constant 0 : index
    %501 = vector.load %arg10[%c0_108, %c0_109] : memref<8x128xf32, #tpu.memory_space<vmem>>, vector<8x128xf32>
    tpu.vector_store %arg10[%c0_108, %c0_109], %500 {strides = array<i32>} : memref<8x128xf32, #tpu.memory_space<vmem>>, vector<8x128xf32>,
    return
  }
}

</mosaic_0001>

<llo_original>
// kernel: risk_assessment_forward.1
$region0: #{risk_assessment_forward.1}
  #allocation0 [shape = 'u32[]', space=smem, size = 0x4, offset = 0x4, fixed_abs, tag = 'smem constant byte address 0x4 - core index']
  #allocation1 [shape = 'u32[144,128]{1,0:T(1,128)}', space=vmem, size = 0x12000, scoped, tag = 'internal scratch']
  #allocation2 [shape = 'f32[8,8,512]{2,1,0:T(8,128)}', space=vmem, size = 0x20000, scoped, tag = 'scratch operand']
  #allocation3 [shape = 'f32[1,1]{1,0:T(1,128)S(1)}', space=vmem, size = 0x200, scoped, tag = 'scoped memory for risk_assessment_forward.1']
  %s0 = inlined_call_operand.vmem [shape: f32[8,8,4], index: 0, kind: input, shape index: {}]
  %s1 = inlined_call_operand.vmem [shape: f32[4,512], index: 1, kind: input, shape index: {}]
  %s2 = inlined_call_operand.vmem [shape: f32[1,512], index: 2, kind: input, shape index: {}]
  %s3 = inlined_call_operand.hbm [shape: f32[128,512], index: 3, kind: input, shape index: {}]
  %s4 = inlined_call_operand.hbm [shape: f32[256,512], index: 4, kind: input, shape index: {}]
  %s5 = inlined_call_operand.vmem [shape: f32[1,512], index: 5, kind: input, shape index: {}]
  %s6 = inlined_call_operand.hbm [shape: f32[128,128], index: 6, kind: input, shape index: {}]
  %s7 = inlined_call_operand.vmem [shape: f32[1,128], index: 7, kind: input, shape index: {}]
  %s8 = inlined_call_operand.vmem [shape: f32[1,128], index: 8, kind: input, shape index: {}]
  %s9 = inlined_call_operand.<no memory space> [shape: f32[1,1], index: 9, kind: input, shape index: {}]
  %s10 = inlined_call_operand.vmem [shape: f32[8,128], index: 10, kind: output, shape index: {}]
  %s11 = sld [smem:[#allocation0]]
  $region62: #{risk_assessment_forward.1} parent=0
    _
  %s13 = ssub.s32 1, %s11
  %s14 = scalar_select 0, %s13, %s11
  %v15 = vstv %s9
  %16 = vst [vmem:[#allocation3] sm:$0x1] %v15
  $region1: #{risk_assessment_forward.1} parent=0
    #allocation4 [shape = 'u8[262144]{0}', space=vmem, size = 0x40000, scoped, tag = 'input window, operand 3, single buffered']
    #allocation5 [shape = 's32[1]{0}', space=sflag, size = 0x4, scoped, tag = 'scoped memory for risk_assessment_forward.1']
    #allocation6 [shape = 'u8[524288]{0}', space=vmem, size = 0x80000, scoped, tag = 'input window, operand 4, single buffered']
    #allocation7 [shape = 's32[1]{0}', space=sflag, size = 0x4, scoped, tag = 'scoped memory for risk_assessment_forward.1']
    #allocation8 [shape = 'u8[65536]{0}', space=vmem, size = 0x10000, scoped, tag = 'input window, operand 6, single buffered']
    %17 = vsyncpa [#allocation5], 0
    %18 = vsyncpa [#allocation7], 0
    // Predicated region
    $region2: #{risk_assessment_forward.1} parent=1 // pred_check
      _
    $region3: #{risk_assessment_forward.1} parent=1 // pred_check_branch
      %20 = sbr.rel (0) target = $region5
    $region4: #{risk_assessment_forward.1} parent=1 // pred_region
      _
    $region5: #{risk_assessment_forward.1} parent=1 // pred_fallthru
      _
    // Predicated region
    $region6: #{risk_assessment_forward.1} parent=1 // pred_check
      _
    $region7: #{risk_assessment_forward.1} parent=1 // pred_check_branch
      %22 = sbr.rel (0) target = $region9
    $region8: #{risk_assessment_forward.1} parent=1 // pred_region
      _
    $region9: #{risk_assessment_forward.1} parent=1 // pred_fallthru
      _
    // Predicated region
    $region10: #{risk_assessment_forward.1} parent=1 // pred_check
      _
    $region11: #{risk_assessment_forward.1} parent=1 // pred_check_branch
      %24 = sbr.rel (0) target = $region13
    $region12: #{risk_assessment_forward.1} parent=1 // pred_region
      _
    $region13: #{risk_assessment_forward.1} parent=1 // pred_fallthru
      _
    // Predicated region
    $region14: #{risk_assessment_forward.1} parent=1 // pred_check
      _
    $region15: #{risk_assessment_forward.1} parent=1 // pred_check_branch
      %26 = sbr.rel (0) target = $region17
    $region16: #{risk_assessment_forward.1} parent=1 // pred_region
      %s28 = ssub.s32 8192, 8192
      %29 = vsyncadd [#allocation5], %s28
      %s30 = sshll.u32 [#allocation4], 4
      %s31 = int_to_ptr.vmem [resolvable:$true] %s30
      %36 = dma.hbm_to_vmem [thread:$0]  %s3, 8192, %s31, [#allocation5], 512, 512, 32
    $region17: #{risk_assessment_forward.1} parent=1 // pred_fallthru
      _
    // Predicated region
    $region18: #{risk_assessment_forward.1} parent=1 // pred_check
      _
    $region19: #{risk_assessment_forward.1} parent=1 // pred_check_branch
      %38 = sbr.rel (0) target = $region21
    $region20: #{risk_assessment_forward.1} parent=1 // pred_region
      %s40 = ssub.s32 16384, 16384
      %41 = vsyncadd [#allocation7], %s40
      %s42 = sshll.u32 [#allocation6], 4
      %s43 = int_to_ptr.vmem [resolvable:$true] %s42
      %48 = dma.hbm_to_vmem [thread:$0]  %s4, 16384, %s43, [#allocation7], 512, 512, 32
    $region21: #{risk_assessment_forward.1} parent=1 // pred_fallthru
      _
    // Predicated region
    $region22: #{risk_assessment_forward.1} parent=1 // pred_check
      _
    $region23: #{risk_assessment_forward.1} parent=1 // pred_check_branch
      %50 = sbr.rel (0) target = $region25
    $region24: #{risk_assessment_forward.1} parent=1 // pred_region
      _
    $region25: #{risk_assessment_forward.1} parent=1 // pred_fallthru
      _
    // Predicated region
    $region26: #{risk_assessment_forward.1} parent=1 // pred_check
      _
    $region27: #{risk_assessment_forward.1} parent=1 // pred_check_branch
      %52 = sbr.rel (0) target = $region29
    $region28: #{risk_assessment_forward.1} parent=1 // pred_region
      %s54 = ssub.s32 2048, 2048
      %55 = vsyncadd [#allocation7], %s54
      %s56 = sshll.u32 [#allocation8], 4
      %s57 = int_to_ptr.vmem [resolvable:$true] %s56
      %62 = dma.hbm_to_vmem [thread:$0]  %s6, 2048, %s57, [#allocation7], 128, 128, 8
    $region29: #{risk_assessment_forward.1} parent=1 // pred_fallthru
      _
    // Predicated region
    $region30: #{risk_assessment_forward.1} parent=1 // pred_check
      _
    $region31: #{risk_assessment_forward.1} parent=1 // pred_check_branch
      %64 = sbr.rel (0) target = $region33
    $region32: #{risk_assessment_forward.1} parent=1 // pred_region
      _
    $region33: #{risk_assessment_forward.1} parent=1 // pred_fallthru
      _
    // Predicated region
    $region34: #{risk_assessment_forward.1} parent=1 // pred_check
      _
    $region35: #{risk_assessment_forward.1} parent=1 // pred_check_branch
      %66 = sbr.rel (0) target = $region37
    $region36: #{risk_assessment_forward.1} parent=1 // pred_region
      _
    $region37: #{risk_assessment_forward.1} parent=1 // pred_fallthru
      _
    // Predicated region
    $region38: #{risk_assessment_forward.1} parent=1 // pred_check
      _
    $region39: #{risk_assessment_forward.1} parent=1 // pred_check_branch
      %68 = sbr.rel (0) target = $region41
    $region40: #{risk_assessment_forward.1} parent=1 // pred_region
      _
    $region41: #{risk_assessment_forward.1} parent=1 // pred_fallthru
      _
    // Predicated region
    $region42: #{risk_assessment_forward.1} parent=1 // pred_check
      _
    $region43: #{risk_assessment_forward.1} parent=1 // pred_check_branch
      %70 = sbr.rel (0) target = $region45
    $region44: #{risk_assessment_forward.1} parent=1 // pred_region
      %71 = dma.done [#allocation5], 8192
    $region45: #{risk_assessment_forward.1} parent=1 // pred_fallthru
      _
    // Predicated region
    $region46: #{risk_assessment_forward.1} parent=1 // pred_check
      _
    $region47: #{risk_assessment_forward.1} parent=1 // pred_check_branch
      %73 = sbr.rel (0) target = $region49
    $region48: #{risk_assessment_forward.1} parent=1 // pred_region
      %74 = dma.done [#allocation7], 16384
    $region49: #{risk_assessment_forward.1} parent=1 // pred_fallthru
      _
    // Predicated region
    $region50: #{risk_assessment_forward.1} parent=1 // pred_check
      _
    $region51: #{risk_assessment_forward.1} parent=1 // pred_check_branch
      %76 = sbr.rel (0) target = $region53
    $region52: #{risk_assessment_forward.1} parent=1 // pred_region
      %77 = dma.done [#allocation7], 2048
    $region53: #{risk_assessment_forward.1} parent=1 // pred_fallthru
      _
    %v78 = vld [vmem:[%s0] sm:$0xff]
    %v79 = vld [vmem:[%s0 + $0x8] sm:$0xff]
    %v80 = vld [vmem:[%s0 + $0x10] sm:$0xff]
    %v81 = vld [vmem:[%s0 + $0x18] sm:$0xff]
    %v82 = vld [vmem:[%s0 + $0x20] sm:$0xff]
    %v83 = vld [vmem:[%s0 + $0x28] sm:$0xff]
    %v84 = vld [vmem:[%s0 + $0x30] sm:$0xff]
    %v85 = vld [vmem:[%s0 + $0x38] sm:$0xff]
    %v86 = vld [vmem:[%s1] sm:$0xff]
    %v87 = vld [vmem:[%s1 + $0x8] sm:$0xff]
    %v88 = vld [vmem:[%s2] sm:$0xf]
    %v90 = vlaneseq
    %v91 = vshrl.u32 %v90, 7
    %v92 = vsub.s32 0, %v91
    %v93 = vrot.slane %v88, %v92
    %v94 = vlaneseq
    %v95 = vshrl.u32 %v94, 7
    %v96 = vsub.s32 1, %v95
    %v97 = vrot.slane %v88, %v96
    %v98 = vlaneseq
    %v99 = vshrl.u32 %v98, 7
    %v100 = vsub.s32 2, %v99
    %v101 = vrot.slane %v88, %v100
    %v102 = vlaneseq
    %v103 = vshrl.u32 %v102, 7
    %v104 = vsub.s32 3, %v103
    %v105 = vrot.slane %v88, %v104
    %v112 = vcombine.high %v86, %v86
    %v113 = vcombine.high %v87, %v87
    %vm114 = vcmask 31744
    %v116 = vsel %vm114, %v78, 0
    %v119 = vsel %vm114, %v79, 0
    %v122 = vsel %vm114, %v80, 0
    %v125 = vsel %vm114, %v81, 0
    %v128 = vsel %vm114, %v82, 0
    %v131 = vsel %vm114, %v83, 0
    %v134 = vsel %vm114, %v84, 0
    %v137 = vsel %vm114, %v85, 0
    %vm139 = vcmask 1043456
    %v140 = vsel %vm139, %v86, 0
    %v142 = vsel %vm139, %v112, 0
    %v144 = vsel %vm139, %v87, 0
    %v146 = vsel %vm139, %v113, 0
    %148 = vmatprep.subr.mxu0 %v142
    %149 = vmatpush1.msra.mxu0 %v140
    %150 = vmatprep.subr.mxu0 0.0
    %151 = vmatpush1.msra.mxu0 0.0
    %152 = vmatprep.subr.mxu0 0.0
    %153 = vmatpush1.msra.mxu0 0.0
    %154 = vmatprep.subr.mxu0 0.0
    %155 = vmatpush1.msra.mxu0 0.0
    %156 = vmatprep.subr.mxu0 0.0
    %157 = vmatpush1.msra.mxu0 0.0
    %158 = vmatprep.subr.mxu0 0.0
    %159 = vmatpush1.msra.mxu0 0.0
    %160 = vmatprep.subr.mxu0 0.0
    %161 = vmatpush1.msra.mxu0 0.0
    %162 = vmatprep.subr.mxu0 0.0
    %163 = vmatpush1.msra.mxu0 0.0
    %164 = vmatprep.subr.mxu0 0.0
    %165 = vmatpush1.msra.mxu0 0.0
    %166 = vmatprep.subr.mxu0 0.0
    %167 = vmatpush1.msra.mxu0 0.0
    %168 = vmatprep.subr.mxu0 0.0
    %169 = vmatpush1.msra.mxu0 0.0
    %170 = vmatprep.subr.mxu0 0.0
    %171 = vmatpush1.msra.mxu0 0.0
    %172 = vmatprep.subr.mxu0 0.0
    %173 = vmatpush1.msra.mxu0 0.0
    %174 = vmatprep.subr.mxu0 0.0
    %175 = vmatpush1.msra.mxu0 0.0
    %176 = vmatprep.subr.mxu0 0.0
    %177 = vmatpush1.msra.mxu0 0.0
    %178 = vmatprep.subr.mxu0 0.0
    %179 = vmatpush1.msra.mxu0 0.0
    %180 = vmatprep.subr.mxu0 0.0
    %181 = vmatpush1.msra.mxu0 0.0
    %182 = vmatprep.subr.mxu0 0.0
    %183 = vmatpush1.msra.mxu0 0.0
    %184 = vmatprep.subr.mxu0 0.0
    %185 = vmatpush1.msra.mxu0 0.0
    %186 = vmatprep.subr.mxu0 0.0
    %187 = vmatpush1.msra.mxu0 0.0
    %188 = vmatprep.subr.mxu0 0.0
    %189 = vmatpush1.msra.mxu0 0.0
    %190 = vmatprep.subr.mxu0 0.0
    %191 = vmatpush1.msra.mxu0 0.0
    %192 = vmatprep.subr.mxu0 0.0
    %193 = vmatpush1.msra.mxu0 0.0
    %194 = vmatprep.subr.mxu0 0.0
    %195 = vmatpush1.msra.mxu0 0.0
    %196 = vmatprep.subr.mxu0 0.0
    %197 = vmatpush1.msra.mxu0 0.0
    %198 = vmatprep.subr.mxu0 0.0
    %199 = vmatpush1.msra.mxu0 0.0
    %200 = vmatprep.subr.mxu0 0.0
    %201 = vmatpush1.msra.mxu0 0.0
    %202 = vmatprep.subr.mxu0 0.0
    %203 = vmatpush1.msra.mxu0 0.0
    %204 = vmatprep.subr.mxu0 0.0
    %205 = vmatpush1.msra.mxu0 0.0
    %206 = vmatprep.subr.mxu0 0.0
    %207 = vmatpush1.msra.mxu0 0.0
    %208 = vmatprep.subr.mxu0 0.0
    %209 = vmatpush1.msra.mxu0 0.0
    %210 = vmatprep.subr.mxu0 0.0
    %211 = vmatpush1.msra.mxu0 0.0
    %212 = vmatprep.mubr.f32.mxu0 0.0
    %213 = vmatmul.mubr.f32.gmra.mrb[0].mxu0 %v116
    %v214 = vpop.f32.mrb[0].mxu0
    %v215 = vadd.f32 %v93, %v214
    %v216 = vpop.f32.mrb[0].mxu0
    %v217 = vadd.f32 %v97, %v216
    %218 = vmatprep.mubr.f32.mxu0 0.0
    %219 = vmatmul.mubr.f32.gmra.mrb[0].mxu0 %v119
    %v220 = vpop.f32.mrb[0].mxu0
    %v221 = vadd.f32 %v93, %v220
    %v222 = vpop.f32.mrb[0].mxu0
    %v223 = vadd.f32 %v97, %v222
    %224 = vmatprep.mubr.f32.mxu0 0.0
    %225 = vmatmul.mubr.f32.gmra.mrb[0].mxu0 %v122
    %v226 = vpop.f32.mrb[0].mxu0
    %v227 = vadd.f32 %v93, %v226
    %v228 = vpop.f32.mrb[0].mxu0
    %v229 = vadd.f32 %v97, %v228
    %230 = vmatprep.mubr.f32.mxu0 0.0
    %231 = vmatmul.mubr.f32.gmra.mrb[0].mxu0 %v125
    %v232 = vpop.f32.mrb[0].mxu0
    %v233 = vadd.f32 %v93, %v232
    %v234 = vpop.f32.mrb[0].mxu0
    %v235 = vadd.f32 %v97, %v234
    %236 = vmatprep.mubr.f32.mxu0 0.0
    %237 = vmatmul.mubr.f32.gmra.mrb[0].mxu0 %v128
    %v238 = vpop.f32.mrb[0].mxu0
    %v239 = vadd.f32 %v93, %v238
    %v240 = vpop.f32.mrb[0].mxu0
    %v241 = vadd.f32 %v97, %v240
    %242 = vmatprep.mubr.f32.mxu0 0.0
    %243 = vmatmul.mubr.f32.gmra.mrb[0].mxu0 %v131
    %v244 = vpop.f32.mrb[0].mxu0
    %v245 = vadd.f32 %v93, %v244
    %v246 = vpop.f32.mrb[0].mxu0
    %v247 = vadd.f32 %v97, %v246
    %248 = vmatprep.mubr.f32.mxu0 0.0
    %249 = vmatmul.mubr.f32.gmra.mrb[0].mxu0 %v134
    %v250 = vpop.f32.mrb[0].mxu0
    %v251 = vadd.f32 %v93, %v250
    %v252 = vpop.f32.mrb[0].mxu0
    %v253 = vadd.f32 %v97, %v252
    %254 = vmatprep.mubr.f32.mxu0 0.0
    %255 = vmatmul.mubr.f32.gmra.mrb[0].mxu0 %v137
    %v256 = vpop.f32.mrb[0].mxu0
    %v257 = vadd.f32 %v93, %v256
    %v258 = vpop.f32.mrb[0].mxu0
    %v259 = vadd.f32 %v97, %v258
    %260 = vdwg.mxu0
    %261 = vmatprep.subr.mxu0 %v146
    %262 = vmatpush1.msra.mxu0 %v144
    %263 = vmatprep.subr.mxu0 0.0
    %264 = vmatpush1.msra.mxu0 0.0
    %265 = vmatprep.subr.mxu0 0.0
    %266 = vmatpush1.msra.mxu0 0.0
    %267 = vmatprep.subr.mxu0 0.0
    %268 = vmatpush1.msra.mxu0 0.0
    %269 = vmatprep.subr.mxu0 0.0
    %270 = vmatpush1.msra.mxu0 0.0
    %271 = vmatprep.subr.mxu0 0.0
    %272 = vmatpush1.msra.mxu0 0.0
    %273 = vmatprep.subr.mxu0 0.0
    %274 = vmatpush1.msra.mxu0 0.0
    %275 = vmatprep.subr.mxu0 0.0
    %276 = vmatpush1.msra.mxu0 0.0
    %277 = vmatprep.subr.mxu0 0.0
    %278 = vmatpush1.msra.mxu0 0.0
    %279 = vmatprep.subr.mxu0 0.0
    %280 = vmatpush1.msra.mxu0 0.0
    %281 = vmatprep.subr.mxu0 0.0
    %282 = vmatpush1.msra.mxu0 0.0
    %283 = vmatprep.subr.mxu0 0.0
    %284 = vmatpush1.msra.mxu0 0.0
    %285 = vmatprep.subr.mxu0 0.0
    %286 = vmatpush1.msra.mxu0 0.0
    %287 = vmatprep.subr.mxu0 0.0
    %288 = vmatpush1.msra.mxu0 0.0
    %289 = vmatprep.subr.mxu0 0.0
    %290 = vmatpush1.msra.mxu0 0.0
    %291 = vmatprep.subr.mxu0 0.0
    %292 = vmatpush1.msra.mxu0 0.0
    %293 = vmatprep.subr.mxu0 0.0
    %294 = vmatpush1.msra.mxu0 0.0
    %295 = vmatprep.subr.mxu0 0.0
    %296 = vmatpush1.msra.mxu0 0.0
    %297 = vmatprep.subr.mxu0 0.0
    %298 = vmatpush1.msra.mxu0 0.0
    %299 = vmatprep.subr.mxu0 0.0
    %300 = vmatpush1.msra.mxu0 0.0
    %301 = vmatprep.subr.mxu0 0.0
    %302 = vmatpush1.msra.mxu0 0.0
    %303 = vmatprep.subr.mxu0 0.0
    %304 = vmatpush1.msra.mxu0 0.0
    %305 = vmatprep.subr.mxu0 0.0
    %306 = vmatpush1.msra.mxu0 0.0
    %307 = vmatprep.subr.mxu0 0.0
    %308 = vmatpush1.msra.mxu0 0.0
    %309 = vmatprep.subr.mxu0 0.0
    %310 = vmatpush1.msra.mxu0 0.0
    %311 = vmatprep.subr.mxu0 0.0
    %312 = vmatpush1.msra.mxu0 0.0
    %313 = vmatprep.subr.mxu0 0.0
    %314 = vmatpush1.msra.mxu0 0.0
    %315 = vmatprep.subr.mxu0 0.0
    %316 = vmatpush1.msra.mxu0 0.0
    %317 = vmatprep.subr.mxu0 0.0
    %318 = vmatpush1.msra.mxu0 0.0
    %319 = vmatprep.subr.mxu0 0.0
    %320 = vmatpush1.msra.mxu0 0.0
    %321 = vmatprep.subr.mxu0 0.0
    %322 = vmatpush1.msra.mxu0 0.0
    %323 = vmatprep.subr.mxu0 0.0
    %324 = vmatpush1.msra.mxu0 0.0
    %325 = vmatprep.mubr.f32.mxu0 0.0
    %326 = vmatmul.mubr.f32.gmra.mrb[0].mxu0 %v116
    %v327 = vpop.f32.mrb[0].mxu0
    %v328 = vadd.f32 %v101, %v327
    %v329 = vpop.f32.mrb[0].mxu0
    %v330 = vadd.f32 %v105, %v329
    %331 = vmatprep.mubr.f32.mxu0 0.0
    %332 = vmatmul.mubr.f32.gmra.mrb[0].mxu0 %v119
    %v333 = vpop.f32.mrb[0].mxu0
    %v334 = vadd.f32 %v101, %v333
    %v335 = vpop.f32.mrb[0].mxu0
    %v336 = vadd.f32 %v105, %v335
    %337 = vmatprep.mubr.f32.mxu0 0.0
    %338 = vmatmul.mubr.f32.gmra.mrb[0].mxu0 %v122
    %v339 = vpop.f32.mrb[0].mxu0
    %v340 = vadd.f32 %v101, %v339
    %v341 = vpop.f32.mrb[0].mxu0
    %v342 = vadd.f32 %v105, %v341
    %343 = vmatprep.mubr.f32.mxu0 0.0
    %344 = vmatmul.mubr.f32.gmra.mrb[0].mxu0 %v125
    %v345 = vpop.f32.mrb[0].mxu0
    %v346 = vadd.f32 %v101, %v345
    %v347 = vpop.f32.mrb[0].mxu0
    %v348 = vadd.f32 %v105, %v347
    %349 = vmatprep.mubr.f32.mxu0 0.0
    %350 = vmatmul.mubr.f32.gmra.mrb[0].mxu0 %v128
    %v351 = vpop.f32.mrb[0].mxu0
    %v352 = vadd.f32 %v101, %v351
    %v353 = vpop.f32.mrb[0].mxu0
    %v354 = vadd.f32 %v105, %v353
    %355 = vmatprep.mubr.f32.mxu0 0.0
    %356 = vmatmul.mubr.f32.gmra.mrb[0].mxu0 %v131
    %v357 = vpop.f32.mrb[0].mxu0
    %v358 = vadd.f32 %v101, %v357
    %v359 = vpop.f32.mrb[0].mxu0
    %v360 = vadd.f32 %v105, %v359
    %361 = vmatprep.mubr.f32.mxu0 0.0
    %362 = vmatmul.mubr.f32.gmra.mrb[0].mxu0 %v134
    %v363 = vpop.f32.mrb[0].mxu0
    %v364 = vadd.f32 %v101, %v363
    %v365 = vpop.f32.mrb[0].mxu0
    %v366 = vadd.f32 %v105, %v365
    %367 = vmatprep.mubr.f32.mxu0 0.0
    %368 = vmatmul.mubr.f32.gmra.mrb[0].mxu0 %v137
    %v369 = vpop.f32.mrb[0].mxu0
    %v370 = vadd.f32 %v101, %v369
    %v371 = vpop.f32.mrb[0].mxu0
    %v372 = vadd.f32 %v105, %v371
    %373 = vdwg.mxu0
    %374 = vst [vmem:[#allocation2] sm:$0xff] %v215
    %375 = vst [vmem:[#allocation2 + $0x8] sm:$0xff] %v217
    %376 = vst [vmem:[#allocation2 + $0x10] sm:$0xff] %v328
    %377 = vst [vmem:[#allocation2 + $0x18] sm:$0xff] %v330
    %378 = vst [vmem:[#allocation2 + $0x20] sm:$0xff] %v221
    %379 = vst [vmem:[#allocation2 + $0x28] sm:$0xff] %v223
    %380 = vst [vmem:[#allocation2 + $0x30] sm:$0xff] %v334
    %381 = vst [vmem:[#allocation2 + $0x38] sm:$0xff] %v336
    %382 = vst [vmem:[#allocation2 + $0x40] sm:$0xff] %v227
    %383 = vst [vmem:[#allocation2 + $0x48] sm:$0xff] %v229
    %384 = vst [vmem:[#allocation2 + $0x50] sm:$0xff] %v340
    %385 = vst [vmem:[#allocation2 + $0x58] sm:$0xff] %v342
    %386 = vst [vmem:[#allocation2 + $0x60] sm:$0xff] %v233
    %387 = vst [vmem:[#allocation2 + $0x68] sm:$0xff] %v235
    %388 = vst [vmem:[#allocation2 + $0x70] sm:$0xff] %v346
    %389 = vst [vmem:[#allocation2 + $0x78] sm:$0xff] %v348
    %390 = vst [vmem:[#allocation2 + $0x80] sm:$0xff] %v239
    %391 = vst [vmem:[#allocation2 + $0x88] sm:$0xff] %v241
    %392 = vst [vmem:[#allocation2 + $0x90] sm:$0xff] %v352
    %393 = vst [vmem:[#allocation2 + $0x98] sm:$0xff] %v354
    %394 = vst [vmem:[#allocation2 + $0xa0] sm:$0xff] %v245
    %395 = vst [vmem:[#allocation2 + $0xa8] sm:$0xff] %v247
    %396 = vst [vmem:[#allocation2 + $0xb0] sm:$0xff] %v358
    %397 = vst [vmem:[#allocation2 + $0xb8] sm:$0xff] %v360
    %398 = vst [vmem:[#allocation2 + $0xc0] sm:$0xff] %v251
    %399 = vst [vmem:[#allocation2 + $0xc8] sm:$0xff] %v253
    %400 = vst [vmem:[#allocation2 + $0xd0] sm:$0xff] %v364
    %401 = vst [vmem:[#allocation2 + $0xd8] sm:$0xff] %v366
    %402 = vst [vmem:[#allocation2 + $0xe0] sm:$0xff] %v257
    %403 = vst [vmem:[#allocation2 + $0xe8] sm:$0xff] %v259
    %404 = vst [vmem:[#allocation2 + $0xf0] sm:$0xff] %v370
    %405 = vst [vmem:[#allocation2 + $0xf8] sm:$0xff] %v372
    %v406 = vld [vmem:[#allocation4] sm:$0xff]
    %v407 = vld [vmem:[#allocation4 + $0x8] sm:$0xff]
    %v408 = vld [vmem:[#allocation4 + $0x10] sm:$0xff]
    %v409 = vld [vmem:[#allocation4 + $0x18] sm:$0xff]
    %v410 = vld [vmem:[#allocation4 + $0x20] sm:$0xff]
    %v411 = vld [vmem:[#allocation4 + $0x28] sm:$0xff]
    %v412 = vld [vmem:[#allocation4 + $0x30] sm:$0xff]
    %v413 = vld [vmem:[#allocation4 + $0x38] sm:$0xff]
    %v414 = vld [vmem:[#allocation4 + $0x40] sm:$0xff]
    %v415 = vld [vmem:[#allocation4 + $0x48] sm:$0xff]
    %v416 = vld [vmem:[#allocation4 + $0x50] sm:$0xff]
    %v417 = vld [vmem:[#allocation4 + $0x58] sm:$0xff]
    %v418 = vld [vmem:[#allocation4 + $0x60] sm:$0xff]
    %v419 = vld [vmem:[#allocation4 + $0x68] sm:$0xff]
    %v420 = vld [vmem:[#allocation4 + $0x70] sm:$0xff]
    %v421 = vld [vmem:[#allocation4 + $0x78] sm:$0xff]
    %v422 = vld [vmem:[#allocation4 + $0x80] sm:$0xff]
    %v423 = vld [vmem:[#allocation4 + $0x88] sm:$0xff]
    %v424 = vld [vmem:[#allocation4 + $0x90] sm:$0xff]
    %v425 = vld [vmem:[#allocation4 + $0x98] sm:$0xff]
    %v426 = vld [vmem:[#allocation4 + $0xa0] sm:$0xff]
    %v427 = vld [vmem:[#allocation4 + $0xa8] sm:$0xff]
    %v428 = vld [vmem:[#allocation4 + $0xb0] sm:$0xff]
    %v429 = vld [vmem:[#allocation4 + $0xb8] sm:$0xff]
    %v430 = vld [vmem:[#allocation4 + $0xc0] sm:$0xff]
    %v431 = vld [vmem:[#allocation4 + $0xc8] sm:$0xff]
    %v432 = vld [vmem:[#allocation4 + $0xd0] sm:$0xff]
    %v433 = vld [vmem:[#allocation4 + $0xd8] sm:$0xff]
    %v434 = vld [vmem:[#allocation4 + $0xe0] sm:$0xff]
    %v435 = vld [vmem:[#allocation4 + $0xe8] sm:$0xff]
    %v436 = vld [vmem:[#allocation4 + $0xf0] sm:$0xff]
    %v437 = vld [vmem:[#allocation4 + $0xf8] sm:$0xff]
    %v438 = vld [vmem:[#allocation4 + $0x100] sm:$0xff]
    %v439 = vld [vmem:[#allocation4 + $0x108] sm:$0xff]
    %v440 = vld [vmem:[#allocation4 + $0x110] sm:$0xff]
    %v441 = vld [vmem:[#allocation4 + $0x118] sm:$0xff]
    %v442 = vld [vmem:[#allocation4 + $0x120] sm:$0xff]
    %v443 = vld [vmem:[#allocation4 + $0x128] sm:$0xff]
    %v444 = vld [vmem:[#allocation4 + $0x130] sm:$0xff]
    %v445 = vld [vmem:[#allocation4 + $0x138] sm:$0xff]
    %v446 = vld [vmem:[#allocation4 + $0x140] sm:$0xff]
    %v447 = vld [vmem:[#allocation4 + $0x148] sm:$0xff]
    %v448 = vld [vmem:[#allocation4 + $0x150] sm:$0xff]
    %v449 = vld [vmem:[#allocation4 + $0x158] sm:$0xff]
    %v450 = vld [vmem:[#allocation4 + $0x160] sm:$0xff]
    %v451 = vld [vmem:[#allocation4 + $0x168] sm:$0xff]
    %v452 = vld [vmem:[#allocation4 + $0x170] sm:$0xff]
    %v453 = vld [vmem:[#allocation4 + $0x178] sm:$0xff]
    %v454 = vld [vmem:[#allocation4 + $0x180] sm:$0xff]
    %v455 = vld [vmem:[#allocation4 + $0x188] sm:$0xff]
    %v456 = vld [vmem:[#allocation4 + $0x190] sm:$0xff]
    %v457 = vld [vmem:[#allocation4 + $0x198] sm:$0xff]
    %v458 = vld [vmem:[#allocation4 + $0x1a0] sm:$0xff]
    %v459 = vld [vmem:[#allocation4 + $0x1a8] sm:$0xff]
    %v460 = vld [vmem:[#allocation4 + $0x1b0] sm:$0xff]
    %v461 = vld [vmem:[#allocation4 + $0x1b8] sm:$0xff]
    %v462 = vld [vmem:[#allocation4 + $0x1c0] sm:$0xff]
    %v463 = vld [vmem:[#allocation4 + $0x1c8] sm:$0xff]
    %v464 = vld [vmem:[#allocation4 + $0x1d0] sm:$0xff]
    %v465 = vld [vmem:[#allocation4 + $0x1d8] sm:$0xff]
    %v466 = vld [vmem:[#allocation4 + $0x1e0] sm:$0xff]
    %v467 = vld [vmem:[#allocation4 + $0x1e8] sm:$0xff]
    %v468 = vld [vmem:[#allocation4 + $0x1f0] sm:$0xff]
    %v469 = vld [vmem:[#allocation4 + $0x1f8] sm:$0xff]
    %v470 = vld [vmem:[#allocation6] sm:$0xff]
    %v471 = vld [vmem:[#allocation6 + $0x8] sm:$0xff]
    %v472 = vld [vmem:[#allocation6 + $0x10] sm:$0xff]
    %v473 = vld [vmem:[#allocation6 + $0x18] sm:$0xff]
    %v474 = vld [vmem:[#allocation6 + $0x20] sm:$0xff]
    %v475 = vld [vmem:[#allocation6 + $0x28] sm:$0xff]
    %v476 = vld [vmem:[#allocation6 + $0x30] sm:$0xff]
    %v477 = vld [vmem:[#allocation6 + $0x38] sm:$0xff]
    %v478 = vld [vmem:[#allocation6 + $0x40] sm:$0xff]
    %v479 = vld [vmem:[#allocation6 + $0x48] sm:$0xff]
    %v480 = vld [vmem:[#allocation6 + $0x50] sm:$0xff]
    %v481 = vld [vmem:[#allocation6 + $0x58] sm:$0xff]
    %v482 = vld [vmem:[#allocation6 + $0x60] sm:$0xff]
    %v483 = vld [vmem:[#allocation6 + $0x68] sm:$0xff]
    %v484 = vld [vmem:[#allocation6 + $0x70] sm:$0xff]
    %v485 = vld [vmem:[#allocation6 + $0x78] sm:$0xff]
    %v486 = vld [vmem:[#allocation6 + $0x80] sm:$0xff]
    %v487 = vld [vmem:[#allocation6 + $0x88] sm:$0xff]
    %v488 = vld [vmem:[#allocation6 + $0x90] sm:$0xff]
    %v489 = vld [vmem:[#allocation6 + $0x98] sm:$0xff]
    %v490 = vld [vmem:[#allocation6 + $0xa0] sm:$0xff]
    %v491 = vld [vmem:[#allocation6 + $0xa8] sm:$0xff]
    %v492 = vld [vmem:[#allocation6 + $0xb0] sm:$0xff]
    %v493 = vld [vmem:[#allocation6 + $0xb8] sm:$0xff]
    %v494 = vld [vmem:[#allocation6 + $0xc0] sm:$0xff]
    %v495 = vld [vmem:[#allocation6 + $0xc8] sm:$0xff]
    %v496 = vld [vmem:[#allocation6 + $0xd0] sm:$0xff]
    %v497 = vld [vmem:[#allocation6 + $0xd8] sm:$0xff]
    %v498 = vld [vmem:[#allocation6 + $0xe0] sm:$0xff]
    %v499 = vld [vmem:[#allocation6 + $0xe8] sm:$0xff]
    %v500 = vld [vmem:[#allocation6 + $0xf0] sm:$0xff]
    %v501 = vld [vmem:[#allocation6 + $0xf8] sm:$0xff]
    %v502 = vld [vmem:[#allocation6 + $0x100] sm:$0xff]
    %v503 = vld [vmem:[#allocation6 + $0x108] sm:$0xff]
    %v504 = vld [vmem:[#allocation6 + $0x110] sm:$0xff]
    %v505 = vld [vmem:[#allocation6 + $0x118] sm:$0xff]
    %v506 = vld [vmem:[#allocation6 + $0x120] sm:$0xff]
    %v507 = vld [vmem:[#allocation6 + $0x128] sm:$0xff]
    %v508 = vld [vmem:[#allocation6 + $0x130] sm:$0xff]
    %v509 = vld [vmem:[#allocation6 + $0x138] sm:$0xff]
    %v510 = vld [vmem:[#allocation6 + $0x140] sm:$0xff]
    %v511 = vld [vmem:[#allocation6 + $0x148] sm:$0xff]
    %v512 = vld [vmem:[#allocation6 + $0x150] sm:$0xff]
    %v513 = vld [vmem:[#allocation6 + $0x158] sm:$0xff]
    %v514 = vld [vmem:[#allocation6 + $0x160] sm:$0xff]
    %v515 = vld [vmem:[#allocation6 + $0x168] sm:$0xff]
    %v516 = vld [vmem:[#allocation6 + $0x170] sm:$0xff]
    %v517 = vld [vmem:[#allocation6 + $0x178] sm:$0xff]
    %v518 = vld [vmem:[#allocation6 + $0x180] sm:$0xff]
    %v519 = vld [vmem:[#allocation6 + $0x188] sm:$0xff]
    %v520 = vld [vmem:[#allocation6 + $0x190] sm:$0xff]
    %v521 = vld [vmem:[#allocation6 + $0x198] sm:$0xff]
    %v522 = vld [vmem:[#allocation6 + $0x1a0] sm:$0xff]
    %v523 = vld [vmem:[#allocation6 + $0x1a8] sm:$0xff]
    %v524 = vld [vmem:[#allocation6 + $0x1b0] sm:$0xff]
    %v525 = vld [vmem:[#allocation6 + $0x1b8] sm:$0xff]
    %v526 = vld [vmem:[#allocation6 + $0x1c0] sm:$0xff]
    %v527 = vld [vmem:[#allocation6 + $0x1c8] sm:$0xff]
    %v528 = vld [vmem:[#allocation6 + $0x1d0] sm:$0xff]
    %v529 = vld [vmem:[#allocation6 + $0x1d8] sm:$0xff]
    %v530 = vld [vmem:[#allocation6 + $0x1e0] sm:$0xff]
    %v531 = vld [vmem:[#allocation6 + $0x1e8] sm:$0xff]
    %v532 = vld [vmem:[#allocation6 + $0x1f0] sm:$0xff]
    %v533 = vld [vmem:[#allocation6 + $0x1f8] sm:$0xff]
    %v534 = vld [vmem:[#allocation6 + $0x200] sm:$0xff]
    %v535 = vld [vmem:[#allocation6 + $0x208] sm:$0xff]
    %v536 = vld [vmem:[#allocation6 + $0x210] sm:$0xff]
    %v537 = vld [vmem:[#allocation6 + $0x218] sm:$0xff]
    %v538 = vld [vmem:[#allocation6 + $0x220] sm:$0xff]
    %v539 = vld [vmem:[#allocation6 + $0x228] sm:$0xff]
    %v540 = vld [vmem:[#allocation6 + $0x230] sm:$0xff]
    %v541 = vld [vmem:[#allocation6 + $0x238] sm:$0xff]
    %v542 = vld [vmem:[#allocation6 + $0x240] sm:$0xff]
    %v543 = vld [vmem:[#allocation6 + $0x248] sm:$0xff]
    %v544 = vld [vmem:[#allocation6 + $0x250] sm:$0xff]
    %v545 = vld [vmem:[#allocation6 + $0x258] sm:$0xff]
    %v546 = vld [vmem:[#allocation6 + $0x260] sm:$0xff]
    %v547 = vld [vmem:[#allocation6 + $0x268] sm:$0xff]
    %v548 = vld [vmem:[#allocation6 + $0x270] sm:$0xff]
    %v549 = vld [vmem:[#allocation6 + $0x278] sm:$0xff]
    %v550 = vld [vmem:[#allocation6 + $0x280] sm:$0xff]
    %v551 = vld [vmem:[#allocation6 + $0x288] sm:$0xff]
    %v552 = vld [vmem:[#allocation6 + $0x290] sm:$0xff]
    %v553 = vld [vmem:[#allocation6 + $0x298] sm:$0xff]
    %v554 = vld [vmem:[#allocation6 + $0x2a0] sm:$0xff]
    %v555 = vld [vmem:[#allocation6 + $0x2a8] sm:$0xff]
    %v556 = vld [vmem:[#allocation6 + $0x2b0] sm:$0xff]
    %v557 = vld [vmem:[#allocation6 + $0x2b8] sm:$0xff]
    %v558 = vld [vmem:[#allocation6 + $0x2c0] sm:$0xff]
    %v559 = vld [vmem:[#allocation6 + $0x2c8] sm:$0xff]
    %v560 = vld [vmem:[#allocation6 + $0x2d0] sm:$0xff]
    %v561 = vld [vmem:[#allocation6 + $0x2d8] sm:$0xff]
    %v562 = vld [vmem:[#allocation6 + $0x2e0] sm:$0xff]
    %v563 = vld [vmem:[#allocation6 + $0x2e8] sm:$0xff]
    %v564 = vld [vmem:[#allocation6 + $0x2f0] sm:$0xff]
    %v565 = vld [vmem:[#allocation6 + $0x2f8] sm:$0xff]
    %v566 = vld [vmem:[#allocation6 + $0x300] sm:$0xff]
    %v567 = vld [vmem:[#allocation6 + $0x308] sm:$0xff]
    %v568 = vld [vmem:[#allocation6 + $0x310] sm:$0xff]
    %v569 = vld [vmem:[#allocation6 + $0x318] sm:$0xff]
    %v570 = vld [vmem:[#allocation6 + $0x320] sm:$0xff]
    %v571 = vld [vmem:[#allocation6 + $0x328] sm:$0xff]
    %v572 = vld [vmem:[#allocation6 + $0x330] sm:$0xff]
    %v573 = vld [vmem:[#allocation6 + $0x338] sm:$0xff]
    %v574 = vld [vmem:[#allocation6 + $0x340] sm:$0xff]
    %v575 = vld [vmem:[#allocation6 + $0x348] sm:$0xff]
    %v576 = vld [vmem:[#allocation6 + $0x350] sm:$0xff]
    %v577 = vld [vmem:[#allocation6 + $0x358] sm:$0xff]
    %v578 = vld [vmem:[#allocation6 + $0x360] sm:$0xff]
    %v579 = vld [vmem:[#allocation6 + $0x368] sm:$0xff]
    %v580 = vld [vmem:[#allocation6 + $0x370] sm:$0xff]
    %v581 = vld [vmem:[#allocation6 + $0x378] sm:$0xff]
    %v582 = vld [vmem:[#allocation6 + $0x380] sm:$0xff]
    %v583 = vld [vmem:[#allocation6 + $0x388] sm:$0xff]
    %v584 = vld [vmem:[#allocation6 + $0x390] sm:$0xff]
    %v585 = vld [vmem:[#allocation6 + $0x398] sm:$0xff]
    %v586 = vld [vmem:[#allocation6 + $0x3a0] sm:$0xff]
    %v587 = vld [vmem:[#allocation6 + $0x3a8] sm:$0xff]
    %v588 = vld [vmem:[#allocation6 + $0x3b0] sm:$0xff]
    %v589 = vld [vmem:[#allocation6 + $0x3b8] sm:$0xff]
    %v590 = vld [vmem:[#allocation6 + $0x3c0] sm:$0xff]
    %v591 = vld [vmem:[#allocation6 + $0x3c8] sm:$0xff]
    %v592 = vld [vmem:[#allocation6 + $0x3d0] sm:$0xff]
    %v593 = vld [vmem:[#allocation6 + $0x3d8] sm:$0xff]
    %v594 = vld [vmem:[#allocation6 + $0x3e0] sm:$0xff]
    %v595 = vld [vmem:[#allocation6 + $0x3e8] sm:$0xff]
    %v596 = vld [vmem:[#allocation6 + $0x3f0] sm:$0xff]
    %v597 = vld [vmem:[#allocation6 + $0x3f8] sm:$0xff]
    %v598 = vld [vmem:[%s5] sm:$0xf]
    %v600 = vlaneseq
    %v601 = vshrl.u32 %v600, 7
    %v602 = vsub.s32 0, %v601
    %v603 = vrot.slane %v598, %v602
    %v604 = vlaneseq
    %v605 = vshrl.u32 %v604, 7
    %v606 = vsub.s32 1, %v605
    %v607 = vrot.slane %v598, %v606
    %v608 = vlaneseq
    %v609 = vshrl.u32 %v608, 7
    %v610 = vsub.s32 2, %v609
    %v611 = vrot.slane %v598, %v610
    %v612 = vlaneseq
    %v613 = vshrl.u32 %v612, 7
    %v614 = vsub.s32 3, %v613
    %v615 = vrot.slane %v598, %v614
    %v620 = vld [vmem:[#allocation2] sm:$0xff]
    %v621 = vld [vmem:[#allocation2 + $0x8] sm:$0xff]
    %v622 = vld [vmem:[#allocation2 + $0x10] sm:$0xff]
    %v623 = vld [vmem:[#allocation2 + $0x18] sm:$0xff]
    %624 = vmatprep.subr.mxu0 %v407
    %625 = vmatpush1.msra.mxu0 %v406
    %626 = vmatprep.subr.mxu0 %v411
    %627 = vmatpush1.msra.mxu0 %v410
    %628 = vmatprep.subr.mxu0 %v415
    %629 = vmatpush1.msra.mxu0 %v414
    %630 = vmatprep.subr.mxu0 %v419
    %631 = vmatpush1.msra.mxu0 %v418
    %632 = vmatprep.subr.mxu0 %v423
    %633 = vmatpush1.msra.mxu0 %v422
    %634 = vmatprep.subr.mxu0 %v427
    %635 = vmatpush1.msra.mxu0 %v426
    %636 = vmatprep.subr.mxu0 %v431
    %637 = vmatpush1.msra.mxu0 %v430
    %638 = vmatprep.subr.mxu0 %v435
    %639 = vmatpush1.msra.mxu0 %v434
    %640 = vmatprep.subr.mxu0 %v439
    %641 = vmatpush1.msra.mxu0 %v438
    %642 = vmatprep.subr.mxu0 %v443
    %643 = vmatpush1.msra.mxu0 %v442
    %644 = vmatprep.subr.mxu0 %v447
    %645 = vmatpush1.msra.mxu0 %v446
    %646 = vmatprep.subr.mxu0 %v451
    %647 = vmatpush1.msra.mxu0 %v450
    %648 = vmatprep.subr.mxu0 %v455
    %649 = vmatpush1.msra.mxu0 %v454
    %650 = vmatprep.subr.mxu0 %v459
    %651 = vmatpush1.msra.mxu0 %v458
    %652 = vmatprep.subr.mxu0 %v463
    %653 = vmatpush1.msra.mxu0 %v462
    %654 = vmatprep.subr.mxu0 %v467
    %655 = vmatpush1.msra.mxu0 %v466
    %656 = vmatprep.subr.mxu0 0.0
    %657 = vmatpush1.msra.mxu0 0.0
    %658 = vmatprep.subr.mxu0 0.0
    %659 = vmatpush1.msra.mxu0 0.0
    %660 = vmatprep.subr.mxu0 0.0
    %661 = vmatpush1.msra.mxu0 0.0
    %662 = vmatprep.subr.mxu0 0.0
    %663 = vmatpush1.msra.mxu0 0.0
    %664 = vmatprep.subr.mxu0 0.0
    %665 = vmatpush1.msra.mxu0 0.0
    %666 = vmatprep.subr.mxu0 0.0
    %667 = vmatpush1.msra.mxu0 0.0
    %668 = vmatprep.subr.mxu0 0.0
    %669 = vmatpush1.msra.mxu0 0.0
    %670 = vmatprep.subr.mxu0 0.0
    %671 = vmatpush1.msra.mxu0 0.0
    %672 = vmatprep.subr.mxu0 0.0
    %673 = vmatpush1.msra.mxu0 0.0
    %674 = vmatprep.subr.mxu0 0.0
    %675 = vmatpush1.msra.mxu0 0.0
    %676 = vmatprep.subr.mxu0 0.0
    %677 = vmatpush1.msra.mxu0 0.0
    %678 = vmatprep.subr.mxu0 0.0
    %679 = vmatpush1.msra.mxu0 0.0
    %680 = vmatprep.subr.mxu0 0.0
    %681 = vmatpush1.msra.mxu0 0.0
    %682 = vmatprep.subr.mxu0 0.0
    %683 = vmatpush1.msra.mxu0 0.0
    %684 = vmatprep.subr.mxu0 0.0
    %685 = vmatpush1.msra.mxu0 0.0
    %686 = vmatprep.subr.mxu0 0.0
    %687 = vmatpush1.msra.mxu0 0.0
    %688 = vmatprep.mubr.f32.mxu0 0.0
    %689 = vmatmul.mubr.f32.gmra.mrb[0].mxu0 0.0
    %v690 = vpop.f32.mrb[0].mxu0
    %v691 = vadd.f32 0.0, %v690
    %v692 = vpop.f32.mrb[0].mxu0
    %v693 = vadd.f32 0.0, %v692
    %694 = vdwg.mxu0
    %695 = vmatprep.subr.mxu0 %v409
    %696 = vmatpush1.msra.mxu0 %v408
    %697 = vmatprep.subr.mxu0 %v413
    %698 = vmatpush1.msra.mxu0 %v412
    %699 = vmatprep.subr.mxu0 %v417
    %700 = vmatpush1.msra.mxu0 %v416
    %701 = vmatprep.subr.mxu0 %v421
    %702 = vmatpush1.msra.mxu0 %v420
    %703 = vmatprep.subr.mxu0 %v425
    %704 = vmatpush1.msra.mxu0 %v424
    %705 = vmatprep.subr.mxu0 %v429
    %706 = vmatpush1.msra.mxu0 %v428
    %707 = vmatprep.subr.mxu0 %v433
    %708 = vmatpush1.msra.mxu0 %v432
    %709 = vmatprep.subr.mxu0 %v437
    %710 = vmatpush1.msra.mxu0 %v436
    %711 = vmatprep.subr.mxu0 %v441
    %712 = vmatpush1.msra.mxu0 %v440
    %713 = vmatprep.subr.mxu0 %v445
    %714 = vmatpush1.msra.mxu0 %v444
    %715 = vmatprep.subr.mxu0 %v449
    %716 = vmatpush1.msra.mxu0 %v448
    %717 = vmatprep.subr.mxu0 %v453
    %718 = vmatpush1.msra.mxu0 %v452
    %719 = vmatprep.subr.mxu0 %v457
    %720 = vmatpush1.msra.mxu0 %v456
    %721 = vmatprep.subr.mxu0 %v461
    %722 = vmatpush1.msra.mxu0 %v460
    %723 = vmatprep.subr.mxu0 %v465
    %724 = vmatpush1.msra.mxu0 %v464
    %725 = vmatprep.subr.mxu0 %v469
    %726 = vmatpush1.msra.mxu0 %v468
    %727 = vmatprep.subr.mxu0 0.0
    %728 = vmatpush1.msra.mxu0 0.0
    %729 = vmatprep.subr.mxu0 0.0
    %730 = vmatpush1.msra.mxu0 0.0
    %731 = vmatprep.subr.mxu0 0.0
    %732 = vmatpush1.msra.mxu0 0.0
    %733 = vmatprep.subr.mxu0 0.0
    %734 = vmatpush1.msra.mxu0 0.0
    %735 = vmatprep.subr.mxu0 0.0
    %736 = vmatpush1.msra.mxu0 0.0
    %737 = vmatprep.subr.mxu0 0.0
    %738 = vmatpush1.msra.mxu0 0.0
    %739 = vmatprep.subr.mxu0 0.0
    %740 = vmatpush1.msra.mxu0 0.0
    %741 = vmatprep.subr.mxu0 0.0
    %742 = vmatpush1.msra.mxu0 0.0
    %743 = vmatprep.subr.mxu0 0.0
    %744 = vmatpush1.msra.mxu0 0.0
    %745 = vmatprep.subr.mxu0 0.0
    %746 = vmatpush1.msra.mxu0 0.0
    %747 = vmatprep.subr.mxu0 0.0
    %748 = vmatpush1.msra.mxu0 0.0
    %749 = vmatprep.subr.mxu0 0.0
    %750 = vmatpush1.msra.mxu0 0.0
    %751 = vmatprep.subr.mxu0 0.0
    %752 = vmatpush1.msra.mxu0 0.0
    %753 = vmatprep.subr.mxu0 0.0
    %754 = vmatpush1.msra.mxu0 0.0
    %755 = vmatprep.subr.mxu0 0.0
    %756 = vmatpush1.msra.mxu0 0.0
    %757 = vmatprep.subr.mxu0 0.0
    %758 = vmatpush1.msra.mxu0 0.0
    %759 = vmatprep.mubr.f32.mxu0 0.0
    %760 = vmatmul.mubr.f32.gmra.mrb[0].mxu0 0.0
    %v761 = vpop.f32.mrb[0].mxu0
    %v762 = vadd.f32 0.0, %v761
    %v763 = vpop.f32.mrb[0].mxu0
    %v764 = vadd.f32 0.0, %v763
    %765 = vdwg.mxu0
    %v766 = vadd.f32 %v620, %v691
    %v767 = vadd.f32 %v621, %v693
    %v768 = vadd.f32 %v622, %v762
    %v769 = vadd.f32 %v623, %v764
    %v770 = vxor.u32 %v766, 2147483648
    %v771 = vmul.f32 %v770, 1.442695
    %v772 = vpow.pop %v771
    %v773 = vadd.f32 %v772, 1.0
    %v774 = vrcp.pop %v773
    %v775 = vmul.f32 1.0, %v774
    %v776 = vxor.u32 %v767, 2147483648
    %v777 = vmul.f32 %v776, 1.442695
    %v778 = vpow.pop %v777
    %v779 = vadd.f32 %v778, 1.0
    %v780 = vrcp.pop %v779
    %v781 = vmul.f32 1.0, %v780
    %v782 = vtanh.pop %v768
    %v783 = vxor.u32 %v769, 2147483648
    %v784 = vmul.f32 %v783, 1.442695
    %v785 = vpow.pop %v784
    %v786 = vadd.f32 %v785, 1.0
    %v787 = vrcp.pop %v786
    %v788 = vmul.f32 1.0, %v787
    %v789 = vmul.f32 %v781, 0.0
    %v790 = vmul.f32 %v775, %v782
    %v791 = vadd.f32 %v789, %v790
    %v792 = vtanh.pop %v791
    %v793 = vmul.f32 %v788, %v792
    %794 = vmatprep.subr.mxu0 %v471
    %795 = vmatpush1.msra.mxu0 %v470
    %796 = vmatprep.subr.mxu0 %v475
    %797 = vmatpush1.msra.mxu0 %v474
    %798 = vmatprep.subr.mxu0 %v479
    %799 = vmatpush1.msra.mxu0 %v478
    %800 = vmatprep.subr.mxu0 %v483
    %801 = vmatpush1.msra.mxu0 %v482
    %802 = vmatprep.subr.mxu0 %v487
    %803 = vmatpush1.msra.mxu0 %v486
    %804 = vmatprep.subr.mxu0 %v491
    %805 = vmatpush1.msra.mxu0 %v490
    %806 = vmatprep.subr.mxu0 %v495
    %807 = vmatpush1.msra.mxu0 %v494
    %808 = vmatprep.subr.mxu0 %v499
    %809 = vmatpush1.msra.mxu0 %v498
    %810 = vmatprep.subr.mxu0 %v503
    %811 = vmatpush1.msra.mxu0 %v502
    %812 = vmatprep.subr.mxu0 %v507
    %813 = vmatpush1.msra.mxu0 %v506
    %814 = vmatprep.subr.mxu0 %v511
    %815 = vmatpush1.msra.mxu0 %v510
    %816 = vmatprep.subr.mxu0 %v515
    %817 = vmatpush1.msra.mxu0 %v514
    %818 = vmatprep.subr.mxu0 %v519
    %819 = vmatpush1.msra.mxu0 %v518
    %820 = vmatprep.subr.mxu0 %v523
    %821 = vmatpush1.msra.mxu0 %v522
    %822 = vmatprep.subr.mxu0 %v527
    %823 = vmatpush1.msra.mxu0 %v526
    %824 = vmatprep.subr.mxu0 %v531
    %825 = vmatpush1.msra.mxu0 %v530
    %826 = vmatprep.subr.mxu0 %v535
    %827 = vmatpush1.msra.mxu0 %v534
    %828 = vmatprep.subr.mxu0 %v539
    %829 = vmatpush1.msra.mxu0 %v538
    %830 = vmatprep.subr.mxu0 %v543
    %831 = vmatpush1.msra.mxu0 %v542
    %832 = vmatprep.subr.mxu0 %v547
    %833 = vmatpush1.msra.mxu0 %v546
    %834 = vmatprep.subr.mxu0 %v551
    %835 = vmatpush1.msra.mxu0 %v550
    %836 = vmatprep.subr.mxu0 %v555
    %837 = vmatpush1.msra.mxu0 %v554
    %838 = vmatprep.subr.mxu0 %v559
    %839 = vmatpush1.msra.mxu0 %v558
    %840 = vmatprep.subr.mxu0 %v563
    %841 = vmatpush1.msra.mxu0 %v562
    %842 = vmatprep.subr.mxu0 %v567
    %843 = vmatpush1.msra.mxu0 %v566
    %844 = vmatprep.subr.mxu0 %v571
    %845 = vmatpush1.msra.mxu0 %v570
    %846 = vmatprep.subr.mxu0 %v575
    %847 = vmatpush1.msra.mxu0 %v574
    %848 = vmatprep.subr.mxu0 %v579
    %849 = vmatpush1.msra.mxu0 %v578
    %850 = vmatprep.subr.mxu0 %v583
    %851 = vmatpush1.msra.mxu0 %v582
    %852 = vmatprep.subr.mxu0 %v587
    %853 = vmatpush1.msra.mxu0 %v586
    %854 = vmatprep.subr.mxu0 %v591
    %855 = vmatpush1.msra.mxu0 %v590
    %856 = vmatprep.subr.mxu0 %v595
    %857 = vmatpush1.msra.mxu0 %v594
    %858 = vmatprep.mubr.f32.mxu0 0.0
    %859 = vmatmul.mubr.f32.gmra.mrb[0].mxu0 %v793
    %v860 = vpop.f32.mrb[0].mxu0
    %v861 = vadd.f32 %v603, %v860
    %v862 = vpop.f32.mrb[0].mxu0
    %v863 = vadd.f32 %v607, %v862
    %864 = vdwg.mxu0
    %865 = vmatprep.subr.mxu0 %v473
    %866 = vmatpush1.msra.mxu0 %v472
    %867 = vmatprep.subr.mxu0 %v477
    %868 = vmatpush1.msra.mxu0 %v476
    %869 = vmatprep.subr.mxu0 %v481
    %870 = vmatpush1.msra.mxu0 %v480
    %871 = vmatprep.subr.mxu0 %v485
    %872 = vmatpush1.msra.mxu0 %v484
    %873 = vmatprep.subr.mxu0 %v489
    %874 = vmatpush1.msra.mxu0 %v488
    %875 = vmatprep.subr.mxu0 %v493
    %876 = vmatpush1.msra.mxu0 %v492
    %877 = vmatprep.subr.mxu0 %v497
    %878 = vmatpush1.msra.mxu0 %v496
    %879 = vmatprep.subr.mxu0 %v501
    %880 = vmatpush1.msra.mxu0 %v500
    %881 = vmatprep.subr.mxu0 %v505
    %882 = vmatpush1.msra.mxu0 %v504
    %883 = vmatprep.subr.mxu0 %v509
    %884 = vmatpush1.msra.mxu0 %v508
    %885 = vmatprep.subr.mxu0 %v513
    %886 = vmatpush1.msra.mxu0 %v512
    %887 = vmatprep.subr.mxu0 %v517
    %888 = vmatpush1.msra.mxu0 %v516
    %889 = vmatprep.subr.mxu0 %v521
    %890 = vmatpush1.msra.mxu0 %v520
    %891 = vmatprep.subr.mxu0 %v525
    %892 = vmatpush1.msra.mxu0 %v524
    %893 = vmatprep.subr.mxu0 %v529
    %894 = vmatpush1.msra.mxu0 %v528
    %895 = vmatprep.subr.mxu0 %v533
    %896 = vmatpush1.msra.mxu0 %v532
    %897 = vmatprep.subr.mxu0 %v537
    %898 = vmatpush1.msra.mxu0 %v536
    %899 = vmatprep.subr.mxu0 %v541
    %900 = vmatpush1.msra.mxu0 %v540
    %901 = vmatprep.subr.mxu0 %v545
    %902 = vmatpush1.msra.mxu0 %v544
    %903 = vmatprep.subr.mxu0 %v549
    %904 = vmatpush1.msra.mxu0 %v548
    %905 = vmatprep.subr.mxu0 %v553
    %906 = vmatpush1.msra.mxu0 %v552
    %907 = vmatprep.subr.mxu0 %v557
    %908 = vmatpush1.msra.mxu0 %v556
    %909 = vmatprep.subr.mxu0 %v561
    %910 = vmatpush1.msra.mxu0 %v560
    %911 = vmatprep.subr.mxu0 %v565
    %912 = vmatpush1.msra.mxu0 %v564
    %913 = vmatprep.subr.mxu0 %v569
    %914 = vmatpush1.msra.mxu0 %v568
    %915 = vmatprep.subr.mxu0 %v573
    %916 = vmatpush1.msra.mxu0 %v572
    %917 = vmatprep.subr.mxu0 %v577
    %918 = vmatpush1.msra.mxu0 %v576
    %919 = vmatprep.subr.mxu0 %v581
    %920 = vmatpush1.msra.mxu0 %v580
    %921 = vmatprep.subr.mxu0 %v585
    %922 = vmatpush1.msra.mxu0 %v584
    %923 = vmatprep.subr.mxu0 %v589
    %924 = vmatpush1.msra.mxu0 %v588
    %925 = vmatprep.subr.mxu0 %v593
    %926 = vmatpush1.msra.mxu0 %v592
    %927 = vmatprep.subr.mxu0 %v597
    %928 = vmatpush1.msra.mxu0 %v596
    %929 = vmatprep.mubr.f32.mxu0 0.0
    %930 = vmatmul.mubr.f32.gmra.mrb[0].mxu0 %v793
    %v931 = vpop.f32.mrb[0].mxu0
    %v932 = vadd.f32 %v611, %v931
    %v933 = vpop.f32.mrb[0].mxu0
    %v934 = vadd.f32 %v615, %v933
    %935 = vdwg.mxu0
    %v936 = vxor.u32 %v861, 2147483648
    %v937 = vmul.f32 %v936, 1.442695
    %v938 = vpow.pop %v937
    %v939 = vadd.f32 %v938, 1.0
    %v940 = vrcp.pop %v939
    %v941 = vmul.f32 1.0, %v940
    %v942 = vxor.u32 %v863, 2147483648
    %v943 = vmul.f32 %v942, 1.442695
    %v944 = vpow.pop %v943
    %v945 = vadd.f32 %v944, 1.0
    %v946 = vrcp.pop %v945
    %v947 = vmul.f32 1.0, %v946
    %v948 = vtanh.pop %v932
    %v949 = vxor.u32 %v934, 2147483648
    %v950 = vmul.f32 %v949, 1.442695
    %v951 = vpow.pop %v950
    %v952 = vadd.f32 %v951, 1.0
    %v953 = vrcp.pop %v952
    %v954 = vmul.f32 1.0, %v953
    %v955 = vmul.f32 %v947, 0.0
    %v956 = vmul.f32 %v941, %v948
    %v957 = vadd.f32 %v955, %v956
    %v958 = vtanh.pop %v957
    %v959 = vmul.f32 %v954, %v958
    %s960 = scalar_lea.vmem [#allocation2], 32
    %v961 = vld [vmem:[%s960] sm:$0xff]
    %v962 = vld [vmem:[%s960 + $0x8] sm:$0xff]
    %v963 = vld [vmem:[%s960 + $0x10] sm:$0xff]
    %v964 = vld [vmem:[%s960 + $0x18] sm:$0xff]
    %965 = vmatprep.subr.mxu0 %v407
    %966 = vmatpush1.msra.mxu0 %v406
    %967 = vmatprep.subr.mxu0 %v411
    %968 = vmatpush1.msra.mxu0 %v410
    %969 = vmatprep.subr.mxu0 %v415
    %970 = vmatpush1.msra.mxu0 %v414
    %971 = vmatprep.subr.mxu0 %v419
    %972 = vmatpush1.msra.mxu0 %v418
    %973 = vmatprep.subr.mxu0 %v423
    %974 = vmatpush1.msra.mxu0 %v422
    %975 = vmatprep.subr.mxu0 %v427
    %976 = vmatpush1.msra.mxu0 %v426
    %977 = vmatprep.subr.mxu0 %v431
    %978 = vmatpush1.msra.mxu0 %v430
    %979 = vmatprep.subr.mxu0 %v435
    %980 = vmatpush1.msra.mxu0 %v434
    %981 = vmatprep.subr.mxu0 %v439
    %982 = vmatpush1.msra.mxu0 %v438
    %983 = vmatprep.subr.mxu0 %v443
    %984 = vmatpush1.msra.mxu0 %v442
    %985 = vmatprep.subr.mxu0 %v447
    %986 = vmatpush1.msra.mxu0 %v446
    %987 = vmatprep.subr.mxu0 %v451
    %988 = vmatpush1.msra.mxu0 %v450
    %989 = vmatprep.subr.mxu0 %v455
    %990 = vmatpush1.msra.mxu0 %v454
    %991 = vmatprep.subr.mxu0 %v459
    %992 = vmatpush1.msra.mxu0 %v458
    %993 = vmatprep.subr.mxu0 %v463
    %994 = vmatpush1.msra.mxu0 %v462
    %995 = vmatprep.subr.mxu0 %v467
    %996 = vmatpush1.msra.mxu0 %v466
    %997 = vmatprep.subr.mxu0 0.0
    %998 = vmatpush1.msra.mxu0 0.0
    %999 = vmatprep.subr.mxu0 0.0
    %1000 = vmatpush1.msra.mxu0 0.0
    %1001 = vmatprep.subr.mxu0 0.0
    %1002 = vmatpush1.msra.mxu0 0.0
    %1003 = vmatprep.subr.mxu0 0.0
    %1004 = vmatpush1.msra.mxu0 0.0
    %1005 = vmatprep.subr.mxu0 0.0
    %1006 = vmatpush1.msra.mxu0 0.0
    %1007 = vmatprep.subr.mxu0 0.0
    %1008 = vmatpush1.msra.mxu0 0.0
    %1009 = vmatprep.subr.mxu0 0.0
    %1010 = vmatpush1.msra.mxu0 0.0
    %1011 = vmatprep.subr.mxu0 0.0
    %1012 = vmatpush1.msra.mxu0 0.0
    %1013 = vmatprep.subr.mxu0 0.0
    %1014 = vmatpush1.msra.mxu0 0.0
    %1015 = vmatprep.subr.mxu0 0.0
    %1016 = vmatpush1.msra.mxu0 0.0
    %1017 = vmatprep.subr.mxu0 0.0
    %1018 = vmatpush1.msra.mxu0 0.0
    %1019 = vmatprep.subr.mxu0 0.0
    %1020 = vmatpush1.msra.mxu0 0.0
    %1021 = vmatprep.subr.mxu0 0.0
    %1022 = vmatpush1.msra.mxu0 0.0
    %1023 = vmatprep.subr.mxu0 0.0
    %1024 = vmatpush1.msra.mxu0 0.0
    %1025 = vmatprep.subr.mxu0 0.0
    %1026 = vmatpush1.msra.mxu0 0.0
    %1027 = vmatprep.subr.mxu0 0.0
    %1028 = vmatpush1.msra.mxu0 0.0
    %1029 = vmatprep.mubr.f32.mxu0 0.0
    %1030 = vmatmul.mubr.f32.gmra.mrb[0].mxu0 %v793
    %v1031 = vpop.f32.mrb[0].mxu0
    %v1032 = vadd.f32 0.0, %v1031
    %v1033 = vpop.f32.mrb[0].mxu0
    %v1034 = vadd.f32 0.0, %v1033
    %1035 = vdwg.mxu0
    %1036 = vmatprep.subr.mxu0 %v409
    %1037 = vmatpush1.msra.mxu0 %v408
    %1038 = vmatprep.subr.mxu0 %v413
    %1039 = vmatpush1.msra.mxu0 %v412
    %1040 = vmatprep.subr.mxu0 %v417
    %1041 = vmatpush1.msra.mxu0 %v416
    %1042 = vmatprep.subr.mxu0 %v421
    %1043 = vmatpush1.msra.mxu0 %v420
    %1044 = vmatprep.subr.mxu0 %v425
    %1045 = vmatpush1.msra.mxu0 %v424
    %1046 = vmatprep.subr.mxu0 %v429
    %1047 = vmatpush1.msra.mxu0 %v428
    %1048 = vmatprep.subr.mxu0 %v433
    %1049 = vmatpush1.msra.mxu0 %v432
    %1050 = vmatprep.subr.mxu0 %v437
    %1051 = vmatpush1.msra.mxu0 %v436
    %1052 = vmatprep.subr.mxu0 %v441
    %1053 = vmatpush1.msra.mxu0 %v440
    %1054 = vmatprep.subr.mxu0 %v445
    %1055 = vmatpush1.msra.mxu0 %v444
    %1056 = vmatprep.subr.mxu0 %v449
    %1057 = vmatpush1.msra.mxu0 %v448
    %1058 = vmatprep.subr.mxu0 %v453
    %1059 = vmatpush1.msra.mxu0 %v452
    %1060 = vmatprep.subr.mxu0 %v457
    %1061 = vmatpush1.msra.mxu0 %v456
    %1062 = vmatprep.subr.mxu0 %v461
    %1063 = vmatpush1.msra.mxu0 %v460
    %1064 = vmatprep.subr.mxu0 %v465
    %1065 = vmatpush1.msra.mxu0 %v464
    %1066 = vmatprep.subr.mxu0 %v469
    %1067 = vmatpush1.msra.mxu0 %v468
    %1068 = vmatprep.subr.mxu0 0.0
    %1069 = vmatpush1.msra.mxu0 0.0
    %1070 = vmatprep.subr.mxu0 0.0
    %1071 = vmatpush1.msra.mxu0 0.0
    %1072 = vmatprep.subr.mxu0 0.0
    %1073 = vmatpush1.msra.mxu0 0.0
    %1074 = vmatprep.subr.mxu0 0.0
    %1075 = vmatpush1.msra.mxu0 0.0
    %1076 = vmatprep.subr.mxu0 0.0
    %1077 = vmatpush1.msra.mxu0 0.0
    %1078 = vmatprep.subr.mxu0 0.0
    %1079 = vmatpush1.msra.mxu0 0.0
    %1080 = vmatprep.subr.mxu0 0.0
    %1081 = vmatpush1.msra.mxu0 0.0
    %1082 = vmatprep.subr.mxu0 0.0
    %1083 = vmatpush1.msra.mxu0 0.0
    %1084 = vmatprep.subr.mxu0 0.0
    %1085 = vmatpush1.msra.mxu0 0.0
    %1086 = vmatprep.subr.mxu0 0.0
    %1087 = vmatpush1.msra.mxu0 0.0
    %1088 = vmatprep.subr.mxu0 0.0
    %1089 = vmatpush1.msra.mxu0 0.0
    %1090 = vmatprep.subr.mxu0 0.0
    %1091 = vmatpush1.msra.mxu0 0.0
    %1092 = vmatprep.subr.mxu0 0.0
    %1093 = vmatpush1.msra.mxu0 0.0
    %1094 = vmatprep.subr.mxu0 0.0
    %1095 = vmatpush1.msra.mxu0 0.0
    %1096 = vmatprep.subr.mxu0 0.0
    %1097 = vmatpush1.msra.mxu0 0.0
    %1098 = vmatprep.subr.mxu0 0.0
    %1099 = vmatpush1.msra.mxu0 0.0
    %1100 = vmatprep.mubr.f32.mxu0 0.0
    %1101 = vmatmul.mubr.f32.gmra.mrb[0].mxu0 %v793
    %v1102 = vpop.f32.mrb[0].mxu0
    %v1103 = vadd.f32 0.0, %v1102
    %v1104 = vpop.f32.mrb[0].mxu0
    %v1105 = vadd.f32 0.0, %v1104
    %1106 = vdwg.mxu0
    %v1107 = vadd.f32 %v961, %v1032
    %v1108 = vadd.f32 %v962, %v1034
    %v1109 = vadd.f32 %v963, %v1103
    %v1110 = vadd.f32 %v964, %v1105
    %v1111 = vxor.u32 %v1107, 2147483648
    %v1112 = vmul.f32 %v1111, 1.442695
    %v1113 = vpow.pop %v1112
    %v1114 = vadd.f32 %v1113, 1.0
    %v1115 = vrcp.pop %v1114
    %v1116 = vmul.f32 1.0, %v1115
    %v1117 = vxor.u32 %v1108, 2147483648
    %v1118 = vmul.f32 %v1117, 1.442695
    %v1119 = vpow.pop %v1118
    %v1120 = vadd.f32 %v1119, 1.0
    %v1121 = vrcp.pop %v1120
    %v1122 = vmul.f32 1.0, %v1121
    %v1123 = vtanh.pop %v1109
    %v1124 = vxor.u32 %v1110, 2147483648
    %v1125 = vmul.f32 %v1124, 1.442695
    %v1126 = vpow.pop %v1125
    %v1127 = vadd.f32 %v1126, 1.0
    %v1128 = vrcp.pop %v1127
    %v1129 = vmul.f32 1.0, %v1128
    %v1130 = vmul.f32 %v1122, %v791
    %v1131 = vmul.f32 %v1116, %v1123
    %v1132 = vadd.f32 %v1130, %v1131
    %v1133 = vtanh.pop %v1132
    %v1134 = vmul.f32 %v1129, %v1133
    %1135 = vmatprep.subr.mxu0 %v471
    %1136 = vmatpush1.msra.mxu0 %v470
    %1137 = vmatprep.subr.mxu0 %v475
    %1138 = vmatpush1.msra.mxu0 %v474
    %1139 = vmatprep.subr.mxu0 %v479
    %1140 = vmatpush1.msra.mxu0 %v478
    %1141 = vmatprep.subr.mxu0 %v483
    %1142 = vmatpush1.msra.mxu0 %v482
    %1143 = vmatprep.subr.mxu0 %v487
    %1144 = vmatpush1.msra.mxu0 %v486
    %1145 = vmatprep.subr.mxu0 %v491
    %1146 = vmatpush1.msra.mxu0 %v490
    %1147 = vmatprep.subr.mxu0 %v495
    %1148 = vmatpush1.msra.mxu0 %v494
    %1149 = vmatprep.subr.mxu0 %v499
    %1150 = vmatpush1.msra.mxu0 %v498
    %1151 = vmatprep.subr.mxu0 %v503
    %1152 = vmatpush1.msra.mxu0 %v502
    %1153 = vmatprep.subr.mxu0 %v507
    %1154 = vmatpush1.msra.mxu0 %v506
    %1155 = vmatprep.subr.mxu0 %v511
    %1156 = vmatpush1.msra.mxu0 %v510
    %1157 = vmatprep.subr.mxu0 %v515
    %1158 = vmatpush1.msra.mxu0 %v514
    %1159 = vmatprep.subr.mxu0 %v519
    %1160 = vmatpush1.msra.mxu0 %v518
    %1161 = vmatprep.subr.mxu0 %v523
    %1162 = vmatpush1.msra.mxu0 %v522
    %1163 = vmatprep.subr.mxu0 %v527
    %1164 = vmatpush1.msra.mxu0 %v526
    %1165 = vmatprep.subr.mxu0 %v531
    %1166 = vmatpush1.msra.mxu0 %v530
    %1167 = vmatprep.subr.mxu0 %v535
    %1168 = vmatpush1.msra.mxu0 %v534
    %1169 = vmatprep.subr.mxu0 %v539
    %1170 = vmatpush1.msra.mxu0 %v538
    %1171 = vmatprep.subr.mxu0 %v543
    %1172 = vmatpush1.msra.mxu0 %v542
    %1173 = vmatprep.subr.mxu0 %v547
    %1174 = vmatpush1.msra.mxu0 %v546
    %1175 = vmatprep.subr.mxu0 %v551
    %1176 = vmatpush1.msra.mxu0 %v550
    %1177 = vmatprep.subr.mxu0 %v555
    %1178 = vmatpush1.msra.mxu0 %v554
    %1179 = vmatprep.subr.mxu0 %v559
    %1180 = vmatpush1.msra.mxu0 %v558
    %1181 = vmatprep.subr.mxu0 %v563
    %1182 = vmatpush1.msra.mxu0 %v562
    %1183 = vmatprep.subr.mxu0 %v567
    %1184 = vmatpush1.msra.mxu0 %v566
    %1185 = vmatprep.subr.mxu0 %v571
    %1186 = vmatpush1.msra.mxu0 %v570
    %1187 = vmatprep.subr.mxu0 %v575
    %1188 = vmatpush1.msra.mxu0 %v574
    %1189 = vmatprep.subr.mxu0 %v579
    %1190 = vmatpush1.msra.mxu0 %v578
    %1191 = vmatprep.subr.mxu0 %v583
    %1192 = vmatpush1.msra.mxu0 %v582
    %1193 = vmatprep.subr.mxu0 %v587
    %1194 = vmatpush1.msra.mxu0 %v586
    %1195 = vmatprep.subr.mxu0 %v591
    %1196 = vmatpush1.msra.mxu0 %v590
    %1197 = vmatprep.subr.mxu0 %v595
    %1198 = vmatpush1.msra.mxu0 %v594
    %1199 = vmatprep.mubr.f32.mxu0 %v959
    %1200 = vmatmul.mubr.f32.gmra.mrb[0].mxu0 %v1134
    %v1201 = vpop.f32.mrb[0].mxu0
    %v1202 = vadd.f32 %v603, %v1201
    %v1203 = vpop.f32.mrb[0].mxu0
    %v1204 = vadd.f32 %v607, %v1203
    %1205 = vdwg.mxu0
    %1206 = vmatprep.subr.mxu0 %v473
    %1207 = vmatpush1.msra.mxu0 %v472
    %1208 = vmatprep.subr.mxu0 %v477
    %1209 = vmatpush1.msra.mxu0 %v476
    %1210 = vmatprep.subr.mxu0 %v481
    %1211 = vmatpush1.msra.mxu0 %v480
    %1212 = vmatprep.subr.mxu0 %v485
    %1213 = vmatpush1.msra.mxu0 %v484
    %1214 = vmatprep.subr.mxu0 %v489
    %1215 = vmatpush1.msra.mxu0 %v488
    %1216 = vmatprep.subr.mxu0 %v493
    %1217 = vmatpush1.msra.mxu0 %v492
    %1218 = vmatprep.subr.mxu0 %v497
    %1219 = vmatpush1.msra.mxu0 %v496
    %1220 = vmatprep.subr.mxu0 %v501
    %1221 = vmatpush1.msra.mxu0 %v500
    %1222 = vmatprep.subr.mxu0 %v505
    %1223 = vmatpush1.msra.mxu0 %v504
    %1224 = vmatprep.subr.mxu0 %v509
    %1225 = vmatpush1.msra.mxu0 %v508
    %1226 = vmatprep.subr.mxu0 %v513
    %1227 = vmatpush1.msra.mxu0 %v512
    %1228 = vmatprep.subr.mxu0 %v517
    %1229 = vmatpush1.msra.mxu0 %v516
    %1230 = vmatprep.subr.mxu0 %v521
    %1231 = vmatpush1.msra.mxu0 %v520
    %1232 = vmatprep.subr.mxu0 %v525
    %1233 = vmatpush1.msra.mxu0 %v524
    %1234 = vmatprep.subr.mxu0 %v529
    %1235 = vmatpush1.msra.mxu0 %v528
    %1236 = vmatprep.subr.mxu0 %v533
    %1237 = vmatpush1.msra.mxu0 %v532
    %1238 = vmatprep.subr.mxu0 %v537
    %1239 = vmatpush1.msra.mxu0 %v536
    %1240 = vmatprep.subr.mxu0 %v541
    %1241 = vmatpush1.msra.mxu0 %v540
    %1242 = vmatprep.subr.mxu0 %v545
    %1243 = vmatpush1.msra.mxu0 %v544
    %1244 = vmatprep.subr.mxu0 %v549
    %1245 = vmatpush1.msra.mxu0 %v548
    %1246 = vmatprep.subr.mxu0 %v553
    %1247 = vmatpush1.msra.mxu0 %v552
    %1248 = vmatprep.subr.mxu0 %v557
    %1249 = vmatpush1.msra.mxu0 %v556
    %1250 = vmatprep.subr.mxu0 %v561
    %1251 = vmatpush1.msra.mxu0 %v560
    %1252 = vmatprep.subr.mxu0 %v565
    %1253 = vmatpush1.msra.mxu0 %v564
    %1254 = vmatprep.subr.mxu0 %v569
    %1255 = vmatpush1.msra.mxu0 %v568
    %1256 = vmatprep.subr.mxu0 %v573
    %1257 = vmatpush1.msra.mxu0 %v572
    %1258 = vmatprep.subr.mxu0 %v577
    %1259 = vmatpush1.msra.mxu0 %v576
    %1260 = vmatprep.subr.mxu0 %v581
    %1261 = vmatpush1.msra.mxu0 %v580
    %1262 = vmatprep.subr.mxu0 %v585
    %1263 = vmatpush1.msra.mxu0 %v584
    %1264 = vmatprep.subr.mxu0 %v589
    %1265 = vmatpush1.msra.mxu0 %v588
    %1266 = vmatprep.subr.mxu0 %v593
    %1267 = vmatpush1.msra.mxu0 %v592
    %1268 = vmatprep.subr.mxu0 %v597
    %1269 = vmatpush1.msra.mxu0 %v596
    %1270 = vmatprep.mubr.f32.mxu0 %v959
    %1271 = vmatmul.mubr.f32.gmra.mrb[0].mxu0 %v1134
    %v1272 = vpop.f32.mrb[0].mxu0
    %v1273 = vadd.f32 %v611, %v1272
    %v1274 = vpop.f32.mrb[0].mxu0
    %v1275 = vadd.f32 %v615, %v1274
    %1276 = vdwg.mxu0
    %v1277 = vxor.u32 %v1202, 2147483648
    %v1278 = vmul.f32 %v1277, 1.442695
    %v1279 = vpow.pop %v1278
    %v1280 = vadd.f32 %v1279, 1.0
    %v1281 = vrcp.pop %v1280
    %v1282 = vmul.f32 1.0, %v1281
    %v1283 = vxor.u32 %v1204, 2147483648
    %v1284 = vmul.f32 %v1283, 1.442695
    %v1285 = vpow.pop %v1284
    %v1286 = vadd.f32 %v1285, 1.0
    %v1287 = vrcp.pop %v1286
    %v1288 = vmul.f32 1.0, %v1287
    %v1289 = vtanh.pop %v1273
    %v1290 = vxor.u32 %v1275, 2147483648
    %v1291 = vmul.f32 %v1290, 1.442695
    %v1292 = vpow.pop %v1291
    %v1293 = vadd.f32 %v1292, 1.0
    %v1294 = vrcp.pop %v1293
    %v1295 = vmul.f32 1.0, %v1294
    %v1296 = vmul.f32 %v1288, %v957
    %v1297 = vmul.f32 %v1282, %v1289
    %v1298 = vadd.f32 %v1296, %v1297
    %v1299 = vtanh.pop %v1298
    %v1300 = vmul.f32 %v1295, %v1299
    %s1301 = scalar_lea.vmem [#allocation2], 64
    %v1302 = vld [vmem:[%s1301] sm:$0xff]
    %v1303 = vld [vmem:[%s1301 + $0x8] sm:$0xff]
    %v1304 = vld [vmem:[%s1301 + $0x10] sm:$0xff]
    %v1305 = vld [vmem:[%s1301 + $0x18] sm:$0xff]
    %1306 = vmatprep.subr.mxu0 %v407
    %1307 = vmatpush1.msra.mxu0 %v406
    %1308 = vmatprep.subr.mxu0 %v411
    %1309 = vmatpush1.msra.mxu0 %v410
    %1310 = vmatprep.subr.mxu0 %v415
    %1311 = vmatpush1.msra.mxu0 %v414
    %1312 = vmatprep.subr.mxu0 %v419
    %1313 = vmatpush1.msra.mxu0 %v418
    %1314 = vmatprep.subr.mxu0 %v423
    %1315 = vmatpush1.msra.mxu0 %v422
    %1316 = vmatprep.subr.mxu0 %v427
    %1317 = vmatpush1.msra.mxu0 %v426
    %1318 = vmatprep.subr.mxu0 %v431
    %1319 = vmatpush1.msra.mxu0 %v430
    %1320 = vmatprep.subr.mxu0 %v435
    %1321 = vmatpush1.msra.mxu0 %v434
    %1322 = vmatprep.subr.mxu0 %v439
    %1323 = vmatpush1.msra.mxu0 %v438
    %1324 = vmatprep.subr.mxu0 %v443
    %1325 = vmatpush1.msra.mxu0 %v442
    %1326 = vmatprep.subr.mxu0 %v447
    %1327 = vmatpush1.msra.mxu0 %v446
    %1328 = vmatprep.subr.mxu0 %v451
    %1329 = vmatpush1.msra.mxu0 %v450
    %1330 = vmatprep.subr.mxu0 %v455
    %1331 = vmatpush1.msra.mxu0 %v454
    %1332 = vmatprep.subr.mxu0 %v459
    %1333 = vmatpush1.msra.mxu0 %v458
    %1334 = vmatprep.subr.mxu0 %v463
    %1335 = vmatpush1.msra.mxu0 %v462
    %1336 = vmatprep.subr.mxu0 %v467
    %1337 = vmatpush1.msra.mxu0 %v466
    %1338 = vmatprep.subr.mxu0 0.0
    %1339 = vmatpush1.msra.mxu0 0.0
    %1340 = vmatprep.subr.mxu0 0.0
    %1341 = vmatpush1.msra.mxu0 0.0
    %1342 = vmatprep.subr.mxu0 0.0
    %1343 = vmatpush1.msra.mxu0 0.0
    %1344 = vmatprep.subr.mxu0 0.0
    %1345 = vmatpush1.msra.mxu0 0.0
    %1346 = vmatprep.subr.mxu0 0.0
    %1347 = vmatpush1.msra.mxu0 0.0
    %1348 = vmatprep.subr.mxu0 0.0
    %1349 = vmatpush1.msra.mxu0 0.0
    %1350 = vmatprep.subr.mxu0 0.0
    %1351 = vmatpush1.msra.mxu0 0.0
    %1352 = vmatprep.subr.mxu0 0.0
    %1353 = vmatpush1.msra.mxu0 0.0
    %1354 = vmatprep.subr.mxu0 0.0
    %1355 = vmatpush1.msra.mxu0 0.0
    %1356 = vmatprep.subr.mxu0 0.0
    %1357 = vmatpush1.msra.mxu0 0.0
    %1358 = vmatprep.subr.mxu0 0.0
    %1359 = vmatpush1.msra.mxu0 0.0
    %1360 = vmatprep.subr.mxu0 0.0
    %1361 = vmatpush1.msra.mxu0 0.0
    %1362 = vmatprep.subr.mxu0 0.0
    %1363 = vmatpush1.msra.mxu0 0.0
    %1364 = vmatprep.subr.mxu0 0.0
    %1365 = vmatpush1.msra.mxu0 0.0
    %1366 = vmatprep.subr.mxu0 0.0
    %1367 = vmatpush1.msra.mxu0 0.0
    %1368 = vmatprep.subr.mxu0 0.0
    %1369 = vmatpush1.msra.mxu0 0.0
    %1370 = vmatprep.mubr.f32.mxu0 0.0
    %1371 = vmatmul.mubr.f32.gmra.mrb[0].mxu0 %v1134
    %v1372 = vpop.f32.mrb[0].mxu0
    %v1373 = vadd.f32 0.0, %v1372
    %v1374 = vpop.f32.mrb[0].mxu0
    %v1375 = vadd.f32 0.0, %v1374
    %1376 = vdwg.mxu0
    %1377 = vmatprep.subr.mxu0 %v409
    %1378 = vmatpush1.msra.mxu0 %v408
    %1379 = vmatprep.subr.mxu0 %v413
    %1380 = vmatpush1.msra.mxu0 %v412
    %1381 = vmatprep.subr.mxu0 %v417
    %1382 = vmatpush1.msra.mxu0 %v416
    %1383 = vmatprep.subr.mxu0 %v421
    %1384 = vmatpush1.msra.mxu0 %v420
    %1385 = vmatprep.subr.mxu0 %v425
    %1386 = vmatpush1.msra.mxu0 %v424
    %1387 = vmatprep.subr.mxu0 %v429
    %1388 = vmatpush1.msra.mxu0 %v428
    %1389 = vmatprep.subr.mxu0 %v433
    %1390 = vmatpush1.msra.mxu0 %v432
    %1391 = vmatprep.subr.mxu0 %v437
    %1392 = vmatpush1.msra.mxu0 %v436
    %1393 = vmatprep.subr.mxu0 %v441
    %1394 = vmatpush1.msra.mxu0 %v440
    %1395 = vmatprep.subr.mxu0 %v445
    %1396 = vmatpush1.msra.mxu0 %v444
    %1397 = vmatprep.subr.mxu0 %v449
    %1398 = vmatpush1.msra.mxu0 %v448
    %1399 = vmatprep.subr.mxu0 %v453
    %1400 = vmatpush1.msra.mxu0 %v452
    %1401 = vmatprep.subr.mxu0 %v457
    %1402 = vmatpush1.msra.mxu0 %v456
    %1403 = vmatprep.subr.mxu0 %v461
    %1404 = vmatpush1.msra.mxu0 %v460
    %1405 = vmatprep.subr.mxu0 %v465
    %1406 = vmatpush1.msra.mxu0 %v464
    %1407 = vmatprep.subr.mxu0 %v469
    %1408 = vmatpush1.msra.mxu0 %v468
    %1409 = vmatprep.subr.mxu0 0.0
    %1410 = vmatpush1.msra.mxu0 0.0
    %1411 = vmatprep.subr.mxu0 0.0
    %1412 = vmatpush1.msra.mxu0 0.0
    %1413 = vmatprep.subr.mxu0 0.0
    %1414 = vmatpush1.msra.mxu0 0.0
    %1415 = vmatprep.subr.mxu0 0.0
    %1416 = vmatpush1.msra.mxu0 0.0
    %1417 = vmatprep.subr.mxu0 0.0
    %1418 = vmatpush1.msra.mxu0 0.0
    %1419 = vmatprep.subr.mxu0 0.0
    %1420 = vmatpush1.msra.mxu0 0.0
    %1421 = vmatprep.subr.mxu0 0.0
    %1422 = vmatpush1.msra.mxu0 0.0
    %1423 = vmatprep.subr.mxu0 0.0
    %1424 = vmatpush1.msra.mxu0 0.0
    %1425 = vmatprep.subr.mxu0 0.0
    %1426 = vmatpush1.msra.mxu0 0.0
    %1427 = vmatprep.subr.mxu0 0.0
    %1428 = vmatpush1.msra.mxu0 0.0
    %1429 = vmatprep.subr.mxu0 0.0
    %1430 = vmatpush1.msra.mxu0 0.0
    %1431 = vmatprep.subr.mxu0 0.0
    %1432 = vmatpush1.msra.mxu0 0.0
    %1433 = vmatprep.subr.mxu0 0.0
    %1434 = vmatpush1.msra.mxu0 0.0
    %1435 = vmatprep.subr.mxu0 0.0
    %1436 = vmatpush1.msra.mxu0 0.0
    %1437 = vmatprep.subr.mxu0 0.0
    %1438 = vmatpush1.msra.mxu0 0.0
    %1439 = vmatprep.subr.mxu0 0.0
    %1440 = vmatpush1.msra.mxu0 0.0
    %1441 = vmatprep.mubr.f32.mxu0 0.0
    %1442 = vmatmul.mubr.f32.gmra.mrb[0].mxu0 %v1134
    %v1443 = vpop.f32.mrb[0].mxu0
    %v1444 = vadd.f32 0.0, %v1443
    %v1445 = vpop.f32.mrb[0].mxu0
    %v1446 = vadd.f32 0.0, %v1445
    %1447 = vdwg.mxu0
    %v1448 = vadd.f32 %v1302, %v1373
    %v1449 = vadd.f32 %v1303, %v1375
    %v1450 = vadd.f32 %v1304, %v1444
    %v1451 = vadd.f32 %v1305, %v1446
    %v1452 = vxor.u32 %v1448, 2147483648
    %v1453 = vmul.f32 %v1452, 1.442695
    %v1454 = vpow.pop %v1453
    %v1455 = vadd.f32 %v1454, 1.0
    %v1456 = vrcp.pop %v1455
    %v1457 = vmul.f32 1.0, %v1456
    %v1458 = vxor.u32 %v1449, 2147483648
    %v1459 = vmul.f32 %v1458, 1.442695
    %v1460 = vpow.pop %v1459
    %v1461 = vadd.f32 %v1460, 1.0
    %v1462 = vrcp.pop %v1461
    %v1463 = vmul.f32 1.0, %v1462
    %v1464 = vtanh.pop %v1450
    %v1465 = vxor.u32 %v1451, 2147483648
    %v1466 = vmul.f32 %v1465, 1.442695
    %v1467 = vpow.pop %v1466
    %v1468 = vadd.f32 %v1467, 1.0
    %v1469 = vrcp.pop %v1468
    %v1470 = vmul.f32 1.0, %v1469
    %v1471 = vmul.f32 %v1463, %v1132
    %v1472 = vmul.f32 %v1457, %v1464
    %v1473 = vadd.f32 %v1471, %v1472
    %v1474 = vtanh.pop %v1473
    %v1475 = vmul.f32 %v1470, %v1474
    %1476 = vmatprep.subr.mxu0 %v471
    %1477 = vmatpush1.msra.mxu0 %v470
    %1478 = vmatprep.subr.mxu0 %v475
    %1479 = vmatpush1.msra.mxu0 %v474
    %1480 = vmatprep.subr.mxu0 %v479
    %1481 = vmatpush1.msra.mxu0 %v478
    %1482 = vmatprep.subr.mxu0 %v483
    %1483 = vmatpush1.msra.mxu0 %v482
    %1484 = vmatprep.subr.mxu0 %v487
    %1485 = vmatpush1.msra.mxu0 %v486
    %1486 = vmatprep.subr.mxu0 %v491
    %1487 = vmatpush1.msra.mxu0 %v490
    %1488 = vmatprep.subr.mxu0 %v495
    %1489 = vmatpush1.msra.mxu0 %v494
    %1490 = vmatprep.subr.mxu0 %v499
    %1491 = vmatpush1.msra.mxu0 %v498
    %1492 = vmatprep.subr.mxu0 %v503
    %1493 = vmatpush1.msra.mxu0 %v502
    %1494 = vmatprep.subr.mxu0 %v507
    %1495 = vmatpush1.msra.mxu0 %v506
    %1496 = vmatprep.subr.mxu0 %v511
    %1497 = vmatpush1.msra.mxu0 %v510
    %1498 = vmatprep.subr.mxu0 %v515
    %1499 = vmatpush1.msra.mxu0 %v514
    %1500 = vmatprep.subr.mxu0 %v519
    %1501 = vmatpush1.msra.mxu0 %v518
    %1502 = vmatprep.subr.mxu0 %v523
    %1503 = vmatpush1.msra.mxu0 %v522
    %1504 = vmatprep.subr.mxu0 %v527
    %1505 = vmatpush1.msra.mxu0 %v526
    %1506 = vmatprep.subr.mxu0 %v531
    %1507 = vmatpush1.msra.mxu0 %v530
    %1508 = vmatprep.subr.mxu0 %v535
    %1509 = vmatpush1.msra.mxu0 %v534
    %1510 = vmatprep.subr.mxu0 %v539
    %1511 = vmatpush1.msra.mxu0 %v538
    %1512 = vmatprep.subr.mxu0 %v543
    %1513 = vmatpush1.msra.mxu0 %v542
    %1514 = vmatprep.subr.mxu0 %v547
    %1515 = vmatpush1.msra.mxu0 %v546
    %1516 = vmatprep.subr.mxu0 %v551
    %1517 = vmatpush1.msra.mxu0 %v550
    %1518 = vmatprep.subr.mxu0 %v555
    %1519 = vmatpush1.msra.mxu0 %v554
    %1520 = vmatprep.subr.mxu0 %v559
    %1521 = vmatpush1.msra.mxu0 %v558
    %1522 = vmatprep.subr.mxu0 %v563
    %1523 = vmatpush1.msra.mxu0 %v562
    %1524 = vmatprep.subr.mxu0 %v567
    %1525 = vmatpush1.msra.mxu0 %v566
    %1526 = vmatprep.subr.mxu0 %v571
    %1527 = vmatpush1.msra.mxu0 %v570
    %1528 = vmatprep.subr.mxu0 %v575
    %1529 = vmatpush1.msra.mxu0 %v574
    %1530 = vmatprep.subr.mxu0 %v579
    %1531 = vmatpush1.msra.mxu0 %v578
    %1532 = vmatprep.subr.mxu0 %v583
    %1533 = vmatpush1.msra.mxu0 %v582
    %1534 = vmatprep.subr.mxu0 %v587
    %1535 = vmatpush1.msra.mxu0 %v586
    %1536 = vmatprep.subr.mxu0 %v591
    %1537 = vmatpush1.msra.mxu0 %v590
    %1538 = vmatprep.subr.mxu0 %v595
    %1539 = vmatpush1.msra.mxu0 %v594
    %1540 = vmatprep.mubr.f32.mxu0 %v1300
    %1541 = vmatmul.mubr.f32.gmra.mrb[0].mxu0 %v1475
    %v1542 = vpop.f32.mrb[0].mxu0
    %v1543 = vadd.f32 %v603, %v1542
    %v1544 = vpop.f32.mrb[0].mxu0
    %v1545 = vadd.f32 %v607, %v1544
    %1546 = vdwg.mxu0
    %1547 = vmatprep.subr.mxu0 %v473
    %1548 = vmatpush1.msra.mxu0 %v472
    %1549 = vmatprep.subr.mxu0 %v477
    %1550 = vmatpush1.msra.mxu0 %v476
    %1551 = vmatprep.subr.mxu0 %v481
    %1552 = vmatpush1.msra.mxu0 %v480
    %1553 = vmatprep.subr.mxu0 %v485
    %1554 = vmatpush1.msra.mxu0 %v484
    %1555 = vmatprep.subr.mxu0 %v489
    %1556 = vmatpush1.msra.mxu0 %v488
    %1557 = vmatprep.subr.mxu0 %v493
    %1558 = vmatpush1.msra.mxu0 %v492
    %1559 = vmatprep.subr.mxu0 %v497
    %1560 = vmatpush1.msra.mxu0 %v496
    %1561 = vmatprep.subr.mxu0 %v501
    %1562 = vmatpush1.msra.mxu0 %v500
    %1563 = vmatprep.subr.mxu0 %v505
    %1564 = vmatpush1.msra.mxu0 %v504
    %1565 = vmatprep.subr.mxu0 %v509
    %1566 = vmatpush1.msra.mxu0 %v508
    %1567 = vmatprep.subr.mxu0 %v513
    %1568 = vmatpush1.msra.mxu0 %v512
    %1569 = vmatprep.subr.mxu0 %v517
    %1570 = vmatpush1.msra.mxu0 %v516
    %1571 = vmatprep.subr.mxu0 %v521
    %1572 = vmatpush1.msra.mxu0 %v520
    %1573 = vmatprep.subr.mxu0 %v525
    %1574 = vmatpush1.msra.mxu0 %v524
    %1575 = vmatprep.subr.mxu0 %v529
    %1576 = vmatpush1.msra.mxu0 %v528
    %1577 = vmatprep.subr.mxu0 %v533
    %1578 = vmatpush1.msra.mxu0 %v532
    %1579 = vmatprep.subr.mxu0 %v537
    %1580 = vmatpush1.msra.mxu0 %v536
    %1581 = vmatprep.subr.mxu0 %v541
    %1582 = vmatpush1.msra.mxu0 %v540
    %1583 = vmatprep.subr.mxu0 %v545
    %1584 = vmatpush1.msra.mxu0 %v544
    %1585 = vmatprep.subr.mxu0 %v549
    %1586 = vmatpush1.msra.mxu0 %v548
    %1587 = vmatprep.subr.mxu0 %v553
    %1588 = vmatpush1.msra.mxu0 %v552
    %1589 = vmatprep.subr.mxu0 %v557
    %1590 = vmatpush1.msra.mxu0 %v556
    %1591 = vmatprep.subr.mxu0 %v561
    %1592 = vmatpush1.msra.mxu0 %v560
    %1593 = vmatprep.subr.mxu0 %v565
    %1594 = vmatpush1.msra.mxu0 %v564
    %1595 = vmatprep.subr.mxu0 %v569
    %1596 = vmatpush1.msra.mxu0 %v568
    %1597 = vmatprep.subr.mxu0 %v573
    %1598 = vmatpush1.msra.mxu0 %v572
    %1599 = vmatprep.subr.mxu0 %v577
    %1600 = vmatpush1.msra.mxu0 %v576
    %1601 = vmatprep.subr.mxu0 %v581
    %1602 = vmatpush1.msra.mxu0 %v580
    %1603 = vmatprep.subr.mxu0 %v585
    %1604 = vmatpush1.msra.mxu0 %v584
    %1605 = vmatprep.subr.mxu0 %v589
    %1606 = vmatpush1.msra.mxu0 %v588
    %1607 = vmatprep.subr.mxu0 %v593
    %1608 = vmatpush1.msra.mxu0 %v592
    %1609 = vmatprep.subr.mxu0 %v597
    %1610 = vmatpush1.msra.mxu0 %v596
    %1611 = vmatprep.mubr.f32.mxu0 %v1300
    %1612 = vmatmul.mubr.f32.gmra.mrb[0].mxu0 %v1475
    %v1613 = vpop.f32.mrb[0].mxu0
    %v1614 = vadd.f32 %v611, %v1613
    %v1615 = vpop.f32.mrb[0].mxu0
    %v1616 = vadd.f32 %v615, %v1615
    %1617 = vdwg.mxu0
    %v1618 = vxor.u32 %v1543, 2147483648
    %v1619 = vmul.f32 %v1618, 1.442695
    %v1620 = vpow.pop %v1619
    %v1621 = vadd.f32 %v1620, 1.0
    %v1622 = vrcp.pop %v1621
    %v1623 = vmul.f32 1.0, %v1622
    %v1624 = vxor.u32 %v1545, 2147483648
    %v1625 = vmul.f32 %v1624, 1.442695
    %v1626 = vpow.pop %v1625
    %v1627 = vadd.f32 %v1626, 1.0
    %v1628 = vrcp.pop %v1627
    %v1629 = vmul.f32 1.0, %v1628
    %v1630 = vtanh.pop %v1614
    %v1631 = vxor.u32 %v1616, 2147483648
    %v1632 = vmul.f32 %v1631, 1.442695
    %v1633 = vpow.pop %v1632
    %v1634 = vadd.f32 %v1633, 1.0
    %v1635 = vrcp.pop %v1634
    %v1636 = vmul.f32 1.0, %v1635
    %v1637 = vmul.f32 %v1629, %v1298
    %v1638 = vmul.f32 %v1623, %v1630
    %v1639 = vadd.f32 %v1637, %v1638
    %v1640 = vtanh.pop %v1639
    %v1641 = vmul.f32 %v1636, %v1640
    %s1642 = scalar_lea.vmem [#allocation2], 96
    %v1643 = vld [vmem:[%s1642] sm:$0xff]
    %v1644 = vld [vmem:[%s1642 + $0x8] sm:$0xff]
    %v1645 = vld [vmem:[%s1642 + $0x10] sm:$0xff]
    %v1646 = vld [vmem:[%s1642 + $0x18] sm:$0xff]
    %1647 = vmatprep.subr.mxu0 %v407
    %1648 = vmatpush1.msra.mxu0 %v406
    %1649 = vmatprep.subr.mxu0 %v411
    %1650 = vmatpush1.msra.mxu0 %v410
    %1651 = vmatprep.subr.mxu0 %v415
    %1652 = vmatpush1.msra.mxu0 %v414
    %1653 = vmatprep.subr.mxu0 %v419
    %1654 = vmatpush1.msra.mxu0 %v418
    %1655 = vmatprep.subr.mxu0 %v423
    %1656 = vmatpush1.msra.mxu0 %v422
    %1657 = vmatprep.subr.mxu0 %v427
    %1658 = vmatpush1.msra.mxu0 %v426
    %1659 = vmatprep.subr.mxu0 %v431
    %1660 = vmatpush1.msra.mxu0 %v430
    %1661 = vmatprep.subr.mxu0 %v435
    %1662 = vmatpush1.msra.mxu0 %v434
    %1663 = vmatprep.subr.mxu0 %v439
    %1664 = vmatpush1.msra.mxu0 %v438
    %1665 = vmatprep.subr.mxu0 %v443
    %1666 = vmatpush1.msra.mxu0 %v442
    %1667 = vmatprep.subr.mxu0 %v447
    %1668 = vmatpush1.msra.mxu0 %v446
    %1669 = vmatprep.subr.mxu0 %v451
    %1670 = vmatpush1.msra.mxu0 %v450
    %1671 = vmatprep.subr.mxu0 %v455
    %1672 = vmatpush1.msra.mxu0 %v454
    %1673 = vmatprep.subr.mxu0 %v459
    %1674 = vmatpush1.msra.mxu0 %v458
    %1675 = vmatprep.subr.mxu0 %v463
    %1676 = vmatpush1.msra.mxu0 %v462
    %1677 = vmatprep.subr.mxu0 %v467
    %1678 = vmatpush1.msra.mxu0 %v466
    %1679 = vmatprep.subr.mxu0 0.0
    %1680 = vmatpush1.msra.mxu0 0.0
    %1681 = vmatprep.subr.mxu0 0.0
    %1682 = vmatpush1.msra.mxu0 0.0
    %1683 = vmatprep.subr.mxu0 0.0
    %1684 = vmatpush1.msra.mxu0 0.0
    %1685 = vmatprep.subr.mxu0 0.0
    %1686 = vmatpush1.msra.mxu0 0.0
    %1687 = vmatprep.subr.mxu0 0.0
    %1688 = vmatpush1.msra.mxu0 0.0
    %1689 = vmatprep.subr.mxu0 0.0
    %1690 = vmatpush1.msra.mxu0 0.0
    %1691 = vmatprep.subr.mxu0 0.0
    %1692 = vmatpush1.msra.mxu0 0.0
    %1693 = vmatprep.subr.mxu0 0.0
    %1694 = vmatpush1.msra.mxu0 0.0
    %1695 = vmatprep.subr.mxu0 0.0
    %1696 = vmatpush1.msra.mxu0 0.0
    %1697 = vmatprep.subr.mxu0 0.0
    %1698 = vmatpush1.msra.mxu0 0.0
    %1699 = vmatprep.subr.mxu0 0.0
    %1700 = vmatpush1.msra.mxu0 0.0
    %1701 = vmatprep.subr.mxu0 0.0
    %1702 = vmatpush1.msra.mxu0 0.0
    %1703 = vmatprep.subr.mxu0 0.0
    %1704 = vmatpush1.msra.mxu0 0.0
    %1705 = vmatprep.subr.mxu0 0.0
    %1706 = vmatpush1.msra.mxu0 0.0
    %1707 = vmatprep.subr.mxu0 0.0
    %1708 = vmatpush1.msra.mxu0 0.0
    %1709 = vmatprep.subr.mxu0 0.0
    %1710 = vmatpush1.msra.mxu0 0.0
    %1711 = vmatprep.mubr.f32.mxu0 0.0
    %1712 = vmatmul.mubr.f32.gmra.mrb[0].mxu0 %v1475
    %v1713 = vpop.f32.mrb[0].mxu0
    %v1714 = vadd.f32 0.0, %v1713
    %v1715 = vpop.f32.mrb[0].mxu0
    %v1716 = vadd.f32 0.0, %v1715
    %1717 = vdwg.mxu0
    %1718 = vmatprep.subr.mxu0 %v409
    %1719 = vmatpush1.msra.mxu0 %v408
    %1720 = vmatprep.subr.mxu0 %v413
    %1721 = vmatpush1.msra.mxu0 %v412
    %1722 = vmatprep.subr.mxu0 %v417
    %1723 = vmatpush1.msra.mxu0 %v416
    %1724 = vmatprep.subr.mxu0 %v421
    %1725 = vmatpush1.msra.mxu0 %v420
    %1726 = vmatprep.subr.mxu0 %v425
    %1727 = vmatpush1.msra.mxu0 %v424
    %1728 = vmatprep.subr.mxu0 %v429
    %1729 = vmatpush1.msra.mxu0 %v428
    %1730 = vmatprep.subr.mxu0 %v433
    %1731 = vmatpush1.msra.mxu0 %v432
    %1732 = vmatprep.subr.mxu0 %v437
    %1733 = vmatpush1.msra.mxu0 %v436
    %1734 = vmatprep.subr.mxu0 %v441
    %1735 = vmatpush1.msra.mxu0 %v440
    %1736 = vmatprep.subr.mxu0 %v445
    %1737 = vmatpush1.msra.mxu0 %v444
    %1738 = vmatprep.subr.mxu0 %v449
    %1739 = vmatpush1.msra.mxu0 %v448
    %1740 = vmatprep.subr.mxu0 %v453
    %1741 = vmatpush1.msra.mxu0 %v452
    %1742 = vmatprep.subr.mxu0 %v457
    %1743 = vmatpush1.msra.mxu0 %v456
    %1744 = vmatprep.subr.mxu0 %v461
    %1745 = vmatpush1.msra.mxu0 %v460
    %1746 = vmatprep.subr.mxu0 %v465
    %1747 = vmatpush1.msra.mxu0 %v464
    %1748 = vmatprep.subr.mxu0 %v469
    %1749 = vmatpush1.msra.mxu0 %v468
    %1750 = vmatprep.subr.mxu0 0.0
    %1751 = vmatpush1.msra.mxu0 0.0
    %1752 = vmatprep.subr.mxu0 0.0
    %1753 = vmatpush1.msra.mxu0 0.0
    %1754 = vmatprep.subr.mxu0 0.0
    %1755 = vmatpush1.msra.mxu0 0.0
    %1756 = vmatprep.subr.mxu0 0.0
    %1757 = vmatpush1.msra.mxu0 0.0
    %1758 = vmatprep.subr.mxu0 0.0
    %1759 = vmatpush1.msra.mxu0 0.0
    %1760 = vmatprep.subr.mxu0 0.0
    %1761 = vmatpush1.msra.mxu0 0.0
    %1762 = vmatprep.subr.mxu0 0.0
    %1763 = vmatpush1.msra.mxu0 0.0
    %1764 = vmatprep.subr.mxu0 0.0
    %1765 = vmatpush1.msra.mxu0 0.0
    %1766 = vmatprep.subr.mxu0 0.0
    %1767 = vmatpush1.msra.mxu0 0.0
    %1768 = vmatprep.subr.mxu0 0.0
    %1769 = vmatpush1.msra.mxu0 0.0
    %1770 = vmatprep.subr.mxu0 0.0
    %1771 = vmatpush1.msra.mxu0 0.0
    %1772 = vmatprep.subr.mxu0 0.0
    %1773 = vmatpush1.msra.mxu0 0.0
    %1774 = vmatprep.subr.mxu0 0.0
    %1775 = vmatpush1.msra.mxu0 0.0
    %1776 = vmatprep.subr.mxu0 0.0
    %1777 = vmatpush1.msra.mxu0 0.0
    %1778 = vmatprep.subr.mxu0 0.0
    %1779 = vmatpush1.msra.mxu0 0.0
    %1780 = vmatprep.subr.mxu0 0.0
    %1781 = vmatpush1.msra.mxu0 0.0
    %1782 = vmatprep.mubr.f32.mxu0 0.0
    %1783 = vmatmul.mubr.f32.gmra.mrb[0].mxu0 %v1475
    %v1784 = vpop.f32.mrb[0].mxu0
    %v1785 = vadd.f32 0.0, %v1784
    %v1786 = vpop.f32.mrb[0].mxu0
    %v1787 = vadd.f32 0.0, %v1786
    %1788 = vdwg.mxu0
    %v1789 = vadd.f32 %v1643, %v1714
    %v1790 = vadd.f32 %v1644, %v1716
    %v1791 = vadd.f32 %v1645, %v1785
    %v1792 = vadd.f32 %v1646, %v1787
    %v1793 = vxor.u32 %v1789, 2147483648
    %v1794 = vmul.f32 %v1793, 1.442695
    %v1795 = vpow.pop %v1794
    %v1796 = vadd.f32 %v1795, 1.0
    %v1797 = vrcp.pop %v1796
    %v1798 = vmul.f32 1.0, %v1797
    %v1799 = vxor.u32 %v1790, 2147483648
    %v1800 = vmul.f32 %v1799, 1.442695
    %v1801 = vpow.pop %v1800
    %v1802 = vadd.f32 %v1801, 1.0
    %v1803 = vrcp.pop %v1802
    %v1804 = vmul.f32 1.0, %v1803
    %v1805 = vtanh.pop %v1791
    %v1806 = vxor.u32 %v1792, 2147483648
    %v1807 = vmul.f32 %v1806, 1.442695
    %v1808 = vpow.pop %v1807
    %v1809 = vadd.f32 %v1808, 1.0
    %v1810 = vrcp.pop %v1809
    %v1811 = vmul.f32 1.0, %v1810
    %v1812 = vmul.f32 %v1804, %v1473
    %v1813 = vmul.f32 %v1798, %v1805
    %v1814 = vadd.f32 %v1812, %v1813
    %v1815 = vtanh.pop %v1814
    %v1816 = vmul.f32 %v1811, %v1815
    %1817 = vmatprep.subr.mxu0 %v471
    %1818 = vmatpush1.msra.mxu0 %v470
    %1819 = vmatprep.subr.mxu0 %v475
    %1820 = vmatpush1.msra.mxu0 %v474
    %1821 = vmatprep.subr.mxu0 %v479
    %1822 = vmatpush1.msra.mxu0 %v478
    %1823 = vmatprep.subr.mxu0 %v483
    %1824 = vmatpush1.msra.mxu0 %v482
    %1825 = vmatprep.subr.mxu0 %v487
    %1826 = vmatpush1.msra.mxu0 %v486
    %1827 = vmatprep.subr.mxu0 %v491
    %1828 = vmatpush1.msra.mxu0 %v490
    %1829 = vmatprep.subr.mxu0 %v495
    %1830 = vmatpush1.msra.mxu0 %v494
    %1831 = vmatprep.subr.mxu0 %v499
    %1832 = vmatpush1.msra.mxu0 %v498
    %1833 = vmatprep.subr.mxu0 %v503
    %1834 = vmatpush1.msra.mxu0 %v502
    %1835 = vmatprep.subr.mxu0 %v507
    %1836 = vmatpush1.msra.mxu0 %v506
    %1837 = vmatprep.subr.mxu0 %v511
    %1838 = vmatpush1.msra.mxu0 %v510
    %1839 = vmatprep.subr.mxu0 %v515
    %1840 = vmatpush1.msra.mxu0 %v514
    %1841 = vmatprep.subr.mxu0 %v519
    %1842 = vmatpush1.msra.mxu0 %v518
    %1843 = vmatprep.subr.mxu0 %v523
    %1844 = vmatpush1.msra.mxu0 %v522
    %1845 = vmatprep.subr.mxu0 %v527
    %1846 = vmatpush1.msra.mxu0 %v526
    %1847 = vmatprep.subr.mxu0 %v531
    %1848 = vmatpush1.msra.mxu0 %v530
    %1849 = vmatprep.subr.mxu0 %v535
    %1850 = vmatpush1.msra.mxu0 %v534
    %1851 = vmatprep.subr.mxu0 %v539
    %1852 = vmatpush1.msra.mxu0 %v538
    %1853 = vmatprep.subr.mxu0 %v543
    %1854 = vmatpush1.msra.mxu0 %v542
    %1855 = vmatprep.subr.mxu0 %v547
    %1856 = vmatpush1.msra.mxu0 %v546
    %1857 = vmatprep.subr.mxu0 %v551
    %1858 = vmatpush1.msra.mxu0 %v550
    %1859 = vmatprep.subr.mxu0 %v555
    %1860 = vmatpush1.msra.mxu0 %v554
    %1861 = vmatprep.subr.mxu0 %v559
    %1862 = vmatpush1.msra.mxu0 %v558
    %1863 = vmatprep.subr.mxu0 %v563
    %1864 = vmatpush1.msra.mxu0 %v562
    %1865 = vmatprep.subr.mxu0 %v567
    %1866 = vmatpush1.msra.mxu0 %v566
    %1867 = vmatprep.subr.mxu0 %v571
    %1868 = vmatpush1.msra.mxu0 %v570
    %1869 = vmatprep.subr.mxu0 %v575
    %1870 = vmatpush1.msra.mxu0 %v574
    %1871 = vmatprep.subr.mxu0 %v579
    %1872 = vmatpush1.msra.mxu0 %v578
    %1873 = vmatprep.subr.mxu0 %v583
    %1874 = vmatpush1.msra.mxu0 %v582
    %1875 = vmatprep.subr.mxu0 %v587
    %1876 = vmatpush1.msra.mxu0 %v586
    %1877 = vmatprep.subr.mxu0 %v591
    %1878 = vmatpush1.msra.mxu0 %v590
    %1879 = vmatprep.subr.mxu0 %v595
    %1880 = vmatpush1.msra.mxu0 %v594
    %1881 = vmatprep.mubr.f32.mxu0 %v1641
    %1882 = vmatmul.mubr.f32.gmra.mrb[0].mxu0 %v1816
    %v1883 = vpop.f32.mrb[0].mxu0
    %v1884 = vadd.f32 %v603, %v1883
    %v1885 = vpop.f32.mrb[0].mxu0
    %v1886 = vadd.f32 %v607, %v1885
    %1887 = vdwg.mxu0
    %1888 = vmatprep.subr.mxu0 %v473
    %1889 = vmatpush1.msra.mxu0 %v472
    %1890 = vmatprep.subr.mxu0 %v477
    %1891 = vmatpush1.msra.mxu0 %v476
    %1892 = vmatprep.subr.mxu0 %v481
    %1893 = vmatpush1.msra.mxu0 %v480
    %1894 = vmatprep.subr.mxu0 %v485
    %1895 = vmatpush1.msra.mxu0 %v484
    %1896 = vmatprep.subr.mxu0 %v489
    %1897 = vmatpush1.msra.mxu0 %v488
    %1898 = vmatprep.subr.mxu0 %v493
    %1899 = vmatpush1.msra.mxu0 %v492
    %1900 = vmatprep.subr.mxu0 %v497
    %1901 = vmatpush1.msra.mxu0 %v496
    %1902 = vmatprep.subr.mxu0 %v501
    %1903 = vmatpush1.msra.mxu0 %v500
    %1904 = vmatprep.subr.mxu0 %v505
    %1905 = vmatpush1.msra.mxu0 %v504
    %1906 = vmatprep.subr.mxu0 %v509
    %1907 = vmatpush1.msra.mxu0 %v508
    %1908 = vmatprep.subr.mxu0 %v513
    %1909 = vmatpush1.msra.mxu0 %v512
    %1910 = vmatprep.subr.mxu0 %v517
    %1911 = vmatpush1.msra.mxu0 %v516
    %1912 = vmatprep.subr.mxu0 %v521
    %1913 = vmatpush1.msra.mxu0 %v520
    %1914 = vmatprep.subr.mxu0 %v525
    %1915 = vmatpush1.msra.mxu0 %v524
    %1916 = vmatprep.subr.mxu0 %v529
    %1917 = vmatpush1.msra.mxu0 %v528
    %1918 = vmatprep.subr.mxu0 %v533
    %1919 = vmatpush1.msra.mxu0 %v532
    %1920 = vmatprep.subr.mxu0 %v537
    %1921 = vmatpush1.msra.mxu0 %v536
    %1922 = vmatprep.subr.mxu0 %v541
    %1923 = vmatpush1.msra.mxu0 %v540
    %1924 = vmatprep.subr.mxu0 %v545
    %1925 = vmatpush1.msra.mxu0 %v544
    %1926 = vmatprep.subr.mxu0 %v549
    %1927 = vmatpush1.msra.mxu0 %v548
    %1928 = vmatprep.subr.mxu0 %v553
    %1929 = vmatpush1.msra.mxu0 %v552
    %1930 = vmatprep.subr.mxu0 %v557
    %1931 = vmatpush1.msra.mxu0 %v556
    %1932 = vmatprep.subr.mxu0 %v561
    %1933 = vmatpush1.msra.mxu0 %v560
    %1934 = vmatprep.subr.mxu0 %v565
    %1935 = vmatpush1.msra.mxu0 %v564
    %1936 = vmatprep.subr.mxu0 %v569
    %1937 = vmatpush1.msra.mxu0 %v568
    %1938 = vmatprep.subr.mxu0 %v573
    %1939 = vmatpush1.msra.mxu0 %v572
    %1940 = vmatprep.subr.mxu0 %v577
    %1941 = vmatpush1.msra.mxu0 %v576
    %1942 = vmatprep.subr.mxu0 %v581
    %1943 = vmatpush1.msra.mxu0 %v580
    %1944 = vmatprep.subr.mxu0 %v585
    %1945 = vmatpush1.msra.mxu0 %v584
    %1946 = vmatprep.subr.mxu0 %v589
    %1947 = vmatpush1.msra.mxu0 %v588
    %1948 = vmatprep.subr.mxu0 %v593
    %1949 = vmatpush1.msra.mxu0 %v592
    %1950 = vmatprep.subr.mxu0 %v597
    %1951 = vmatpush1.msra.mxu0 %v596
    %1952 = vmatprep.mubr.f32.mxu0 %v1641
    %1953 = vmatmul.mubr.f32.gmra.mrb[0].mxu0 %v1816
    %v1954 = vpop.f32.mrb[0].mxu0
    %v1955 = vadd.f32 %v611, %v1954
    %v1956 = vpop.f32.mrb[0].mxu0
    %v1957 = vadd.f32 %v615, %v1956
    %1958 = vdwg.mxu0
    %v1959 = vxor.u32 %v1884, 2147483648
    %v1960 = vmul.f32 %v1959, 1.442695
    %v1961 = vpow.pop %v1960
    %v1962 = vadd.f32 %v1961, 1.0
    %v1963 = vrcp.pop %v1962
    %v1964 = vmul.f32 1.0, %v1963
    %v1965 = vxor.u32 %v1886, 2147483648
    %v1966 = vmul.f32 %v1965, 1.442695
    %v1967 = vpow.pop %v1966
    %v1968 = vadd.f32 %v1967, 1.0
    %v1969 = vrcp.pop %v1968
    %v1970 = vmul.f32 1.0, %v1969
    %v1971 = vtanh.pop %v1955
    %v1972 = vxor.u32 %v1957, 2147483648
    %v1973 = vmul.f32 %v1972, 1.442695
    %v1974 = vpow.pop %v1973
    %v1975 = vadd.f32 %v1974, 1.0
    %v1976 = vrcp.pop %v1975
    %v1977 = vmul.f32 1.0, %v1976
    %v1978 = vmul.f32 %v1970, %v1639
    %v1979 = vmul.f32 %v1964, %v1971
    %v1980 = vadd.f32 %v1978, %v1979
    %v1981 = vtanh.pop %v1980
    %v1982 = vmul.f32 %v1977, %v1981
    %s1983 = scalar_lea.vmem [#allocation2], 128
    %v1984 = vld [vmem:[%s1983] sm:$0xff]
    %v1985 = vld [vmem:[%s1983 + $0x8] sm:$0xff]
    %v1986 = vld [vmem:[%s1983 + $0x10] sm:$0xff]
    %v1987 = vld [vmem:[%s1983 + $0x18] sm:$0xff]
    %1988 = vmatprep.subr.mxu0 %v407
    %1989 = vmatpush1.msra.mxu0 %v406
    %1990 = vmatprep.subr.mxu0 %v411
    %1991 = vmatpush1.msra.mxu0 %v410
    %1992 = vmatprep.subr.mxu0 %v415
    %1993 = vmatpush1.msra.mxu0 %v414
    %1994 = vmatprep.subr.mxu0 %v419
    %1995 = vmatpush1.msra.mxu0 %v418
    %1996 = vmatprep.subr.mxu0 %v423
    %1997 = vmatpush1.msra.mxu0 %v422
    %1998 = vmatprep.subr.mxu0 %v427
    %1999 = vmatpush1.msra.mxu0 %v426
    %2000 = vmatprep.subr.mxu0 %v431
    %2001 = vmatpush1.msra.mxu0 %v430
    %2002 = vmatprep.subr.mxu0 %v435
    %2003 = vmatpush1.msra.mxu0 %v434
    %2004 = vmatprep.subr.mxu0 %v439
    %2005 = vmatpush1.msra.mxu0 %v438
    %2006 = vmatprep.subr.mxu0 %v443
    %2007 = vmatpush1.msra.mxu0 %v442
    %2008 = vmatprep.subr.mxu0 %v447
    %2009 = vmatpush1.msra.mxu0 %v446
    %2010 = vmatprep.subr.mxu0 %v451
    %2011 = vmatpush1.msra.mxu0 %v450
    %2012 = vmatprep.subr.mxu0 %v455
    %2013 = vmatpush1.msra.mxu0 %v454
    %2014 = vmatprep.subr.mxu0 %v459
    %2015 = vmatpush1.msra.mxu0 %v458
    %2016 = vmatprep.subr.mxu0 %v463
    %2017 = vmatpush1.msra.mxu0 %v462
    %2018 = vmatprep.subr.mxu0 %v467
    %2019 = vmatpush1.msra.mxu0 %v466
    %2020 = vmatprep.subr.mxu0 0.0
    %2021 = vmatpush1.msra.mxu0 0.0
    %2022 = vmatprep.subr.mxu0 0.0
    %2023 = vmatpush1.msra.mxu0 0.0
    %2024 = vmatprep.subr.mxu0 0.0
    %2025 = vmatpush1.msra.mxu0 0.0
    %2026 = vmatprep.subr.mxu0 0.0
    %2027 = vmatpush1.msra.mxu0 0.0
    %2028 = vmatprep.subr.mxu0 0.0
    %2029 = vmatpush1.msra.mxu0 0.0
    %2030 = vmatprep.subr.mxu0 0.0
    %2031 = vmatpush1.msra.mxu0 0.0
    %2032 = vmatprep.subr.mxu0 0.0
    %2033 = vmatpush1.msra.mxu0 0.0
    %2034 = vmatprep.subr.mxu0 0.0
    %2035 = vmatpush1.msra.mxu0 0.0
    %2036 = vmatprep.subr.mxu0 0.0
    %2037 = vmatpush1.msra.mxu0 0.0
    %2038 = vmatprep.subr.mxu0 0.0
    %2039 = vmatpush1.msra.mxu0 0.0
    %2040 = vmatprep.subr.mxu0 0.0
    %2041 = vmatpush1.msra.mxu0 0.0
    %2042 = vmatprep.subr.mxu0 0.0
    %2043 = vmatpush1.msra.mxu0 0.0
    %2044 = vmatprep.subr.mxu0 0.0
    %2045 = vmatpush1.msra.mxu0 0.0
    %2046 = vmatprep.subr.mxu0 0.0
    %2047 = vmatpush1.msra.mxu0 0.0
    %2048 = vmatprep.subr.mxu0 0.0
    %2049 = vmatpush1.msra.mxu0 0.0
    %2050 = vmatprep.subr.mxu0 0.0
    %2051 = vmatpush1.msra.mxu0 0.0
    %2052 = vmatprep.mubr.f32.mxu0 0.0
    %2053 = vmatmul.mubr.f32.gmra.mrb[0].mxu0 %v1816
    %v2054 = vpop.f32.mrb[0].mxu0
    %v2055 = vadd.f32 0.0, %v2054
    %v2056 = vpop.f32.mrb[0].mxu0
    %v2057 = vadd.f32 0.0, %v2056
    %2058 = vdwg.mxu0
    %2059 = vmatprep.subr.mxu0 %v409
    %2060 = vmatpush1.msra.mxu0 %v408
    %2061 = vmatprep.subr.mxu0 %v413
    %2062 = vmatpush1.msra.mxu0 %v412
    %2063 = vmatprep.subr.mxu0 %v417
    %2064 = vmatpush1.msra.mxu0 %v416
    %2065 = vmatprep.subr.mxu0 %v421
    %2066 = vmatpush1.msra.mxu0 %v420
    %2067 = vmatprep.subr.mxu0 %v425
    %2068 = vmatpush1.msra.mxu0 %v424
    %2069 = vmatprep.subr.mxu0 %v429
    %2070 = vmatpush1.msra.mxu0 %v428
    %2071 = vmatprep.subr.mxu0 %v433
    %2072 = vmatpush1.msra.mxu0 %v432
    %2073 = vmatprep.subr.mxu0 %v437
    %2074 = vmatpush1.msra.mxu0 %v436
    %2075 = vmatprep.subr.mxu0 %v441
    %2076 = vmatpush1.msra.mxu0 %v440
    %2077 = vmatprep.subr.mxu0 %v445
    %2078 = vmatpush1.msra.mxu0 %v444
    %2079 = vmatprep.subr.mxu0 %v449
    %2080 = vmatpush1.msra.mxu0 %v448
    %2081 = vmatprep.subr.mxu0 %v453
    %2082 = vmatpush1.msra.mxu0 %v452
    %2083 = vmatprep.subr.mxu0 %v457
    %2084 = vmatpush1.msra.mxu0 %v456
    %2085 = vmatprep.subr.mxu0 %v461
    %2086 = vmatpush1.msra.mxu0 %v460
    %2087 = vmatprep.subr.mxu0 %v465
    %2088 = vmatpush1.msra.mxu0 %v464
    %2089 = vmatprep.subr.mxu0 %v469
    %2090 = vmatpush1.msra.mxu0 %v468
    %2091 = vmatprep.subr.mxu0 0.0
    %2092 = vmatpush1.msra.mxu0 0.0
    %2093 = vmatprep.subr.mxu0 0.0
    %2094 = vmatpush1.msra.mxu0 0.0
    %2095 = vmatprep.subr.mxu0 0.0
    %2096 = vmatpush1.msra.mxu0 0.0
    %2097 = vmatprep.subr.mxu0 0.0
    %2098 = vmatpush1.msra.mxu0 0.0
    %2099 = vmatprep.subr.mxu0 0.0
    %2100 = vmatpush1.msra.mxu0 0.0
    %2101 = vmatprep.subr.mxu0 0.0
    %2102 = vmatpush1.msra.mxu0 0.0
    %2103 = vmatprep.subr.mxu0 0.0
    %2104 = vmatpush1.msra.mxu0 0.0
    %2105 = vmatprep.subr.mxu0 0.0
    %2106 = vmatpush1.msra.mxu0 0.0
    %2107 = vmatprep.subr.mxu0 0.0
    %2108 = vmatpush1.msra.mxu0 0.0
    %2109 = vmatprep.subr.mxu0 0.0
    %2110 = vmatpush1.msra.mxu0 0.0
    %2111 = vmatprep.subr.mxu0 0.0
    %2112 = vmatpush1.msra.mxu0 0.0
    %2113 = vmatprep.subr.mxu0 0.0
    %2114 = vmatpush1.msra.mxu0 0.0
    %2115 = vmatprep.subr.mxu0 0.0
    %2116 = vmatpush1.msra.mxu0 0.0
    %2117 = vmatprep.subr.mxu0 0.0
    %2118 = vmatpush1.msra.mxu0 0.0
    %2119 = vmatprep.subr.mxu0 0.0
    %2120 = vmatpush1.msra.mxu0 0.0
    %2121 = vmatprep.subr.mxu0 0.0
    %2122 = vmatpush1.msra.mxu0 0.0
    %2123 = vmatprep.mubr.f32.mxu0 0.0
    %2124 = vmatmul.mubr.f32.gmra.mrb[0].mxu0 %v1816
    %v2125 = vpop.f32.mrb[0].mxu0
    %v2126 = vadd.f32 0.0, %v2125
    %v2127 = vpop.f32.mrb[0].mxu0
    %v2128 = vadd.f32 0.0, %v2127
    %2129 = vdwg.mxu0
    %v2130 = vadd.f32 %v1984, %v2055
    %v2131 = vadd.f32 %v1985, %v2057
    %v2132 = vadd.f32 %v1986, %v2126
    %v2133 = vadd.f32 %v1987, %v2128
    %v2134 = vxor.u32 %v2130, 2147483648
    %v2135 = vmul.f32 %v2134, 1.442695
    %v2136 = vpow.pop %v2135
    %v2137 = vadd.f32 %v2136, 1.0
    %v2138 = vrcp.pop %v2137
    %v2139 = vmul.f32 1.0, %v2138
    %v2140 = vxor.u32 %v2131, 2147483648
    %v2141 = vmul.f32 %v2140, 1.442695
    %v2142 = vpow.pop %v2141
    %v2143 = vadd.f32 %v2142, 1.0
    %v2144 = vrcp.pop %v2143
    %v2145 = vmul.f32 1.0, %v2144
    %v2146 = vtanh.pop %v2132
    %v2147 = vxor.u32 %v2133, 2147483648
    %v2148 = vmul.f32 %v2147, 1.442695
    %v2149 = vpow.pop %v2148
    %v2150 = vadd.f32 %v2149, 1.0
    %v2151 = vrcp.pop %v2150
    %v2152 = vmul.f32 1.0, %v2151
    %v2153 = vmul.f32 %v2145, %v1814
    %v2154 = vmul.f32 %v2139, %v2146
    %v2155 = vadd.f32 %v2153, %v2154
    %v2156 = vtanh.pop %v2155
    %v2157 = vmul.f32 %v2152, %v2156
    %2158 = vmatprep.subr.mxu0 %v471
    %2159 = vmatpush1.msra.mxu0 %v470
    %2160 = vmatprep.subr.mxu0 %v475
    %2161 = vmatpush1.msra.mxu0 %v474
    %2162 = vmatprep.subr.mxu0 %v479
    %2163 = vmatpush1.msra.mxu0 %v478
    %2164 = vmatprep.subr.mxu0 %v483
    %2165 = vmatpush1.msra.mxu0 %v482
    %2166 = vmatprep.subr.mxu0 %v487
    %2167 = vmatpush1.msra.mxu0 %v486
    %2168 = vmatprep.subr.mxu0 %v491
    %2169 = vmatpush1.msra.mxu0 %v490
    %2170 = vmatprep.subr.mxu0 %v495
    %2171 = vmatpush1.msra.mxu0 %v494
    %2172 = vmatprep.subr.mxu0 %v499
    %2173 = vmatpush1.msra.mxu0 %v498
    %2174 = vmatprep.subr.mxu0 %v503
    %2175 = vmatpush1.msra.mxu0 %v502
    %2176 = vmatprep.subr.mxu0 %v507
    %2177 = vmatpush1.msra.mxu0 %v506
    %2178 = vmatprep.subr.mxu0 %v511
    %2179 = vmatpush1.msra.mxu0 %v510
    %2180 = vmatprep.subr.mxu0 %v515
    %2181 = vmatpush1.msra.mxu0 %v514
    %2182 = vmatprep.subr.mxu0 %v519
    %2183 = vmatpush1.msra.mxu0 %v518
    %2184 = vmatprep.subr.mxu0 %v523
    %2185 = vmatpush1.msra.mxu0 %v522
    %2186 = vmatprep.subr.mxu0 %v527
    %2187 = vmatpush1.msra.mxu0 %v526
    %2188 = vmatprep.subr.mxu0 %v531
    %2189 = vmatpush1.msra.mxu0 %v530
    %2190 = vmatprep.subr.mxu0 %v535
    %2191 = vmatpush1.msra.mxu0 %v534
    %2192 = vmatprep.subr.mxu0 %v539
    %2193 = vmatpush1.msra.mxu0 %v538
    %2194 = vmatprep.subr.mxu0 %v543
    %2195 = vmatpush1.msra.mxu0 %v542
    %2196 = vmatprep.subr.mxu0 %v547
    %2197 = vmatpush1.msra.mxu0 %v546
    %2198 = vmatprep.subr.mxu0 %v551
    %2199 = vmatpush1.msra.mxu0 %v550
    %2200 = vmatprep.subr.mxu0 %v555
    %2201 = vmatpush1.msra.mxu0 %v554
    %2202 = vmatprep.subr.mxu0 %v559
    %2203 = vmatpush1.msra.mxu0 %v558
    %2204 = vmatprep.subr.mxu0 %v563
    %2205 = vmatpush1.msra.mxu0 %v562
    %2206 = vmatprep.subr.mxu0 %v567
    %2207 = vmatpush1.msra.mxu0 %v566
    %2208 = vmatprep.subr.mxu0 %v571
    %2209 = vmatpush1.msra.mxu0 %v570
    %2210 = vmatprep.subr.mxu0 %v575
    %2211 = vmatpush1.msra.mxu0 %v574
    %2212 = vmatprep.subr.mxu0 %v579
    %2213 = vmatpush1.msra.mxu0 %v578
    %2214 = vmatprep.subr.mxu0 %v583
    %2215 = vmatpush1.msra.mxu0 %v582
    %2216 = vmatprep.subr.mxu0 %v587
    %2217 = vmatpush1.msra.mxu0 %v586
    %2218 = vmatprep.subr.mxu0 %v591
    %2219 = vmatpush1.msra.mxu0 %v590
    %2220 = vmatprep.subr.mxu0 %v595
    %2221 = vmatpush1.msra.mxu0 %v594
    %2222 = vmatprep.mubr.f32.mxu0 %v1982
    %2223 = vmatmul.mubr.f32.gmra.mrb[0].mxu0 %v2157
    %v2224 = vpop.f32.mrb[0].mxu0
    %v2225 = vadd.f32 %v603, %v2224
    %v2226 = vpop.f32.mrb[0].mxu0
    %v2227 = vadd.f32 %v607, %v2226
    %2228 = vdwg.mxu0
    %2229 = vmatprep.subr.mxu0 %v473
    %2230 = vmatpush1.msra.mxu0 %v472
    %2231 = vmatprep.subr.mxu0 %v477
    %2232 = vmatpush1.msra.mxu0 %v476
    %2233 = vmatprep.subr.mxu0 %v481
    %2234 = vmatpush1.msra.mxu0 %v480
    %2235 = vmatprep.subr.mxu0 %v485
    %2236 = vmatpush1.msra.mxu0 %v484
    %2237 = vmatprep.subr.mxu0 %v489
    %2238 = vmatpush1.msra.mxu0 %v488
    %2239 = vmatprep.subr.mxu0 %v493
    %2240 = vmatpush1.msra.mxu0 %v492
    %2241 = vmatprep.subr.mxu0 %v497
    %2242 = vmatpush1.msra.mxu0 %v496
    %2243 = vmatprep.subr.mxu0 %v501
    %2244 = vmatpush1.msra.mxu0 %v500
    %2245 = vmatprep.subr.mxu0 %v505
    %2246 = vmatpush1.msra.mxu0 %v504
    %2247 = vmatprep.subr.mxu0 %v509
    %2248 = vmatpush1.msra.mxu0 %v508
    %2249 = vmatprep.subr.mxu0 %v513
    %2250 = vmatpush1.msra.mxu0 %v512
    %2251 = vmatprep.subr.mxu0 %v517
    %2252 = vmatpush1.msra.mxu0 %v516
    %2253 = vmatprep.subr.mxu0 %v521
    %2254 = vmatpush1.msra.mxu0 %v520
    %2255 = vmatprep.subr.mxu0 %v525
    %2256 = vmatpush1.msra.mxu0 %v524
    %2257 = vmatprep.subr.mxu0 %v529
    %2258 = vmatpush1.msra.mxu0 %v528
    %2259 = vmatprep.subr.mxu0 %v533
    %2260 = vmatpush1.msra.mxu0 %v532
    %2261 = vmatprep.subr.mxu0 %v537
    %2262 = vmatpush1.msra.mxu0 %v536
    %2263 = vmatprep.subr.mxu0 %v541
    %2264 = vmatpush1.msra.mxu0 %v540
    %2265 = vmatprep.subr.mxu0 %v545
    %2266 = vmatpush1.msra.mxu0 %v544
    %2267 = vmatprep.subr.mxu0 %v549
    %2268 = vmatpush1.msra.mxu0 %v548
    %2269 = vmatprep.subr.mxu0 %v553
    %2270 = vmatpush1.msra.mxu0 %v552
    %2271 = vmatprep.subr.mxu0 %v557
    %2272 = vmatpush1.msra.mxu0 %v556
    %2273 = vmatprep.subr.mxu0 %v561
    %2274 = vmatpush1.msra.mxu0 %v560
    %2275 = vmatprep.subr.mxu0 %v565
    %2276 = vmatpush1.msra.mxu0 %v564
    %2277 = vmatprep.subr.mxu0 %v569
    %2278 = vmatpush1.msra.mxu0 %v568
    %2279 = vmatprep.subr.mxu0 %v573
    %2280 = vmatpush1.msra.mxu0 %v572
    %2281 = vmatprep.subr.mxu0 %v577
    %2282 = vmatpush1.msra.mxu0 %v576
    %2283 = vmatprep.subr.mxu0 %v581
    %2284 = vmatpush1.msra.mxu0 %v580
    %2285 = vmatprep.subr.mxu0 %v585
    %2286 = vmatpush1.msra.mxu0 %v584
    %2287 = vmatprep.subr.mxu0 %v589
    %2288 = vmatpush1.msra.mxu0 %v588
    %2289 = vmatprep.subr.mxu0 %v593
    %2290 = vmatpush1.msra.mxu0 %v592
    %2291 = vmatprep.subr.mxu0 %v597
    %2292 = vmatpush1.msra.mxu0 %v596
    %2293 = vmatprep.mubr.f32.mxu0 %v1982
    %2294 = vmatmul.mubr.f32.gmra.mrb[0].mxu0 %v2157
    %v2295 = vpop.f32.mrb[0].mxu0
    %v2296 = vadd.f32 %v611, %v2295
    %v2297 = vpop.f32.mrb[0].mxu0
    %v2298 = vadd.f32 %v615, %v2297
    %2299 = vdwg.mxu0
    %v2300 = vxor.u32 %v2225, 2147483648
    %v2301 = vmul.f32 %v2300, 1.442695
    %v2302 = vpow.pop %v2301
    %v2303 = vadd.f32 %v2302, 1.0
    %v2304 = vrcp.pop %v2303
    %v2305 = vmul.f32 1.0, %v2304
    %v2306 = vxor.u32 %v2227, 2147483648
    %v2307 = vmul.f32 %v2306, 1.442695
    %v2308 = vpow.pop %v2307
    %v2309 = vadd.f32 %v2308, 1.0
    %v2310 = vrcp.pop %v2309
    %v2311 = vmul.f32 1.0, %v2310
    %v2312 = vtanh.pop %v2296
    %v2313 = vxor.u32 %v2298, 2147483648
    %v2314 = vmul.f32 %v2313, 1.442695
    %v2315 = vpow.pop %v2314
    %v2316 = vadd.f32 %v2315, 1.0
    %v2317 = vrcp.pop %v2316
    %v2318 = vmul.f32 1.0, %v2317
    %v2319 = vmul.f32 %v2311, %v1980
    %v2320 = vmul.f32 %v2305, %v2312
    %v2321 = vadd.f32 %v2319, %v2320
    %v2322 = vtanh.pop %v2321
    %v2323 = vmul.f32 %v2318, %v2322
    %s2324 = scalar_lea.vmem [#allocation2], 160
    %v2325 = vld [vmem:[%s2324] sm:$0xff]
    %v2326 = vld [vmem:[%s2324 + $0x8] sm:$0xff]
    %v2327 = vld [vmem:[%s2324 + $0x10] sm:$0xff]
    %v2328 = vld [vmem:[%s2324 + $0x18] sm:$0xff]
    %2329 = vmatprep.subr.mxu0 %v407
    %2330 = vmatpush1.msra.mxu0 %v406
    %2331 = vmatprep.subr.mxu0 %v411
    %2332 = vmatpush1.msra.mxu0 %v410
    %2333 = vmatprep.subr.mxu0 %v415
    %2334 = vmatpush1.msra.mxu0 %v414
    %2335 = vmatprep.subr.mxu0 %v419
    %2336 = vmatpush1.msra.mxu0 %v418
    %2337 = vmatprep.subr.mxu0 %v423
    %2338 = vmatpush1.msra.mxu0 %v422
    %2339 = vmatprep.subr.mxu0 %v427
    %2340 = vmatpush1.msra.mxu0 %v426
    %2341 = vmatprep.subr.mxu0 %v431
    %2342 = vmatpush1.msra.mxu0 %v430
    %2343 = vmatprep.subr.mxu0 %v435
    %2344 = vmatpush1.msra.mxu0 %v434
    %2345 = vmatprep.subr.mxu0 %v439
    %2346 = vmatpush1.msra.mxu0 %v438
    %2347 = vmatprep.subr.mxu0 %v443
    %2348 = vmatpush1.msra.mxu0 %v442
    %2349 = vmatprep.subr.mxu0 %v447
    %2350 = vmatpush1.msra.mxu0 %v446
    %2351 = vmatprep.subr.mxu0 %v451
    %2352 = vmatpush1.msra.mxu0 %v450
    %2353 = vmatprep.subr.mxu0 %v455
    %2354 = vmatpush1.msra.mxu0 %v454
    %2355 = vmatprep.subr.mxu0 %v459
    %2356 = vmatpush1.msra.mxu0 %v458
    %2357 = vmatprep.subr.mxu0 %v463
    %2358 = vmatpush1.msra.mxu0 %v462
    %2359 = vmatprep.subr.mxu0 %v467
    %2360 = vmatpush1.msra.mxu0 %v466
    %2361 = vmatprep.subr.mxu0 0.0
    %2362 = vmatpush1.msra.mxu0 0.0
    %2363 = vmatprep.subr.mxu0 0.0
    %2364 = vmatpush1.msra.mxu0 0.0
    %2365 = vmatprep.subr.mxu0 0.0
    %2366 = vmatpush1.msra.mxu0 0.0
    %2367 = vmatprep.subr.mxu0 0.0
    %2368 = vmatpush1.msra.mxu0 0.0
    %2369 = vmatprep.subr.mxu0 0.0
    %2370 = vmatpush1.msra.mxu0 0.0
    %2371 = vmatprep.subr.mxu0 0.0
    %2372 = vmatpush1.msra.mxu0 0.0
    %2373 = vmatprep.subr.mxu0 0.0
    %2374 = vmatpush1.msra.mxu0 0.0
    %2375 = vmatprep.subr.mxu0 0.0
    %2376 = vmatpush1.msra.mxu0 0.0
    %2377 = vmatprep.subr.mxu0 0.0
    %2378 = vmatpush1.msra.mxu0 0.0
    %2379 = vmatprep.subr.mxu0 0.0
    %2380 = vmatpush1.msra.mxu0 0.0
    %2381 = vmatprep.subr.mxu0 0.0
    %2382 = vmatpush1.msra.mxu0 0.0
    %2383 = vmatprep.subr.mxu0 0.0
    %2384 = vmatpush1.msra.mxu0 0.0
    %2385 = vmatprep.subr.mxu0 0.0
    %2386 = vmatpush1.msra.mxu0 0.0
    %2387 = vmatprep.subr.mxu0 0.0
    %2388 = vmatpush1.msra.mxu0 0.0
    %2389 = vmatprep.subr.mxu0 0.0
    %2390 = vmatpush1.msra.mxu0 0.0
    %2391 = vmatprep.subr.mxu0 0.0
    %2392 = vmatpush1.msra.mxu0 0.0
    %2393 = vmatprep.mubr.f32.mxu0 0.0
    %2394 = vmatmul.mubr.f32.gmra.mrb[0].mxu0 %v2157
    %v2395 = vpop.f32.mrb[0].mxu0
    %v2396 = vadd.f32 0.0, %v2395
    %v2397 = vpop.f32.mrb[0].mxu0
    %v2398 = vadd.f32 0.0, %v2397
    %2399 = vdwg.mxu0
    %2400 = vmatprep.subr.mxu0 %v409
    %2401 = vmatpush1.msra.mxu0 %v408
    %2402 = vmatprep.subr.mxu0 %v413
    %2403 = vmatpush1.msra.mxu0 %v412
    %2404 = vmatprep.subr.mxu0 %v417
    %2405 = vmatpush1.msra.mxu0 %v416
    %2406 = vmatprep.subr.mxu0 %v421
    %2407 = vmatpush1.msra.mxu0 %v420
    %2408 = vmatprep.subr.mxu0 %v425
    %2409 = vmatpush1.msra.mxu0 %v424
    %2410 = vmatprep.subr.mxu0 %v429
    %2411 = vmatpush1.msra.mxu0 %v428
    %2412 = vmatprep.subr.mxu0 %v433
    %2413 = vmatpush1.msra.mxu0 %v432
    %2414 = vmatprep.subr.mxu0 %v437
    %2415 = vmatpush1.msra.mxu0 %v436
    %2416 = vmatprep.subr.mxu0 %v441
    %2417 = vmatpush1.msra.mxu0 %v440
    %2418 = vmatprep.subr.mxu0 %v445
    %2419 = vmatpush1.msra.mxu0 %v444
    %2420 = vmatprep.subr.mxu0 %v449
    %2421 = vmatpush1.msra.mxu0 %v448
    %2422 = vmatprep.subr.mxu0 %v453
    %2423 = vmatpush1.msra.mxu0 %v452
    %2424 = vmatprep.subr.mxu0 %v457
    %2425 = vmatpush1.msra.mxu0 %v456
    %2426 = vmatprep.subr.mxu0 %v461
    %2427 = vmatpush1.msra.mxu0 %v460
    %2428 = vmatprep.subr.mxu0 %v465
    %2429 = vmatpush1.msra.mxu0 %v464
    %2430 = vmatprep.subr.mxu0 %v469
    %2431 = vmatpush1.msra.mxu0 %v468
    %2432 = vmatprep.subr.mxu0 0.0
    %2433 = vmatpush1.msra.mxu0 0.0
    %2434 = vmatprep.subr.mxu0 0.0
    %2435 = vmatpush1.msra.mxu0 0.0
    %2436 = vmatprep.subr.mxu0 0.0
    %2437 = vmatpush1.msra.mxu0 0.0
    %2438 = vmatprep.subr.mxu0 0.0
    %2439 = vmatpush1.msra.mxu0 0.0
    %2440 = vmatprep.subr.mxu0 0.0
    %2441 = vmatpush1.msra.mxu0 0.0
    %2442 = vmatprep.subr.mxu0 0.0
    %2443 = vmatpush1.msra.mxu0 0.0
    %2444 = vmatprep.subr.mxu0 0.0
    %2445 = vmatpush1.msra.mxu0 0.0
    %2446 = vmatprep.subr.mxu0 0.0
    %2447 = vmatpush1.msra.mxu0 0.0
    %2448 = vmatprep.subr.mxu0 0.0
    %2449 = vmatpush1.msra.mxu0 0.0
    %2450 = vmatprep.subr.mxu0 0.0
    %2451 = vmatpush1.msra.mxu0 0.0
    %2452 = vmatprep.subr.mxu0 0.0
    %2453 = vmatpush1.msra.mxu0 0.0
    %2454 = vmatprep.subr.mxu0 0.0
    %2455 = vmatpush1.msra.mxu0 0.0
    %2456 = vmatprep.subr.mxu0 0.0
    %2457 = vmatpush1.msra.mxu0 0.0
    %2458 = vmatprep.subr.mxu0 0.0
    %2459 = vmatpush1.msra.mxu0 0.0
    %2460 = vmatprep.subr.mxu0 0.0
    %2461 = vmatpush1.msra.mxu0 0.0
    %2462 = vmatprep.subr.mxu0 0.0
    %2463 = vmatpush1.msra.mxu0 0.0
    %2464 = vmatprep.mubr.f32.mxu0 0.0
    %2465 = vmatmul.mubr.f32.gmra.mrb[0].mxu0 %v2157
    %v2466 = vpop.f32.mrb[0].mxu0
    %v2467 = vadd.f32 0.0, %v2466
    %v2468 = vpop.f32.mrb[0].mxu0
    %v2469 = vadd.f32 0.0, %v2468
    %2470 = vdwg.mxu0
    %v2471 = vadd.f32 %v2325, %v2396
    %v2472 = vadd.f32 %v2326, %v2398
    %v2473 = vadd.f32 %v2327, %v2467
    %v2474 = vadd.f32 %v2328, %v2469
    %v2475 = vxor.u32 %v2471, 2147483648
    %v2476 = vmul.f32 %v2475, 1.442695
    %v2477 = vpow.pop %v2476
    %v2478 = vadd.f32 %v2477, 1.0
    %v2479 = vrcp.pop %v2478
    %v2480 = vmul.f32 1.0, %v2479
    %v2481 = vxor.u32 %v2472, 2147483648
    %v2482 = vmul.f32 %v2481, 1.442695
    %v2483 = vpow.pop %v2482
    %v2484 = vadd.f32 %v2483, 1.0
    %v2485 = vrcp.pop %v2484
    %v2486 = vmul.f32 1.0, %v2485
    %v2487 = vtanh.pop %v2473
    %v2488 = vxor.u32 %v2474, 2147483648
    %v2489 = vmul.f32 %v2488, 1.442695
    %v2490 = vpow.pop %v2489
    %v2491 = vadd.f32 %v2490, 1.0
    %v2492 = vrcp.pop %v2491
    %v2493 = vmul.f32 1.0, %v2492
    %v2494 = vmul.f32 %v2486, %v2155
    %v2495 = vmul.f32 %v2480, %v2487
    %v2496 = vadd.f32 %v2494, %v2495
    %v2497 = vtanh.pop %v2496
    %v2498 = vmul.f32 %v2493, %v2497
    %2499 = vmatprep.subr.mxu0 %v471
    %2500 = vmatpush1.msra.mxu0 %v470
    %2501 = vmatprep.subr.mxu0 %v475
    %2502 = vmatpush1.msra.mxu0 %v474
    %2503 = vmatprep.subr.mxu0 %v479
    %2504 = vmatpush1.msra.mxu0 %v478
    %2505 = vmatprep.subr.mxu0 %v483
    %2506 = vmatpush1.msra.mxu0 %v482
    %2507 = vmatprep.subr.mxu0 %v487
    %2508 = vmatpush1.msra.mxu0 %v486
    %2509 = vmatprep.subr.mxu0 %v491
    %2510 = vmatpush1.msra.mxu0 %v490
    %2511 = vmatprep.subr.mxu0 %v495
    %2512 = vmatpush1.msra.mxu0 %v494
    %2513 = vmatprep.subr.mxu0 %v499
    %2514 = vmatpush1.msra.mxu0 %v498
    %2515 = vmatprep.subr.mxu0 %v503
    %2516 = vmatpush1.msra.mxu0 %v502
    %2517 = vmatprep.subr.mxu0 %v507
    %2518 = vmatpush1.msra.mxu0 %v506
    %2519 = vmatprep.subr.mxu0 %v511
    %2520 = vmatpush1.msra.mxu0 %v510
    %2521 = vmatprep.subr.mxu0 %v515
    %2522 = vmatpush1.msra.mxu0 %v514
    %2523 = vmatprep.subr.mxu0 %v519
    %2524 = vmatpush1.msra.mxu0 %v518
    %2525 = vmatprep.subr.mxu0 %v523
    %2526 = vmatpush1.msra.mxu0 %v522
    %2527 = vmatprep.subr.mxu0 %v527
    %2528 = vmatpush1.msra.mxu0 %v526
    %2529 = vmatprep.subr.mxu0 %v531
    %2530 = vmatpush1.msra.mxu0 %v530
    %2531 = vmatprep.subr.mxu0 %v535
    %2532 = vmatpush1.msra.mxu0 %v534
    %2533 = vmatprep.subr.mxu0 %v539
    %2534 = vmatpush1.msra.mxu0 %v538
    %2535 = vmatprep.subr.mxu0 %v543
    %2536 = vmatpush1.msra.mxu0 %v542
    %2537 = vmatprep.subr.mxu0 %v547
    %2538 = vmatpush1.msra.mxu0 %v546
    %2539 = vmatprep.subr.mxu0 %v551
    %2540 = vmatpush1.msra.mxu0 %v550
    %2541 = vmatprep.subr.mxu0 %v555
    %2542 = vmatpush1.msra.mxu0 %v554
    %2543 = vmatprep.subr.mxu0 %v559
    %2544 = vmatpush1.msra.mxu0 %v558
    %2545 = vmatprep.subr.mxu0 %v563
    %2546 = vmatpush1.msra.mxu0 %v562
    %2547 = vmatprep.subr.mxu0 %v567
    %2548 = vmatpush1.msra.mxu0 %v566
    %2549 = vmatprep.subr.mxu0 %v571
    %2550 = vmatpush1.msra.mxu0 %v570
    %2551 = vmatprep.subr.mxu0 %v575
    %2552 = vmatpush1.msra.mxu0 %v574
    %2553 = vmatprep.subr.mxu0 %v579
    %2554 = vmatpush1.msra.mxu0 %v578
    %2555 = vmatprep.subr.mxu0 %v583
    %2556 = vmatpush1.msra.mxu0 %v582
    %2557 = vmatprep.subr.mxu0 %v587
    %2558 = vmatpush1.msra.mxu0 %v586
    %2559 = vmatprep.subr.mxu0 %v591
    %2560 = vmatpush1.msra.mxu0 %v590
    %2561 = vmatprep.subr.mxu0 %v595
    %2562 = vmatpush1.msra.mxu0 %v594
    %2563 = vmatprep.mubr.f32.mxu0 %v2323
    %2564 = vmatmul.mubr.f32.gmra.mrb[0].mxu0 %v2498
    %v2565 = vpop.f32.mrb[0].mxu0
    %v2566 = vadd.f32 %v603, %v2565
    %v2567 = vpop.f32.mrb[0].mxu0
    %v2568 = vadd.f32 %v607, %v2567
    %2569 = vdwg.mxu0
    %2570 = vmatprep.subr.mxu0 %v473
    %2571 = vmatpush1.msra.mxu0 %v472
    %2572 = vmatprep.subr.mxu0 %v477
    %2573 = vmatpush1.msra.mxu0 %v476
    %2574 = vmatprep.subr.mxu0 %v481
    %2575 = vmatpush1.msra.mxu0 %v480
    %2576 = vmatprep.subr.mxu0 %v485
    %2577 = vmatpush1.msra.mxu0 %v484
    %2578 = vmatprep.subr.mxu0 %v489
    %2579 = vmatpush1.msra.mxu0 %v488
    %2580 = vmatprep.subr.mxu0 %v493
    %2581 = vmatpush1.msra.mxu0 %v492
    %2582 = vmatprep.subr.mxu0 %v497
    %2583 = vmatpush1.msra.mxu0 %v496
    %2584 = vmatprep.subr.mxu0 %v501
    %2585 = vmatpush1.msra.mxu0 %v500
    %2586 = vmatprep.subr.mxu0 %v505
    %2587 = vmatpush1.msra.mxu0 %v504
    %2588 = vmatprep.subr.mxu0 %v509
    %2589 = vmatpush1.msra.mxu0 %v508
    %2590 = vmatprep.subr.mxu0 %v513
    %2591 = vmatpush1.msra.mxu0 %v512
    %2592 = vmatprep.subr.mxu0 %v517
    %2593 = vmatpush1.msra.mxu0 %v516
    %2594 = vmatprep.subr.mxu0 %v521
    %2595 = vmatpush1.msra.mxu0 %v520
    %2596 = vmatprep.subr.mxu0 %v525
    %2597 = vmatpush1.msra.mxu0 %v524
    %2598 = vmatprep.subr.mxu0 %v529
    %2599 = vmatpush1.msra.mxu0 %v528
    %2600 = vmatprep.subr.mxu0 %v533
    %2601 = vmatpush1.msra.mxu0 %v532
    %2602 = vmatprep.subr.mxu0 %v537
    %2603 = vmatpush1.msra.mxu0 %v536
    %2604 = vmatprep.subr.mxu0 %v541
    %2605 = vmatpush1.msra.mxu0 %v540
    %2606 = vmatprep.subr.mxu0 %v545
    %2607 = vmatpush1.msra.mxu0 %v544
    %2608 = vmatprep.subr.mxu0 %v549
    %2609 = vmatpush1.msra.mxu0 %v548
    %2610 = vmatprep.subr.mxu0 %v553
    %2611 = vmatpush1.msra.mxu0 %v552
    %2612 = vmatprep.subr.mxu0 %v557
    %2613 = vmatpush1.msra.mxu0 %v556
    %2614 = vmatprep.subr.mxu0 %v561
    %2615 = vmatpush1.msra.mxu0 %v560
    %2616 = vmatprep.subr.mxu0 %v565
    %2617 = vmatpush1.msra.mxu0 %v564
    %2618 = vmatprep.subr.mxu0 %v569
    %2619 = vmatpush1.msra.mxu0 %v568
    %2620 = vmatprep.subr.mxu0 %v573
    %2621 = vmatpush1.msra.mxu0 %v572
    %2622 = vmatprep.subr.mxu0 %v577
    %2623 = vmatpush1.msra.mxu0 %v576
    %2624 = vmatprep.subr.mxu0 %v581
    %2625 = vmatpush1.msra.mxu0 %v580
    %2626 = vmatprep.subr.mxu0 %v585
    %2627 = vmatpush1.msra.mxu0 %v584
    %2628 = vmatprep.subr.mxu0 %v589
    %2629 = vmatpush1.msra.mxu0 %v588
    %2630 = vmatprep.subr.mxu0 %v593
    %2631 = vmatpush1.msra.mxu0 %v592
    %2632 = vmatprep.subr.mxu0 %v597
    %2633 = vmatpush1.msra.mxu0 %v596
    %2634 = vmatprep.mubr.f32.mxu0 %v2323
    %2635 = vmatmul.mubr.f32.gmra.mrb[0].mxu0 %v2498
    %v2636 = vpop.f32.mrb[0].mxu0
    %v2637 = vadd.f32 %v611, %v2636
    %v2638 = vpop.f32.mrb[0].mxu0
    %v2639 = vadd.f32 %v615, %v2638
    %2640 = vdwg.mxu0
    %v2641 = vxor.u32 %v2566, 2147483648
    %v2642 = vmul.f32 %v2641, 1.442695
    %v2643 = vpow.pop %v2642
    %v2644 = vadd.f32 %v2643, 1.0
    %v2645 = vrcp.pop %v2644
    %v2646 = vmul.f32 1.0, %v2645
    %v2647 = vxor.u32 %v2568, 2147483648
    %v2648 = vmul.f32 %v2647, 1.442695
    %v2649 = vpow.pop %v2648
    %v2650 = vadd.f32 %v2649, 1.0
    %v2651 = vrcp.pop %v2650
    %v2652 = vmul.f32 1.0, %v2651
    %v2653 = vtanh.pop %v2637
    %v2654 = vxor.u32 %v2639, 2147483648
    %v2655 = vmul.f32 %v2654, 1.442695
    %v2656 = vpow.pop %v2655
    %v2657 = vadd.f32 %v2656, 1.0
    %v2658 = vrcp.pop %v2657
    %v2659 = vmul.f32 1.0, %v2658
    %v2660 = vmul.f32 %v2652, %v2321
    %v2661 = vmul.f32 %v2646, %v2653
    %v2662 = vadd.f32 %v2660, %v2661
    %v2663 = vtanh.pop %v2662
    %v2664 = vmul.f32 %v2659, %v2663
    %s2665 = scalar_lea.vmem [#allocation2], 192
    %v2666 = vld [vmem:[%s2665] sm:$0xff]
    %v2667 = vld [vmem:[%s2665 + $0x8] sm:$0xff]
    %v2668 = vld [vmem:[%s2665 + $0x10] sm:$0xff]
    %v2669 = vld [vmem:[%s2665 + $0x18] sm:$0xff]
    %2670 = vmatprep.subr.mxu0 %v407
    %2671 = vmatpush1.msra.mxu0 %v406
    %2672 = vmatprep.subr.mxu0 %v411
    %2673 = vmatpush1.msra.mxu0 %v410
    %2674 = vmatprep.subr.mxu0 %v415
    %2675 = vmatpush1.msra.mxu0 %v414
    %2676 = vmatprep.subr.mxu0 %v419
    %2677 = vmatpush1.msra.mxu0 %v418
    %2678 = vmatprep.subr.mxu0 %v423
    %2679 = vmatpush1.msra.mxu0 %v422
    %2680 = vmatprep.subr.mxu0 %v427
    %2681 = vmatpush1.msra.mxu0 %v426
    %2682 = vmatprep.subr.mxu0 %v431
    %2683 = vmatpush1.msra.mxu0 %v430
    %2684 = vmatprep.subr.mxu0 %v435
    %2685 = vmatpush1.msra.mxu0 %v434
    %2686 = vmatprep.subr.mxu0 %v439
    %2687 = vmatpush1.msra.mxu0 %v438
    %2688 = vmatprep.subr.mxu0 %v443
    %2689 = vmatpush1.msra.mxu0 %v442
    %2690 = vmatprep.subr.mxu0 %v447
    %2691 = vmatpush1.msra.mxu0 %v446
    %2692 = vmatprep.subr.mxu0 %v451
    %2693 = vmatpush1.msra.mxu0 %v450
    %2694 = vmatprep.subr.mxu0 %v455
    %2695 = vmatpush1.msra.mxu0 %v454
    %2696 = vmatprep.subr.mxu0 %v459
    %2697 = vmatpush1.msra.mxu0 %v458
    %2698 = vmatprep.subr.mxu0 %v463
    %2699 = vmatpush1.msra.mxu0 %v462
    %2700 = vmatprep.subr.mxu0 %v467
    %2701 = vmatpush1.msra.mxu0 %v466
    %2702 = vmatprep.subr.mxu0 0.0
    %2703 = vmatpush1.msra.mxu0 0.0
    %2704 = vmatprep.subr.mxu0 0.0
    %2705 = vmatpush1.msra.mxu0 0.0
    %2706 = vmatprep.subr.mxu0 0.0
    %2707 = vmatpush1.msra.mxu0 0.0
    %2708 = vmatprep.subr.mxu0 0.0
    %2709 = vmatpush1.msra.mxu0 0.0
    %2710 = vmatprep.subr.mxu0 0.0
    %2711 = vmatpush1.msra.mxu0 0.0
    %2712 = vmatprep.subr.mxu0 0.0
    %2713 = vmatpush1.msra.mxu0 0.0
    %2714 = vmatprep.subr.mxu0 0.0
    %2715 = vmatpush1.msra.mxu0 0.0
    %2716 = vmatprep.subr.mxu0 0.0
    %2717 = vmatpush1.msra.mxu0 0.0
    %2718 = vmatprep.subr.mxu0 0.0
    %2719 = vmatpush1.msra.mxu0 0.0
    %2720 = vmatprep.subr.mxu0 0.0
    %2721 = vmatpush1.msra.mxu0 0.0
    %2722 = vmatprep.subr.mxu0 0.0
    %2723 = vmatpush1.msra.mxu0 0.0
    %2724 = vmatprep.subr.mxu0 0.0
    %2725 = vmatpush1.msra.mxu0 0.0
    %2726 = vmatprep.subr.mxu0 0.0
    %2727 = vmatpush1.msra.mxu0 0.0
    %2728 = vmatprep.subr.mxu0 0.0
    %2729 = vmatpush1.msra.mxu0 0.0
    %2730 = vmatprep.subr.mxu0 0.0
    %2731 = vmatpush1.msra.mxu0 0.0
    %2732 = vmatprep.subr.mxu0 0.0
    %2733 = vmatpush1.msra.mxu0 0.0
    %2734 = vmatprep.mubr.f32.mxu0 0.0
    %2735 = vmatmul.mubr.f32.gmra.mrb[0].mxu0 %v2498
    %v2736 = vpop.f32.mrb[0].mxu0
    %v2737 = vadd.f32 0.0, %v2736
    %v2738 = vpop.f32.mrb[0].mxu0
    %v2739 = vadd.f32 0.0, %v2738
    %2740 = vdwg.mxu0
    %2741 = vmatprep.subr.mxu0 %v409
    %2742 = vmatpush1.msra.mxu0 %v408
    %2743 = vmatprep.subr.mxu0 %v413
    %2744 = vmatpush1.msra.mxu0 %v412
    %2745 = vmatprep.subr.mxu0 %v417
    %2746 = vmatpush1.msra.mxu0 %v416
    %2747 = vmatprep.subr.mxu0 %v421
    %2748 = vmatpush1.msra.mxu0 %v420
    %2749 = vmatprep.subr.mxu0 %v425
    %2750 = vmatpush1.msra.mxu0 %v424
    %2751 = vmatprep.subr.mxu0 %v429
    %2752 = vmatpush1.msra.mxu0 %v428
    %2753 = vmatprep.subr.mxu0 %v433
    %2754 = vmatpush1.msra.mxu0 %v432
    %2755 = vmatprep.subr.mxu0 %v437
    %2756 = vmatpush1.msra.mxu0 %v436
    %2757 = vmatprep.subr.mxu0 %v441
    %2758 = vmatpush1.msra.mxu0 %v440
    %2759 = vmatprep.subr.mxu0 %v445
    %2760 = vmatpush1.msra.mxu0 %v444
    %2761 = vmatprep.subr.mxu0 %v449
    %2762 = vmatpush1.msra.mxu0 %v448
    %2763 = vmatprep.subr.mxu0 %v453
    %2764 = vmatpush1.msra.mxu0 %v452
    %2765 = vmatprep.subr.mxu0 %v457
    %2766 = vmatpush1.msra.mxu0 %v456
    %2767 = vmatprep.subr.mxu0 %v461
    %2768 = vmatpush1.msra.mxu0 %v460
    %2769 = vmatprep.subr.mxu0 %v465
    %2770 = vmatpush1.msra.mxu0 %v464
    %2771 = vmatprep.subr.mxu0 %v469
    %2772 = vmatpush1.msra.mxu0 %v468
    %2773 = vmatprep.subr.mxu0 0.0
    %2774 = vmatpush1.msra.mxu0 0.0
    %2775 = vmatprep.subr.mxu0 0.0
    %2776 = vmatpush1.msra.mxu0 0.0
    %2777 = vmatprep.subr.mxu0 0.0
    %2778 = vmatpush1.msra.mxu0 0.0
    %2779 = vmatprep.subr.mxu0 0.0
    %2780 = vmatpush1.msra.mxu0 0.0
    %2781 = vmatprep.subr.mxu0 0.0
    %2782 = vmatpush1.msra.mxu0 0.0
    %2783 = vmatprep.subr.mxu0 0.0
    %2784 = vmatpush1.msra.mxu0 0.0
    %2785 = vmatprep.subr.mxu0 0.0
    %2786 = vmatpush1.msra.mxu0 0.0
    %2787 = vmatprep.subr.mxu0 0.0
    %2788 = vmatpush1.msra.mxu0 0.0
    %2789 = vmatprep.subr.mxu0 0.0
    %2790 = vmatpush1.msra.mxu0 0.0
    %2791 = vmatprep.subr.mxu0 0.0
    %2792 = vmatpush1.msra.mxu0 0.0
    %2793 = vmatprep.subr.mxu0 0.0
    %2794 = vmatpush1.msra.mxu0 0.0
    %2795 = vmatprep.subr.mxu0 0.0
    %2796 = vmatpush1.msra.mxu0 0.0
    %2797 = vmatprep.subr.mxu0 0.0
    %2798 = vmatpush1.msra.mxu0 0.0
    %2799 = vmatprep.subr.mxu0 0.0
    %2800 = vmatpush1.msra.mxu0 0.0
    %2801 = vmatprep.subr.mxu0 0.0
    %2802 = vmatpush1.msra.mxu0 0.0
    %2803 = vmatprep.subr.mxu0 0.0
    %2804 = vmatpush1.msra.mxu0 0.0
    %2805 = vmatprep.mubr.f32.mxu0 0.0
    %2806 = vmatmul.mubr.f32.gmra.mrb[0].mxu0 %v2498
    %v2807 = vpop.f32.mrb[0].mxu0
    %v2808 = vadd.f32 0.0, %v2807
    %v2809 = vpop.f32.mrb[0].mxu0
    %v2810 = vadd.f32 0.0, %v2809
    %2811 = vdwg.mxu0
    %v2812 = vadd.f32 %v2666, %v2737
    %v2813 = vadd.f32 %v2667, %v2739
    %v2814 = vadd.f32 %v2668, %v2808
    %v2815 = vadd.f32 %v2669, %v2810
    %v2816 = vxor.u32 %v2812, 2147483648
    %v2817 = vmul.f32 %v2816, 1.442695
    %v2818 = vpow.pop %v2817
    %v2819 = vadd.f32 %v2818, 1.0
    %v2820 = vrcp.pop %v2819
    %v2821 = vmul.f32 1.0, %v2820
    %v2822 = vxor.u32 %v2813, 2147483648
    %v2823 = vmul.f32 %v2822, 1.442695
    %v2824 = vpow.pop %v2823
    %v2825 = vadd.f32 %v2824, 1.0
    %v2826 = vrcp.pop %v2825
    %v2827 = vmul.f32 1.0, %v2826
    %v2828 = vtanh.pop %v2814
    %v2829 = vxor.u32 %v2815, 2147483648
    %v2830 = vmul.f32 %v2829, 1.442695
    %v2831 = vpow.pop %v2830
    %v2832 = vadd.f32 %v2831, 1.0
    %v2833 = vrcp.pop %v2832
    %v2834 = vmul.f32 1.0, %v2833
    %v2835 = vmul.f32 %v2827, %v2496
    %v2836 = vmul.f32 %v2821, %v2828
    %v2837 = vadd.f32 %v2835, %v2836
    %v2838 = vtanh.pop %v2837
    %v2839 = vmul.f32 %v2834, %v2838
    %2840 = vmatprep.subr.mxu0 %v471
    %2841 = vmatpush1.msra.mxu0 %v470
    %2842 = vmatprep.subr.mxu0 %v475
    %2843 = vmatpush1.msra.mxu0 %v474
    %2844 = vmatprep.subr.mxu0 %v479
    %2845 = vmatpush1.msra.mxu0 %v478
    %2846 = vmatprep.subr.mxu0 %v483
    %2847 = vmatpush1.msra.mxu0 %v482
    %2848 = vmatprep.subr.mxu0 %v487
    %2849 = vmatpush1.msra.mxu0 %v486
    %2850 = vmatprep.subr.mxu0 %v491
    %2851 = vmatpush1.msra.mxu0 %v490
    %2852 = vmatprep.subr.mxu0 %v495
    %2853 = vmatpush1.msra.mxu0 %v494
    %2854 = vmatprep.subr.mxu0 %v499
    %2855 = vmatpush1.msra.mxu0 %v498
    %2856 = vmatprep.subr.mxu0 %v503
    %2857 = vmatpush1.msra.mxu0 %v502
    %2858 = vmatprep.subr.mxu0 %v507
    %2859 = vmatpush1.msra.mxu0 %v506
    %2860 = vmatprep.subr.mxu0 %v511
    %2861 = vmatpush1.msra.mxu0 %v510
    %2862 = vmatprep.subr.mxu0 %v515
    %2863 = vmatpush1.msra.mxu0 %v514
    %2864 = vmatprep.subr.mxu0 %v519
    %2865 = vmatpush1.msra.mxu0 %v518
    %2866 = vmatprep.subr.mxu0 %v523
    %2867 = vmatpush1.msra.mxu0 %v522
    %2868 = vmatprep.subr.mxu0 %v527
    %2869 = vmatpush1.msra.mxu0 %v526
    %2870 = vmatprep.subr.mxu0 %v531
    %2871 = vmatpush1.msra.mxu0 %v530
    %2872 = vmatprep.subr.mxu0 %v535
    %2873 = vmatpush1.msra.mxu0 %v534
    %2874 = vmatprep.subr.mxu0 %v539
    %2875 = vmatpush1.msra.mxu0 %v538
    %2876 = vmatprep.subr.mxu0 %v543
    %2877 = vmatpush1.msra.mxu0 %v542
    %2878 = vmatprep.subr.mxu0 %v547
    %2879 = vmatpush1.msra.mxu0 %v546
    %2880 = vmatprep.subr.mxu0 %v551
    %2881 = vmatpush1.msra.mxu0 %v550
    %2882 = vmatprep.subr.mxu0 %v555
    %2883 = vmatpush1.msra.mxu0 %v554
    %2884 = vmatprep.subr.mxu0 %v559
    %2885 = vmatpush1.msra.mxu0 %v558
    %2886 = vmatprep.subr.mxu0 %v563
    %2887 = vmatpush1.msra.mxu0 %v562
    %2888 = vmatprep.subr.mxu0 %v567
    %2889 = vmatpush1.msra.mxu0 %v566
    %2890 = vmatprep.subr.mxu0 %v571
    %2891 = vmatpush1.msra.mxu0 %v570
    %2892 = vmatprep.subr.mxu0 %v575
    %2893 = vmatpush1.msra.mxu0 %v574
    %2894 = vmatprep.subr.mxu0 %v579
    %2895 = vmatpush1.msra.mxu0 %v578
    %2896 = vmatprep.subr.mxu0 %v583
    %2897 = vmatpush1.msra.mxu0 %v582
    %2898 = vmatprep.subr.mxu0 %v587
    %2899 = vmatpush1.msra.mxu0 %v586
    %2900 = vmatprep.subr.mxu0 %v591
    %2901 = vmatpush1.msra.mxu0 %v590
    %2902 = vmatprep.subr.mxu0 %v595
    %2903 = vmatpush1.msra.mxu0 %v594
    %2904 = vmatprep.mubr.f32.mxu0 %v2664
    %2905 = vmatmul.mubr.f32.gmra.mrb[0].mxu0 %v2839
    %v2906 = vpop.f32.mrb[0].mxu0
    %v2907 = vadd.f32 %v603, %v2906
    %v2908 = vpop.f32.mrb[0].mxu0
    %v2909 = vadd.f32 %v607, %v2908
    %2910 = vdwg.mxu0
    %2911 = vmatprep.subr.mxu0 %v473
    %2912 = vmatpush1.msra.mxu0 %v472
    %2913 = vmatprep.subr.mxu0 %v477
    %2914 = vmatpush1.msra.mxu0 %v476
    %2915 = vmatprep.subr.mxu0 %v481
    %2916 = vmatpush1.msra.mxu0 %v480
    %2917 = vmatprep.subr.mxu0 %v485
    %2918 = vmatpush1.msra.mxu0 %v484
    %2919 = vmatprep.subr.mxu0 %v489
    %2920 = vmatpush1.msra.mxu0 %v488
    %2921 = vmatprep.subr.mxu0 %v493
    %2922 = vmatpush1.msra.mxu0 %v492
    %2923 = vmatprep.subr.mxu0 %v497
    %2924 = vmatpush1.msra.mxu0 %v496
    %2925 = vmatprep.subr.mxu0 %v501
    %2926 = vmatpush1.msra.mxu0 %v500
    %2927 = vmatprep.subr.mxu0 %v505
    %2928 = vmatpush1.msra.mxu0 %v504
    %2929 = vmatprep.subr.mxu0 %v509
    %2930 = vmatpush1.msra.mxu0 %v508
    %2931 = vmatprep.subr.mxu0 %v513
    %2932 = vmatpush1.msra.mxu0 %v512
    %2933 = vmatprep.subr.mxu0 %v517
    %2934 = vmatpush1.msra.mxu0 %v516
    %2935 = vmatprep.subr.mxu0 %v521
    %2936 = vmatpush1.msra.mxu0 %v520
    %2937 = vmatprep.subr.mxu0 %v525
    %2938 = vmatpush1.msra.mxu0 %v524
    %2939 = vmatprep.subr.mxu0 %v529
    %2940 = vmatpush1.msra.mxu0 %v528
    %2941 = vmatprep.subr.mxu0 %v533
    %2942 = vmatpush1.msra.mxu0 %v532
    %2943 = vmatprep.subr.mxu0 %v537
    %2944 = vmatpush1.msra.mxu0 %v536
    %2945 = vmatprep.subr.mxu0 %v541
    %2946 = vmatpush1.msra.mxu0 %v540
    %2947 = vmatprep.subr.mxu0 %v545
    %2948 = vmatpush1.msra.mxu0 %v544
    %2949 = vmatprep.subr.mxu0 %v549
    %2950 = vmatpush1.msra.mxu0 %v548
    %2951 = vmatprep.subr.mxu0 %v553
    %2952 = vmatpush1.msra.mxu0 %v552
    %2953 = vmatprep.subr.mxu0 %v557
    %2954 = vmatpush1.msra.mxu0 %v556
    %2955 = vmatprep.subr.mxu0 %v561
    %2956 = vmatpush1.msra.mxu0 %v560
    %2957 = vmatprep.subr.mxu0 %v565
    %2958 = vmatpush1.msra.mxu0 %v564
    %2959 = vmatprep.subr.mxu0 %v569
    %2960 = vmatpush1.msra.mxu0 %v568
    %2961 = vmatprep.subr.mxu0 %v573
    %2962 = vmatpush1.msra.mxu0 %v572
    %2963 = vmatprep.subr.mxu0 %v577
    %2964 = vmatpush1.msra.mxu0 %v576
    %2965 = vmatprep.subr.mxu0 %v581
    %2966 = vmatpush1.msra.mxu0 %v580
    %2967 = vmatprep.subr.mxu0 %v585
    %2968 = vmatpush1.msra.mxu0 %v584
    %2969 = vmatprep.subr.mxu0 %v589
    %2970 = vmatpush1.msra.mxu0 %v588
    %2971 = vmatprep.subr.mxu0 %v593
    %2972 = vmatpush1.msra.mxu0 %v592
    %2973 = vmatprep.subr.mxu0 %v597
    %2974 = vmatpush1.msra.mxu0 %v596
    %2975 = vmatprep.mubr.f32.mxu0 %v2664
    %2976 = vmatmul.mubr.f32.gmra.mrb[0].mxu0 %v2839
    %v2977 = vpop.f32.mrb[0].mxu0
    %v2978 = vadd.f32 %v611, %v2977
    %v2979 = vpop.f32.mrb[0].mxu0
    %v2980 = vadd.f32 %v615, %v2979
    %2981 = vdwg.mxu0
    %v2982 = vxor.u32 %v2907, 2147483648
    %v2983 = vmul.f32 %v2982, 1.442695
    %v2984 = vpow.pop %v2983
    %v2985 = vadd.f32 %v2984, 1.0
    %v2986 = vrcp.pop %v2985
    %v2987 = vmul.f32 1.0, %v2986
    %v2988 = vxor.u32 %v2909, 2147483648
    %v2989 = vmul.f32 %v2988, 1.442695
    %v2990 = vpow.pop %v2989
    %v2991 = vadd.f32 %v2990, 1.0
    %v2992 = vrcp.pop %v2991
    %v2993 = vmul.f32 1.0, %v2992
    %v2994 = vtanh.pop %v2978
    %v2995 = vxor.u32 %v2980, 2147483648
    %v2996 = vmul.f32 %v2995, 1.442695
    %v2997 = vpow.pop %v2996
    %v2998 = vadd.f32 %v2997, 1.0
    %v2999 = vrcp.pop %v2998
    %v3000 = vmul.f32 1.0, %v2999
    %v3001 = vmul.f32 %v2993, %v2662
    %v3002 = vmul.f32 %v2987, %v2994
    %v3003 = vadd.f32 %v3001, %v3002
    %v3004 = vtanh.pop %v3003
    %v3005 = vmul.f32 %v3000, %v3004
    %s3006 = scalar_lea.vmem [#allocation2], 224
    %v3007 = vld [vmem:[%s3006] sm:$0xff]
    %v3008 = vld [vmem:[%s3006 + $0x8] sm:$0xff]
    %v3009 = vld [vmem:[%s3006 + $0x10] sm:$0xff]
    %v3010 = vld [vmem:[%s3006 + $0x18] sm:$0xff]
    %3011 = vmatprep.subr.mxu0 %v407
    %3012 = vmatpush1.msra.mxu0 %v406
    %3013 = vmatprep.subr.mxu0 %v411
    %3014 = vmatpush1.msra.mxu0 %v410
    %3015 = vmatprep.subr.mxu0 %v415
    %3016 = vmatpush1.msra.mxu0 %v414
    %3017 = vmatprep.subr.mxu0 %v419
    %3018 = vmatpush1.msra.mxu0 %v418
    %3019 = vmatprep.subr.mxu0 %v423
    %3020 = vmatpush1.msra.mxu0 %v422
    %3021 = vmatprep.subr.mxu0 %v427
    %3022 = vmatpush1.msra.mxu0 %v426
    %3023 = vmatprep.subr.mxu0 %v431
    %3024 = vmatpush1.msra.mxu0 %v430
    %3025 = vmatprep.subr.mxu0 %v435
    %3026 = vmatpush1.msra.mxu0 %v434
    %3027 = vmatprep.subr.mxu0 %v439
    %3028 = vmatpush1.msra.mxu0 %v438
    %3029 = vmatprep.subr.mxu0 %v443
    %3030 = vmatpush1.msra.mxu0 %v442
    %3031 = vmatprep.subr.mxu0 %v447
    %3032 = vmatpush1.msra.mxu0 %v446
    %3033 = vmatprep.subr.mxu0 %v451
    %3034 = vmatpush1.msra.mxu0 %v450
    %3035 = vmatprep.subr.mxu0 %v455
    %3036 = vmatpush1.msra.mxu0 %v454
    %3037 = vmatprep.subr.mxu0 %v459
    %3038 = vmatpush1.msra.mxu0 %v458
    %3039 = vmatprep.subr.mxu0 %v463
    %3040 = vmatpush1.msra.mxu0 %v462
    %3041 = vmatprep.subr.mxu0 %v467
    %3042 = vmatpush1.msra.mxu0 %v466
    %3043 = vmatprep.subr.mxu0 0.0
    %3044 = vmatpush1.msra.mxu0 0.0
    %3045 = vmatprep.subr.mxu0 0.0
    %3046 = vmatpush1.msra.mxu0 0.0
    %3047 = vmatprep.subr.mxu0 0.0
    %3048 = vmatpush1.msra.mxu0 0.0
    %3049 = vmatprep.subr.mxu0 0.0
    %3050 = vmatpush1.msra.mxu0 0.0
    %3051 = vmatprep.subr.mxu0 0.0
    %3052 = vmatpush1.msra.mxu0 0.0
    %3053 = vmatprep.subr.mxu0 0.0
    %3054 = vmatpush1.msra.mxu0 0.0
    %3055 = vmatprep.subr.mxu0 0.0
    %3056 = vmatpush1.msra.mxu0 0.0
    %3057 = vmatprep.subr.mxu0 0.0
    %3058 = vmatpush1.msra.mxu0 0.0
    %3059 = vmatprep.subr.mxu0 0.0
    %3060 = vmatpush1.msra.mxu0 0.0
    %3061 = vmatprep.subr.mxu0 0.0
    %3062 = vmatpush1.msra.mxu0 0.0
    %3063 = vmatprep.subr.mxu0 0.0
    %3064 = vmatpush1.msra.mxu0 0.0
    %3065 = vmatprep.subr.mxu0 0.0
    %3066 = vmatpush1.msra.mxu0 0.0
    %3067 = vmatprep.subr.mxu0 0.0
    %3068 = vmatpush1.msra.mxu0 0.0
    %3069 = vmatprep.subr.mxu0 0.0
    %3070 = vmatpush1.msra.mxu0 0.0
    %3071 = vmatprep.subr.mxu0 0.0
    %3072 = vmatpush1.msra.mxu0 0.0
    %3073 = vmatprep.subr.mxu0 0.0
    %3074 = vmatpush1.msra.mxu0 0.0
    %3075 = vmatprep.mubr.f32.mxu0 0.0
    %3076 = vmatmul.mubr.f32.gmra.mrb[0].mxu0 %v2839
    %v3077 = vpop.f32.mrb[0].mxu0
    %v3078 = vadd.f32 0.0, %v3077
    %v3079 = vpop.f32.mrb[0].mxu0
    %v3080 = vadd.f32 0.0, %v3079
    %3081 = vdwg.mxu0
    %3082 = vmatprep.subr.mxu0 %v409
    %3083 = vmatpush1.msra.mxu0 %v408
    %3084 = vmatprep.subr.mxu0 %v413
    %3085 = vmatpush1.msra.mxu0 %v412
    %3086 = vmatprep.subr.mxu0 %v417
    %3087 = vmatpush1.msra.mxu0 %v416
    %3088 = vmatprep.subr.mxu0 %v421
    %3089 = vmatpush1.msra.mxu0 %v420
    %3090 = vmatprep.subr.mxu0 %v425
    %3091 = vmatpush1.msra.mxu0 %v424
    %3092 = vmatprep.subr.mxu0 %v429
    %3093 = vmatpush1.msra.mxu0 %v428
    %3094 = vmatprep.subr.mxu0 %v433
    %3095 = vmatpush1.msra.mxu0 %v432
    %3096 = vmatprep.subr.mxu0 %v437
    %3097 = vmatpush1.msra.mxu0 %v436
    %3098 = vmatprep.subr.mxu0 %v441
    %3099 = vmatpush1.msra.mxu0 %v440
    %3100 = vmatprep.subr.mxu0 %v445
    %3101 = vmatpush1.msra.mxu0 %v444
    %3102 = vmatprep.subr.mxu0 %v449
    %3103 = vmatpush1.msra.mxu0 %v448
    %3104 = vmatprep.subr.mxu0 %v453
    %3105 = vmatpush1.msra.mxu0 %v452
    %3106 = vmatprep.subr.mxu0 %v457
    %3107 = vmatpush1.msra.mxu0 %v456
    %3108 = vmatprep.subr.mxu0 %v461
    %3109 = vmatpush1.msra.mxu0 %v460
    %3110 = vmatprep.subr.mxu0 %v465
    %3111 = vmatpush1.msra.mxu0 %v464
    %3112 = vmatprep.subr.mxu0 %v469
    %3113 = vmatpush1.msra.mxu0 %v468
    %3114 = vmatprep.subr.mxu0 0.0
    %3115 = vmatpush1.msra.mxu0 0.0
    %3116 = vmatprep.subr.mxu0 0.0
    %3117 = vmatpush1.msra.mxu0 0.0
    %3118 = vmatprep.subr.mxu0 0.0
    %3119 = vmatpush1.msra.mxu0 0.0
    %3120 = vmatprep.subr.mxu0 0.0
    %3121 = vmatpush1.msra.mxu0 0.0
    %3122 = vmatprep.subr.mxu0 0.0
    %3123 = vmatpush1.msra.mxu0 0.0
    %3124 = vmatprep.subr.mxu0 0.0
    %3125 = vmatpush1.msra.mxu0 0.0
    %3126 = vmatprep.subr.mxu0 0.0
    %3127 = vmatpush1.msra.mxu0 0.0
    %3128 = vmatprep.subr.mxu0 0.0
    %3129 = vmatpush1.msra.mxu0 0.0
    %3130 = vmatprep.subr.mxu0 0.0
    %3131 = vmatpush1.msra.mxu0 0.0
    %3132 = vmatprep.subr.mxu0 0.0
    %3133 = vmatpush1.msra.mxu0 0.0
    %3134 = vmatprep.subr.mxu0 0.0
    %3135 = vmatpush1.msra.mxu0 0.0
    %3136 = vmatprep.subr.mxu0 0.0
    %3137 = vmatpush1.msra.mxu0 0.0
    %3138 = vmatprep.subr.mxu0 0.0
    %3139 = vmatpush1.msra.mxu0 0.0
    %3140 = vmatprep.subr.mxu0 0.0
    %3141 = vmatpush1.msra.mxu0 0.0
    %3142 = vmatprep.subr.mxu0 0.0
    %3143 = vmatpush1.msra.mxu0 0.0
    %3144 = vmatprep.subr.mxu0 0.0
    %3145 = vmatpush1.msra.mxu0 0.0
    %3146 = vmatprep.mubr.f32.mxu0 0.0
    %3147 = vmatmul.mubr.f32.gmra.mrb[0].mxu0 %v2839
    %v3148 = vpop.f32.mrb[0].mxu0
    %v3149 = vadd.f32 0.0, %v3148
    %v3150 = vpop.f32.mrb[0].mxu0
    %v3151 = vadd.f32 0.0, %v3150
    %3152 = vdwg.mxu0
    %v3153 = vadd.f32 %v3007, %v3078
    %v3154 = vadd.f32 %v3008, %v3080
    %v3155 = vadd.f32 %v3009, %v3149
    %v3156 = vadd.f32 %v3010, %v3151
    %v3157 = vxor.u32 %v3153, 2147483648
    %v3158 = vmul.f32 %v3157, 1.442695
    %v3159 = vpow.pop %v3158
    %v3160 = vadd.f32 %v3159, 1.0
    %v3161 = vrcp.pop %v3160
    %v3162 = vmul.f32 1.0, %v3161
    %v3163 = vxor.u32 %v3154, 2147483648
    %v3164 = vmul.f32 %v3163, 1.442695
    %v3165 = vpow.pop %v3164
    %v3166 = vadd.f32 %v3165, 1.0
    %v3167 = vrcp.pop %v3166
    %v3168 = vmul.f32 1.0, %v3167
    %v3169 = vtanh.pop %v3155
    %v3170 = vxor.u32 %v3156, 2147483648
    %v3171 = vmul.f32 %v3170, 1.442695
    %v3172 = vpow.pop %v3171
    %v3173 = vadd.f32 %v3172, 1.0
    %v3174 = vrcp.pop %v3173
    %v3175 = vmul.f32 1.0, %v3174
    %v3176 = vmul.f32 %v3168, %v2837
    %v3177 = vmul.f32 %v3162, %v3169
    %v3178 = vadd.f32 %v3176, %v3177
    %v3179 = vtanh.pop %v3178
    %v3180 = vmul.f32 %v3175, %v3179
    %3181 = vmatprep.subr.mxu0 %v471
    %3182 = vmatpush1.msra.mxu0 %v470
    %3183 = vmatprep.subr.mxu0 %v475
    %3184 = vmatpush1.msra.mxu0 %v474
    %3185 = vmatprep.subr.mxu0 %v479
    %3186 = vmatpush1.msra.mxu0 %v478
    %3187 = vmatprep.subr.mxu0 %v483
    %3188 = vmatpush1.msra.mxu0 %v482
    %3189 = vmatprep.subr.mxu0 %v487
    %3190 = vmatpush1.msra.mxu0 %v486
    %3191 = vmatprep.subr.mxu0 %v491
    %3192 = vmatpush1.msra.mxu0 %v490
    %3193 = vmatprep.subr.mxu0 %v495
    %3194 = vmatpush1.msra.mxu0 %v494
    %3195 = vmatprep.subr.mxu0 %v499
    %3196 = vmatpush1.msra.mxu0 %v498
    %3197 = vmatprep.subr.mxu0 %v503
    %3198 = vmatpush1.msra.mxu0 %v502
    %3199 = vmatprep.subr.mxu0 %v507
    %3200 = vmatpush1.msra.mxu0 %v506
    %3201 = vmatprep.subr.mxu0 %v511
    %3202 = vmatpush1.msra.mxu0 %v510
    %3203 = vmatprep.subr.mxu0 %v515
    %3204 = vmatpush1.msra.mxu0 %v514
    %3205 = vmatprep.subr.mxu0 %v519
    %3206 = vmatpush1.msra.mxu0 %v518
    %3207 = vmatprep.subr.mxu0 %v523
    %3208 = vmatpush1.msra.mxu0 %v522
    %3209 = vmatprep.subr.mxu0 %v527
    %3210 = vmatpush1.msra.mxu0 %v526
    %3211 = vmatprep.subr.mxu0 %v531
    %3212 = vmatpush1.msra.mxu0 %v530
    %3213 = vmatprep.subr.mxu0 %v535
    %3214 = vmatpush1.msra.mxu0 %v534
    %3215 = vmatprep.subr.mxu0 %v539
    %3216 = vmatpush1.msra.mxu0 %v538
    %3217 = vmatprep.subr.mxu0 %v543
    %3218 = vmatpush1.msra.mxu0 %v542
    %3219 = vmatprep.subr.mxu0 %v547
    %3220 = vmatpush1.msra.mxu0 %v546
    %3221 = vmatprep.subr.mxu0 %v551
    %3222 = vmatpush1.msra.mxu0 %v550
    %3223 = vmatprep.subr.mxu0 %v555
    %3224 = vmatpush1.msra.mxu0 %v554
    %3225 = vmatprep.subr.mxu0 %v559
    %3226 = vmatpush1.msra.mxu0 %v558
    %3227 = vmatprep.subr.mxu0 %v563
    %3228 = vmatpush1.msra.mxu0 %v562
    %3229 = vmatprep.subr.mxu0 %v567
    %3230 = vmatpush1.msra.mxu0 %v566
    %3231 = vmatprep.subr.mxu0 %v571
    %3232 = vmatpush1.msra.mxu0 %v570
    %3233 = vmatprep.subr.mxu0 %v575
    %3234 = vmatpush1.msra.mxu0 %v574
    %3235 = vmatprep.subr.mxu0 %v579
    %3236 = vmatpush1.msra.mxu0 %v578
    %3237 = vmatprep.subr.mxu0 %v583
    %3238 = vmatpush1.msra.mxu0 %v582
    %3239 = vmatprep.subr.mxu0 %v587
    %3240 = vmatpush1.msra.mxu0 %v586
    %3241 = vmatprep.subr.mxu0 %v591
    %3242 = vmatpush1.msra.mxu0 %v590
    %3243 = vmatprep.subr.mxu0 %v595
    %3244 = vmatpush1.msra.mxu0 %v594
    %3245 = vmatprep.mubr.f32.mxu0 %v3005
    %3246 = vmatmul.mubr.f32.gmra.mrb[0].mxu0 %v3180
    %v3247 = vpop.f32.mrb[0].mxu0
    %v3248 = vadd.f32 %v603, %v3247
    %v3249 = vpop.f32.mrb[0].mxu0
    %v3250 = vadd.f32 %v607, %v3249
    %3251 = vdwg.mxu0
    %3252 = vmatprep.subr.mxu0 %v473
    %3253 = vmatpush1.msra.mxu0 %v472
    %3254 = vmatprep.subr.mxu0 %v477
    %3255 = vmatpush1.msra.mxu0 %v476
    %3256 = vmatprep.subr.mxu0 %v481
    %3257 = vmatpush1.msra.mxu0 %v480
    %3258 = vmatprep.subr.mxu0 %v485
    %3259 = vmatpush1.msra.mxu0 %v484
    %3260 = vmatprep.subr.mxu0 %v489
    %3261 = vmatpush1.msra.mxu0 %v488
    %3262 = vmatprep.subr.mxu0 %v493
    %3263 = vmatpush1.msra.mxu0 %v492
    %3264 = vmatprep.subr.mxu0 %v497
    %3265 = vmatpush1.msra.mxu0 %v496
    %3266 = vmatprep.subr.mxu0 %v501
    %3267 = vmatpush1.msra.mxu0 %v500
    %3268 = vmatprep.subr.mxu0 %v505
    %3269 = vmatpush1.msra.mxu0 %v504
    %3270 = vmatprep.subr.mxu0 %v509
    %3271 = vmatpush1.msra.mxu0 %v508
    %3272 = vmatprep.subr.mxu0 %v513
    %3273 = vmatpush1.msra.mxu0 %v512
    %3274 = vmatprep.subr.mxu0 %v517
    %3275 = vmatpush1.msra.mxu0 %v516
    %3276 = vmatprep.subr.mxu0 %v521
    %3277 = vmatpush1.msra.mxu0 %v520
    %3278 = vmatprep.subr.mxu0 %v525
    %3279 = vmatpush1.msra.mxu0 %v524
    %3280 = vmatprep.subr.mxu0 %v529
    %3281 = vmatpush1.msra.mxu0 %v528
    %3282 = vmatprep.subr.mxu0 %v533
    %3283 = vmatpush1.msra.mxu0 %v532
    %3284 = vmatprep.subr.mxu0 %v537
    %3285 = vmatpush1.msra.mxu0 %v536
    %3286 = vmatprep.subr.mxu0 %v541
    %3287 = vmatpush1.msra.mxu0 %v540
    %3288 = vmatprep.subr.mxu0 %v545
    %3289 = vmatpush1.msra.mxu0 %v544
    %3290 = vmatprep.subr.mxu0 %v549
    %3291 = vmatpush1.msra.mxu0 %v548
    %3292 = vmatprep.subr.mxu0 %v553
    %3293 = vmatpush1.msra.mxu0 %v552
    %3294 = vmatprep.subr.mxu0 %v557
    %3295 = vmatpush1.msra.mxu0 %v556
    %3296 = vmatprep.subr.mxu0 %v561
    %3297 = vmatpush1.msra.mxu0 %v560
    %3298 = vmatprep.subr.mxu0 %v565
    %3299 = vmatpush1.msra.mxu0 %v564
    %3300 = vmatprep.subr.mxu0 %v569
    %3301 = vmatpush1.msra.mxu0 %v568
    %3302 = vmatprep.subr.mxu0 %v573
    %3303 = vmatpush1.msra.mxu0 %v572
    %3304 = vmatprep.subr.mxu0 %v577
    %3305 = vmatpush1.msra.mxu0 %v576
    %3306 = vmatprep.subr.mxu0 %v581
    %3307 = vmatpush1.msra.mxu0 %v580
    %3308 = vmatprep.subr.mxu0 %v585
    %3309 = vmatpush1.msra.mxu0 %v584
    %3310 = vmatprep.subr.mxu0 %v589
    %3311 = vmatpush1.msra.mxu0 %v588
    %3312 = vmatprep.subr.mxu0 %v593
    %3313 = vmatpush1.msra.mxu0 %v592
    %3314 = vmatprep.subr.mxu0 %v597
    %3315 = vmatpush1.msra.mxu0 %v596
    %3316 = vmatprep.mubr.f32.mxu0 %v3005
    %3317 = vmatmul.mubr.f32.gmra.mrb[0].mxu0 %v3180
    %v3318 = vpop.f32.mrb[0].mxu0
    %v3319 = vadd.f32 %v611, %v3318
    %v3320 = vpop.f32.mrb[0].mxu0
    %v3321 = vadd.f32 %v615, %v3320
    %3322 = vdwg.mxu0
    %v3323 = vxor.u32 %v3248, 2147483648
    %v3324 = vmul.f32 %v3323, 1.442695
    %v3325 = vpow.pop %v3324
    %v3326 = vadd.f32 %v3325, 1.0
    %v3327 = vrcp.pop %v3326
    %v3328 = vmul.f32 1.0, %v3327
    %v3329 = vxor.u32 %v3250, 2147483648
    %v3330 = vmul.f32 %v3329, 1.442695
    %v3331 = vpow.pop %v3330
    %v3332 = vadd.f32 %v3331, 1.0
    %v3333 = vrcp.pop %v3332
    %v3334 = vmul.f32 1.0, %v3333
    %v3335 = vtanh.pop %v3319
    %v3336 = vxor.u32 %v3321, 2147483648
    %v3337 = vmul.f32 %v3336, 1.442695
    %v3338 = vpow.pop %v3337
    %v3339 = vadd.f32 %v3338, 1.0
    %v3340 = vrcp.pop %v3339
    %v3341 = vmul.f32 1.0, %v3340
    %v3342 = vmul.f32 %v3334, %v3003
    %v3343 = vmul.f32 %v3328, %v3335
    %v3344 = vadd.f32 %v3342, %v3343
    %v3345 = vtanh.pop %v3344
    %v3346 = vmul.f32 %v3341, %v3345
    %v3347 = vld [vmem:[#allocation8] sm:$0xff]
    %v3348 = vld [vmem:[#allocation8 + $0x8] sm:$0xff]
    %v3349 = vld [vmem:[#allocation8 + $0x10] sm:$0xff]
    %v3350 = vld [vmem:[#allocation8 + $0x18] sm:$0xff]
    %v3351 = vld [vmem:[#allocation8 + $0x20] sm:$0xff]
    %v3352 = vld [vmem:[#allocation8 + $0x28] sm:$0xff]
    %v3353 = vld [vmem:[#allocation8 + $0x30] sm:$0xff]
    %v3354 = vld [vmem:[#allocation8 + $0x38] sm:$0xff]
    %v3355 = vld [vmem:[#allocation8 + $0x40] sm:$0xff]
    %v3356 = vld [vmem:[#allocation8 + $0x48] sm:$0xff]
    %v3357 = vld [vmem:[#allocation8 + $0x50] sm:$0xff]
    %v3358 = vld [vmem:[#allocation8 + $0x58] sm:$0xff]
    %v3359 = vld [vmem:[#allocation8 + $0x60] sm:$0xff]
    %v3360 = vld [vmem:[#allocation8 + $0x68] sm:$0xff]
    %v3361 = vld [vmem:[#allocation8 + $0x70] sm:$0xff]
    %v3362 = vld [vmem:[#allocation8 + $0x78] sm:$0xff]
    %v3363 = vld [vmem:[%s7] sm:$0x1]
    %v3365 = vlaneseq
    %v3366 = vshrl.u32 %v3365, 7
    %v3367 = vsub.s32 0, %v3366
    %v3368 = vrot.slane %v3363, %v3367
    %3370 = vmatprep.subr.mxu0 0.0
    %3371 = vmatpush1.msra.mxu0 %v3347
    %3372 = vmatprep.subr.mxu0 0.0
    %3373 = vmatpush1.msra.mxu0 %v3348
    %3374 = vmatprep.subr.mxu0 0.0
    %3375 = vmatpush1.msra.mxu0 %v3349
    %3376 = vmatprep.subr.mxu0 0.0
    %3377 = vmatpush1.msra.mxu0 %v3350
    %3378 = vmatprep.subr.mxu0 0.0
    %3379 = vmatpush1.msra.mxu0 %v3351
    %3380 = vmatprep.subr.mxu0 0.0
    %3381 = vmatpush1.msra.mxu0 %v3352
    %3382 = vmatprep.subr.mxu0 0.0
    %3383 = vmatpush1.msra.mxu0 %v3353
    %3384 = vmatprep.subr.mxu0 0.0
    %3385 = vmatpush1.msra.mxu0 %v3354
    %3386 = vmatprep.subr.mxu0 0.0
    %3387 = vmatpush1.msra.mxu0 %v3355
    %3388 = vmatprep.subr.mxu0 0.0
    %3389 = vmatpush1.msra.mxu0 %v3356
    %3390 = vmatprep.subr.mxu0 0.0
    %3391 = vmatpush1.msra.mxu0 %v3357
    %3392 = vmatprep.subr.mxu0 0.0
    %3393 = vmatpush1.msra.mxu0 %v3358
    %3394 = vmatprep.subr.mxu0 0.0
    %3395 = vmatpush1.msra.mxu0 %v3359
    %3396 = vmatprep.subr.mxu0 0.0
    %3397 = vmatpush1.msra.mxu0 %v3360
    %3398 = vmatprep.subr.mxu0 0.0
    %3399 = vmatpush1.msra.mxu0 %v3361
    %3400 = vmatprep.subr.mxu0 0.0
    %3401 = vmatpush1.msra.mxu0 %v3362
    %3402 = vmatprep.subr.mxu0 0.0
    %3403 = vmatpush1.msra.mxu0 0.0
    %3404 = vmatprep.subr.mxu0 0.0
    %3405 = vmatpush1.msra.mxu0 0.0
    %3406 = vmatprep.subr.mxu0 0.0
    %3407 = vmatpush1.msra.mxu0 0.0
    %3408 = vmatprep.subr.mxu0 0.0
    %3409 = vmatpush1.msra.mxu0 0.0
    %3410 = vmatprep.subr.mxu0 0.0
    %3411 = vmatpush1.msra.mxu0 0.0
    %3412 = vmatprep.subr.mxu0 0.0
    %3413 = vmatpush1.msra.mxu0 0.0
    %3414 = vmatprep.subr.mxu0 0.0
    %3415 = vmatpush1.msra.mxu0 0.0
    %3416 = vmatprep.subr.mxu0 0.0
    %3417 = vmatpush1.msra.mxu0 0.0
    %3418 = vmatprep.subr.mxu0 0.0
    %3419 = vmatpush1.msra.mxu0 0.0
    %3420 = vmatprep.subr.mxu0 0.0
    %3421 = vmatpush1.msra.mxu0 0.0
    %3422 = vmatprep.subr.mxu0 0.0
    %3423 = vmatpush1.msra.mxu0 0.0
    %3424 = vmatprep.subr.mxu0 0.0
    %3425 = vmatpush1.msra.mxu0 0.0
    %3426 = vmatprep.subr.mxu0 0.0
    %3427 = vmatpush1.msra.mxu0 0.0
    %3428 = vmatprep.subr.mxu0 0.0
    %3429 = vmatpush1.msra.mxu0 0.0
    %3430 = vmatprep.subr.mxu0 0.0
    %3431 = vmatpush1.msra.mxu0 0.0
    %3432 = vmatprep.subr.mxu0 0.0
    %3433 = vmatpush1.msra.mxu0 0.0
    %3434 = vmatprep.mubr.f32.mxu0 0.0
    %3435 = vmatmul.mubr.f32.gmra.mrb[0].mxu0 %v3346
    %v3436 = vpop.f32.mrb[0].mxu0
    %v3437 = vadd.f32 %v3368, %v3436
    %v3438 = vpop.f32.mrb[0].mxu0
    %3439 = vdwg.mxu0
    %v3440 = vmax.f32 %v3437, 0.0
    %v3441 = vld [vmem:[%s8] sm:$0x1]
    %v3443 = vlaneseq
    %v3444 = vshrl.u32 %v3443, 7
    %v3445 = vsub.s32 0, %v3444
    %v3446 = vrot.slane %v3441, %v3445
    %v3448 = vmul.f32 %v3440, %v3446
    %3449 = vadd.xlane.f32.xlu0 %v3448
    %v3450 = vpop.xlane.xlu0 %3449
    %v3451 = vld [vmem:[#allocation3] sm:$0x1]
    %v3453 = vlaneseq
    %v3454 = vshrl.u32 %v3453, 7
    %v3455 = vsub.s32 0, %v3454
    %v3456 = vrot.slane %v3451, %v3455
    %v3458 = vadd.f32 %v3450, %v3456
    %v3459 = vxor.u32 %v3458, 2147483648
    %v3460 = vmul.f32 %v3459, 1.442695
    %v3461 = vpow.pop %v3460
    %v3462 = vadd.f32 %v3461, 1.0
    %v3463 = vrcp.pop %v3462
    %v3464 = vmul.f32 1.0, %v3463
    %3466 = vset.pattern.permute.xlu0 0
    %3467 = vperm.xlu0 %3466, %v3464
    %v3468 = vpop.permute.xlu0 %3467
    %3470 = vst [vmem:[%s10] sm:$0xff] %v3468
    // Predicated region
    $region54: #{risk_assessment_forward.1} parent=1 // pred_check
      _
    $region55: #{risk_assessment_forward.1} parent=1 // pred_check_branch
      %3472 = sbr.rel (0) target = $region57
    $region56: #{risk_assessment_forward.1} parent=1 // pred_region
      _
    $region57: #{risk_assessment_forward.1} parent=1 // pred_fallthru
      _
    // Predicated region
    $region58: #{risk_assessment_forward.1} parent=1 // pred_check
      _
    $region59: #{risk_assessment_forward.1} parent=1 // pred_check_branch
      %3474 = sbr.rel (0) target = $region61
    $region60: #{risk_assessment_forward.1} parent=1 // pred_region
      _
    $region61: #{risk_assessment_forward.1} parent=1 // pred_fallthru
      _
    %3475 = vsyncpa [#allocation5], 1
    %3476 = vsyncpa [#allocation7], 1

</llo_original>
